<compile_context>
chip_gen: v7x
topology: tpu7x:2x2x1
jax: 0.10.0
libtpu: 0.0.40
codegen_flags: <defaults>
</compile_context>

<pallas_src>
import functools

import jax
import jax.numpy as jnp
from jax.experimental import pallas as pl
from jax.experimental.pallas import tpu as pltpu

_LANE = 128                       # TPU lane width -> padded per-gate width Hp
_VMEM_LIMIT = 48 * 1024 * 1024    # scoped VMEM cap, safe on v5e/v6e/v7x


def _round_up(x, m):
    return (x + m - 1) // m * m


def _largest_divisor_at_most(n, cap):
    d = max(1, min(n, cap))
    while n % d:
        d -= 1
    return d


@functools.lru_cache(maxsize=None)
def _single_buffer_supported():
    """Probe whether BlockSpec(pipeline_mode=pl.Buffered(1)) lowers here.

    Grid-invariant weight/bias blocks are single-buffered when supported
    (saves the ~4 MB wasted on double-buffering W_ih at real sizes); if the
    probe fails for any reason we silently fall back to default buffering.
    """
    try:
        def k(x_ref, w_ref, o_ref):
            o_ref[...] = x_ref[...] + w_ref[...]

        x = jnp.ones((16, _LANE), jnp.float32)
        w = jnp.ones((8, _LANE), jnp.float32)
        f = pl.pallas_call(
            k,
            out_shape=jax.ShapeDtypeStruct((16, _LANE), jnp.float32),
            grid=(2,),
            in_specs=[
                pl.BlockSpec((8, _LANE), lambda i: (i, 0)),
                pl.BlockSpec((8, _LANE), lambda i: (0, 0),
                             pipeline_mode=pl.Buffered(1)),
            ],
            out_specs=pl.BlockSpec((8, _LANE), lambda i: (i, 0)),
        )
        jax.block_until_ready(f(x, w))
        return True
    except Exception:  # noqa: BLE001 - any failure -> default double buffering
        return False


def _invariant_spec(block_shape, index_map):
    """BlockSpec for a grid-invariant operand (weights / bias)."""
    if _single_buffer_supported():
        return pl.BlockSpec(block_shape, index_map, pipeline_mode=pl.Buffered(1))
    return pl.BlockSpec(block_shape, index_map)


# --------------------------------------------------------------------------
# Kernels (1) and (3): out = sum_i xs[i] @ ws[i] + bias, tiled over rows.
# Operands cast to bf16, accumulation in f32 on the MXU.
# --------------------------------------------------------------------------
def _row_matmul(xs, ws, bias, *, tile_m=512, out_dtype=jnp.float32):
    """xs[i]: [M, K_i], ws[i]: [K_i, N] (bf16), bias: [1, N] f32 -> [M, N]."""
    n = len(xs)
    M = xs[0].shape[0]
    N = ws[0].shape[1]
    tm = M if M <= tile_m else tile_m
    grid_m = pl.cdiv(M, tm)

    def kernel(*refs):
        x_refs = refs[:n]
        w_refs = refs[n:2 * n]
        b_ref = refs[2 * n]
        o_ref = refs[2 * n + 1]
        acc = b_ref[...].astype(jnp.float32)           # [1, N], broadcasts
        for i in range(n):
            acc = acc + jnp.dot(x_refs[i][...].astype(jnp.bfloat16),
                                w_refs[i][...].astype(jnp.bfloat16),
                                preferred_element_type=jnp.float32)
        o_ref[...] = acc.astype(o_ref.dtype)

    in_specs = [pl.BlockSpec((tm, x.shape[1]), lambda i: (i, 0)) for x in xs]
    in_specs += [_invariant_spec((w.shape[0], N), lambda i: (0, 0)) for w in ws]
    in_specs.append(_invariant_spec((1, N), lambda i: (0, 0)))

    return pl.pallas_call(
        kernel,
        out_shape=jax.ShapeDtypeStruct((M, N), out_dtype),
        grid_spec=pltpu.PrefetchScalarGridSpec(
            num_scalar_prefetch=0,
            grid=(grid_m,),
            in_specs=in_specs,
            out_specs=pl.BlockSpec((tm, N), lambda i: (i, 0)),
        ),
        compiler_params=pltpu.CompilerParams(
            dimension_semantics=("parallel",),
            vmem_limit_bytes=_VMEM_LIMIT,
        ),
    )(*xs, *ws, bias)


# --------------------------------------------------------------------------
# Kernel (2): time-chunked, batch-parallel LSTM recurrence with fused,
# 128-lane-padded (i|f|g|o) gates and VMEM-scratch h/c carry.
# --------------------------------------------------------------------------
def _lstm_recurrence(z, w_hh, *, time_chunk=128, max_unroll=8, batch_chunks=None):
    """z: [T, B, 4*Hp] f32 (time-major, bias already added), w_hh: [Hp, 4*Hp] f32.
    Returns (h_all [T, B, Hp], h_n [B, Hp], c_n [B, Hp]); padded lanes stay 0."""
    T, B, G = z.shape
    Hp = w_hh.shape[0]
    assert G == 4 * Hp

    if batch_chunks is None:
        # One independent batch slice per v7x TensorCore when blocks stay
        # (8,128)-aligned; otherwise keep the batch whole.
        batch_chunks = 2 if (B >= 16 and B % 16 == 0) else 1
    bc = B // batch_chunks
    tc = _largest_divisor_at_most(T, time_chunk)
    nt = T // tc
    unroll = max(1, min(max_unroll, tc))   # bounded unroll, not full unroll

    def kernel(z_ref, whh_ref, h_all_ref, hN_ref, cN_ref, h_sc, c_sc):
        @pl.when(pl.program_id(1) == 0)
        def _init():
            h_sc[...] = jnp.zeros_like(h_sc)
            c_sc[...] = jnp.zeros_like(c_sc)

        def step(tt, carry):
            h, c = carry
            gates = z_ref[tt] + jnp.dot(h, whh_ref[...],
                                        preferred_element_type=jnp.float32)
            i = jax.nn.sigmoid(gates[:, 0 * Hp:1 * Hp])   # 128-lane aligned slices
            f = jax.nn.sigmoid(gates[:, 1 * Hp:2 * Hp])
            g = jnp.tanh(gates[:, 2 * Hp:3 * Hp])
            o = jax.nn.sigmoid(gates[:, 3 * Hp:4 * Hp])
            c_new = f * c + i * g
            h_new = o * jnp.tanh(c_new)
            h_all_ref[tt] = h_new                          # lane-dense store
            return (h_new, c_new)

        h_f, c_f = jax.lax.fori_loop(0, tc, step, (h_sc[...], c_sc[...]),
                                     unroll=unroll)
        h_sc[...] = h_f
        c_sc[...] = c_f

        @pl.when(pl.program_id(1) == pl.num_programs(1) - 1)
        def _finalize():
            hN_ref[...] = h_f
            cN_ref[...] = c_f

    return pl.pallas_call(
        kernel,
        out_shape=(
            jax.ShapeDtypeStruct((T, B, Hp), jnp.float32),
            jax.ShapeDtypeStruct((B, Hp), jnp.float32),
            jax.ShapeDtypeStruct((B, Hp), jnp.float32),
        ),
        grid_spec=pltpu.PrefetchScalarGridSpec(
            num_scalar_prefetch=0,
            grid=(batch_chunks, nt),
            in_specs=[
                pl.BlockSpec((tc, bc, G), lambda b, t: (t, b, 0)),
                _invariant_spec((Hp, G), lambda b, t: (0, 0)),
            ],
            out_specs=[
                pl.BlockSpec((tc, bc, Hp), lambda b, t: (t, b, 0)),
                pl.BlockSpec((bc, Hp), lambda b, t: (b, 0)),
                pl.BlockSpec((bc, Hp), lambda b, t: (b, 0)),
            ],
            scratch_shapes=[
                pltpu.VMEM((bc, Hp), jnp.float32),   # h carry across time chunks
                pltpu.VMEM((bc, Hp), jnp.float32),   # c carry across time chunks
            ],
        ),
        compiler_params=pltpu.CompilerParams(
            dimension_semantics=("parallel", "arbitrary"),
            vmem_limit_bytes=_VMEM_LIMIT,
        ),
    )(z, w_hh)


# --------------------------------------------------------------------------
# Forward pass matching RNNPerceptionAction.forward (hidden_state=None).
# --------------------------------------------------------------------------
@functools.partial(jax.jit, static_argnames=("hidden_dim",))
def rnn_perception_action_forward(perception_latent, action_latent, params, *,
                                  hidden_dim):
    """perception_latent: [B, T, P], action_latent: [B, T, A].
    Returns (output [B, T, P], (h_n [1, B, H], c_n [1, B, H]))."""
    B, T, P = perception_latent.shape
    A = action_latent.shape[-1]
    Hp = params["w_hh"].shape[0]
    G = 4 * Hp
    M = B * T

    # Native batch-major rows; no concat, no transpose of the P-wide tensors.
    xp = perception_latent.astype(jnp.float32).reshape(M, P)
    xa = action_latent.astype(jnp.float32).reshape(M, A)

    # (1) Input projection, hoisted out of the recurrence (bf16 MXU matmul).
    z_bm = _row_matmul([xp, xa],
                       [params["w_ih_p"], params["w_ih_a"]],
                       params["b_gates"])                        # [M, 4*Hp] f32
    # Only the small (4*Hp-wide) z tensor is re-ordered to time-major.
    z = z_bm.reshape(B, T, G).transpose(1, 0, 2)                 # [T, B, 4*Hp]

    # (2) Sequential recurrence (time-chunked, batch-parallel grid).
    h_all, h_n, c_n = _lstm_recurrence(z, params["w_hh"])

    # (3) fc head on batch-major rows (bf16 MXU matmul, K padded to 128).
    h_bm = h_all.transpose(1, 0, 2).reshape(M, Hp)               # small reorder
    out = _row_matmul([h_bm], [params["w_fc"]], params["b_fc"]).reshape(B, T, P)

    H = hidden_dim
    hidden_state = (h_n[None, :, :H], c_n[None, :, :H])          # [1, B, H]
    return out, hidden_state


# --------------------------------------------------------------------------
# Parameters: canonical (PyTorch-like, unpadded) + packed kernel layout.
# --------------------------------------------------------------------------
def init_canonical_params(key, latent_dim_perception, latent_dim_action, hidden_dim):
    """Unpadded params mirroring nn.LSTM / nn.Linear defaults; gate order i|f|g|o."""
    P, A, H = latent_dim_perception, latent_dim_action, hidden_dim
    D_in = P + A
    ks = jax.random.split(key, 6)
    lim = 1.0 / float(H) ** 0.5
    return dict(
        w_ih=jax.random.uniform(ks[0], (D_in, 4 * H), jnp.float32, -lim, lim),
        w_hh=jax.random.uniform(ks[1], (H, 4 * H), jnp.float32, -lim, lim),
        b_ih=jax.random.uniform(ks[2], (4 * H,), jnp.float32, -lim, lim),
        b_hh=jax.random.uniform(ks[3], (4 * H,), jnp.float32, -lim, lim),
        w_fc=jax.random.uniform(ks[4], (H, P), jnp.float32, -lim, lim),
        b_fc=jax.random.uniform(ks[5], (P,), jnp.float32, -lim, lim),
    )


def pack_params(canonical, latent_dim_perception, latent_dim_action, hidden_dim):
    """Fused, 128-lane-padded, MXU-friendly layout used by the kernels."""
    P, A, H = latent_dim_perception, latent_dim_action, hidden_dim
    Hp = _round_up(H, _LANE)

    def pad_gate_cols(w):   # [rows, 4H] -> [rows, 4Hp], zero in padded lanes
        rows = w.shape[0]
        out = jnp.zeros((rows, 4 * Hp), w.dtype)
        for k in range(4):
            out = out.at[:, k * Hp:k * Hp + H].set(w[:, k * H:(k + 1) * H])
        return out

    w_ih = pad_gate_cols(canonical["w_ih"])                        # [P+A, 4Hp]
    b_gates = pad_gate_cols((canonical["b_ih"] + canonical["b_hh"])[None, :])
    w_hh = jnp.zeros((Hp, 4 * Hp), jnp.float32).at[:H].set(
        pad_gate_cols(canonical["w_hh"]))
    w_fc = jnp.zeros((Hp, P), jnp.float32).at[:H].set(canonical["w_fc"])

    return dict(
        w_ih_p=w_ih[:P].astype(jnp.bfloat16),      # [P, 4Hp]  bf16
        w_ih_a=w_ih[P:].astype(jnp.bfloat16),      # [A, 4Hp]  bf16
        b_gates=b_gates.astype(jnp.float32),       # [1, 4Hp]  f32
        w_hh=w_hh,                                 # [Hp, 4Hp] f32 (recurrence stays f32)
        w_fc=w_fc.astype(jnp.bfloat16),            # [Hp, P]   bf16
        b_fc=canonical["b_fc"][None, :].astype(jnp.float32),   # [1, P] f32
    )


# --------------------------------------------------------------------------
# Pure-JAX f32 reference (lax.scan LSTM) for correctness checking.
# --------------------------------------------------------------------------
def _reference_forward(perception, action, canonical, hidden_dim):
    H = hidden_dim
    x = jnp.concatenate([perception, action], axis=-1).astype(jnp.float32)
    x = jnp.transpose(x, (1, 0, 2))                 # [T, B, D_in]
    B = x.shape[1]
    w_ih, w_hh = canonical["w_ih"], canonical["w_hh"]
    b = canonical["b_ih"] + canonical["b_hh"]

    def step(carry, x_t):
        h, c = carry
        gates = x_t @ w_ih + b + h @ w_hh
        i = jax.nn.sigmoid(gates[:, 0 * H:1 * H])
        f = jax.nn.sigmoid(gates[:, 1 * H:2 * H])
        g = jnp.tanh(gates[:, 2 * H:3 * H])
        o = jax.nn.sigmoid(gates[:, 3 * H:4 * H])
        c_new = f * c + i * g
        h_new = o * jnp.tanh(c_new)
        return (h_new, c_new), h_new

    h0 = jnp.zeros((B, H), jnp.float32)
    c0 = jnp.zeros((B, H), jnp.float32)
    (h_n, c_n), hs = jax.lax.scan(step, (h0, c0), x)
    out = hs @ canonical["w_fc"] + canonical["b_fc"]
    return jnp.transpose(out, (1, 0, 2)), (h_n[None], c_n[None])


if __name__ == "__main__":
    # Small shapes consistent with the module's forward contract.
    batch = 2
    seq = 8
    latent_dim_perception = 256   # small stand-in for 4 * (256 // 8) ** 2
    latent_dim_action = 8
    hidden_dim = 64               # padded to 128 lanes per gate inside the kernels

    key = jax.random.PRNGKey(0)
    kp, ka, kw = jax.random.split(key, 3)
    perception = jax.random.normal(
        kp, (batch, seq, latent_dim_perception), jnp.float32)
    action = jax.random.normal(
        ka, (batch, seq, latent_dim_action), jnp.float32)

    canonical = init_canonical_params(
        kw, latent_dim_perception, latent_dim_action, hidden_dim)
    params = pack_params(
        canonical, latent_dim_perception, latent_dim_action, hidden_dim)

    _single_buffer_supported()    # run the Buffered(1) probe outside the jit trace

    out, (h_n, c_n) = rnn_perception_action_forward(
        perception, action, params, hidden_dim=hidden_dim)
    jax.block_until_ready((out, h_n, c_n))

    # Validate against a pure-JAX f32 reference (bf16 MXU operands -> ~1e-2 tol).
    ref_out, (ref_h, ref_c) = _reference_forward(
        perception, action, canonical, hidden_dim)
    assert out.shape == (batch, seq, latent_dim_perception)
    assert h_n.shape == (1, batch, hidden_dim)
    assert c_n.shape == (1, batch, hidden_dim)
    assert jnp.allclose(out, ref_out, atol=3e-2, rtol=3e-2)
    assert jnp.allclose(h_n, ref_h, atol=3e-2, rtol=3e-2)
    assert jnp.allclose(c_n, ref_c, atol=3e-2, rtol=3e-2)

    print("KERNEL_OK")
</pallas_src>

<mosaic_0001>
module attributes {stable_mosaic.version = 11 : i64} {
  func.func @k(%arg0: i32, %arg1: memref<8x128xf32, #tpu.memory_space<vmem>>, %arg2: memref<8x128xf32, #tpu.memory_space<vmem>>, %arg3: memref<8x128xf32, #tpu.memory_space<vmem>>) attributes {dimension_semantics = [#tpu.dimension_semantics<arbitrary>], iteration_bounds = array<i64: 2>, scalar_prefetch = 0 : i64, scratch_operands = 0 : i64, tpu.core_type = #tpu.core_type<tc>, window_params = [{transform_indices = @transform_0, window_bounds = array<i64: 8, 128>}, {pipeline_mode = #tpu.pipeline_mode<synchronous>, transform_indices = @transform_1, window_bounds = array<i64: 8, 128>}, {transform_indices = @transform_2, window_bounds = array<i64: 8, 128>}]} {
    %c0 = arith.constant 0 : index
    %c0_0 = arith.constant 0 : index
    %0 = vector.load %arg1[%c0, %c0_0] : memref<8x128xf32, #tpu.memory_space<vmem>>, vector<8x128xf32>
    %c0_1 = arith.constant 0 : index
    %c0_2 = arith.constant 0 : index
    %1 = vector.load %arg2[%c0_1, %c0_2] : memref<8x128xf32, #tpu.memory_space<vmem>>, vector<8x128xf32>
    %2 = arith.addf %0, %1 : vector<8x128xf32>
    %c0_3 = arith.constant 0 : index
    %c0_4 = arith.constant 0 : index
    %3 = vector.load %arg3[%c0_3, %c0_4] : memref<8x128xf32, #tpu.memory_space<vmem>>, vector<8x128xf32>
    tpu.vector_store %arg3[%c0_3, %c0_4], %2 {strides = array<i32>} : memref<8x128xf32, #tpu.memory_space<vmem>>, vector<8x128xf32>,
    return
  }
  func.func @transform_0(%arg0: i32) -> (i32, i32) {
    %c0_i32 = arith.constant 0 : i32
    %c0_i32_0 = arith.constant 0 : i32
    return %arg0, %c0_i32 : i32, i32
  }
  func.func @transform_1(%arg0: i32) -> (i32, i32) {
    %c0_i32 = arith.constant 0 : i32
    %c0_i32_0 = arith.constant 0 : i32
    %c0_i32_1 = arith.constant 0 : i32
    return %c0_i32, %c0_i32_0 : i32, i32
  }
  func.func @transform_2(%arg0: i32) -> (i32, i32) {
    %c0_i32 = arith.constant 0 : i32
    %c0_i32_0 = arith.constant 0 : i32
    return %arg0, %c0_i32 : i32, i32
  }
}

module attributes {stable_mosaic.version = 11 : i64} {
  func.func @kernel(%arg0: i32, %arg1: memref<16x256xf32, #tpu.memory_space<vmem>>, %arg2: memref<16x8xf32, #tpu.memory_space<vmem>>, %arg3: memref<256x512xbf16, #tpu.memory_space<vmem>>, %arg4: memref<8x512xbf16, #tpu.memory_space<vmem>>, %arg5: memref<1x512xf32, #tpu.memory_space<vmem>>, %arg6: memref<16x512xf32, #tpu.memory_space<vmem>>) attributes {dimension_semantics = [#tpu.dimension_semantics<parallel>], iteration_bounds = array<i64: 1>, scalar_prefetch = 0 : i64, scratch_operands = 0 : i64, tpu.core_type = #tpu.core_type<tc>, window_params = [{transform_indices = @transform_0, window_bounds = array<i64: 16, 256>}, {transform_indices = @transform_1, window_bounds = array<i64: 16, 8>}, {pipeline_mode = #tpu.pipeline_mode<synchronous>, transform_indices = @transform_2, window_bounds = array<i64: 256, 512>}, {pipeline_mode = #tpu.pipeline_mode<synchronous>, transform_indices = @transform_3, window_bounds = array<i64: 8, 512>}, {pipeline_mode = #tpu.pipeline_mode<synchronous>, transform_indices = @transform_4, window_bounds = array<i64: 1, 512>}, {transform_indices = @transform_5, window_bounds = array<i64: 16, 512>}]} {
    %c0 = arith.constant 0 : index
    %c0_0 = arith.constant 0 : index
    %0 = vector.load %arg5[%c0, %c0_0] : memref<1x512xf32, #tpu.memory_space<vmem>>, vector<1x512xf32>
    %c0_1 = arith.constant 0 : index
    %c0_2 = arith.constant 0 : index
    %1 = vector.load %arg1[%c0_1, %c0_2] : memref<16x256xf32, #tpu.memory_space<vmem>>, vector<16x256xf32>
    %2 = arith.truncf %1 : vector<16x256xf32> to vector<16x256xbf16>
    %c0_3 = arith.constant 0 : index
    %c0_4 = arith.constant 0 : index
    %3 = vector.load %arg3[%c0_3, %c0_4] : memref<256x512xbf16, #tpu.memory_space<vmem>>, vector<256x512xbf16>
    %cst = arith.constant dense<0.000000e+00> : vector<16x512xf32>
    %4 = tpu.matmul %2, %3, %cst {dimension_numbers = #tpu.dot_dimension_numbers<[1], [0], [0], [1], [0, 0, 1, 1], [], []>} : vector<16x256xbf16>, vector<256x512xbf16>, vector<16x512xf32> -> vector<16x512xf32>
    %5 = vector.broadcast %0 : vector<1x512xf32> to vector<16x512xf32>
    %6 = arith.addf %5, %4 : vector<16x512xf32>
    %c0_5 = arith.constant 0 : index
    %c0_6 = arith.constant 0 : index
    %7 = vector.load %arg2[%c0_5, %c0_6] : memref<16x8xf32, #tpu.memory_space<vmem>>, vector<16x8xf32>
    %8 = arith.truncf %7 : vector<16x8xf32> to vector<16x8xbf16>
    %c0_7 = arith.constant 0 : index
    %c0_8 = arith.constant 0 : index
    %9 = vector.load %arg4[%c0_7, %c0_8] : memref<8x512xbf16, #tpu.memory_space<vmem>>, vector<8x512xbf16>
    %cst_9 = arith.constant dense<0.000000e+00> : vector<16x512xf32>
    %10 = tpu.matmul %8, %9, %cst_9 {dimension_numbers = #tpu.dot_dimension_numbers<[1], [0], [0], [1], [0, 0, 1, 1], [], []>} : vector<16x8xbf16>, vector<8x512xbf16>, vector<16x512xf32> -> vector<16x512xf32>
    %11 = arith.addf %6, %10 : vector<16x512xf32>
    %c0_10 = arith.constant 0 : index
    %c0_11 = arith.constant 0 : index
    %12 = vector.load %arg6[%c0_10, %c0_11] : memref<16x512xf32, #tpu.memory_space<vmem>>, vector<16x512xf32>
    tpu.vector_store %arg6[%c0_10, %c0_11], %11 {strides = array<i32>} : memref<16x512xf32, #tpu.memory_space<vmem>>, vector<16x512xf32>,
    return
  }
  func.func @transform_0(%arg0: i32) -> (i32, i32) {
    %c0_i32 = arith.constant 0 : i32
    %c0_i32_0 = arith.constant 0 : i32
    return %arg0, %c0_i32 : i32, i32
  }
  func.func @transform_1(%arg0: i32) -> (i32, i32) {
    %c0_i32 = arith.constant 0 : i32
    %c0_i32_0 = arith.constant 0 : i32
    return %arg0, %c0_i32 : i32, i32
  }
  func.func @transform_2(%arg0: i32) -> (i32, i32) {
    %c0_i32 = arith.constant 0 : i32
    %c0_i32_0 = arith.constant 0 : i32
    %c0_i32_1 = arith.constant 0 : i32
    return %c0_i32, %c0_i32_0 : i32, i32
  }
  func.func @transform_3(%arg0: i32) -> (i32, i32) {
    %c0_i32 = arith.constant 0 : i32
    %c0_i32_0 = arith.constant 0 : i32
    %c0_i32_1 = arith.constant 0 : i32
    return %c0_i32, %c0_i32_0 : i32, i32
  }
  func.func @transform_4(%arg0: i32) -> (i32, i32) {
    %c0_i32 = arith.constant 0 : i32
    %c0_i32_0 = arith.constant 0 : i32
    %c0_i32_1 = arith.constant 0 : i32
    return %c0_i32, %c0_i32_0 : i32, i32
  }
  func.func @transform_5(%arg0: i32) -> (i32, i32) {
    %c0_i32 = arith.constant 0 : i32
    %c0_i32_0 = arith.constant 0 : i32
    return %arg0, %c0_i32 : i32, i32
  }
}

module attributes {stable_mosaic.version = 11 : i64} {
  func.func @kernel(%arg0: i32, %arg1: i32, %arg2: memref<8x2x512xf32, #tpu.memory_space<vmem>>, %arg3: memref<128x512xf32, #tpu.memory_space<vmem>>, %arg4: memref<8x2x128xf32, #tpu.memory_space<vmem>>, %arg5: memref<2x128xf32, #tpu.memory_space<vmem>>, %arg6: memref<2x128xf32, #tpu.memory_space<vmem>>, %arg7: memref<2x128xf32, #tpu.memory_space<vmem>>, %arg8: memref<2x128xf32, #tpu.memory_space<vmem>>) attributes {dimension_semantics = [#tpu.dimension_semantics<parallel>, #tpu.dimension_semantics<arbitrary>], iteration_bounds = array<i64: 1, 1>, scalar_prefetch = 0 : i64, scratch_operands = 2 : i64, tpu.core_type = #tpu.core_type<tc>, window_params = [{transform_indices = @transform_0, window_bounds = array<i64: 8, 2, 512>}, {pipeline_mode = #tpu.pipeline_mode<synchronous>, transform_indices = @transform_1, window_bounds = array<i64: 128, 512>}, {transform_indices = @transform_2, window_bounds = array<i64: 8, 2, 128>}, {transform_indices = @transform_3, window_bounds = array<i64: 2, 128>}, {transform_indices = @transform_4, window_bounds = array<i64: 2, 128>}]} {
    %c0_i32 = arith.constant 0 : i32
    %0 = arith.cmpi eq, %arg1, %c0_i32 : i32
    %1 = arith.extui %0 : i1 to i32
    %c0_i32_0 = arith.constant 0 : i32
    %2 = arith.cmpi ne, %1, %c0_i32_0 : i32
    scf.if %2 {
      %cst_90 = arith.constant 0.000000e+00 : f32
      %290 = vector.broadcast %cst_90 : f32 to vector<2x128xf32>
      %c0_91 = arith.constant 0 : index
      %c0_92 = arith.constant 0 : index
      %291 = vector.load %arg7[%c0_91, %c0_92] : memref<2x128xf32, #tpu.memory_space<vmem>>, vector<2x128xf32>
      tpu.vector_store %arg7[%c0_91, %c0_92], %290 {strides = array<i32>} : memref<2x128xf32, #tpu.memory_space<vmem>>, vector<2x128xf32>,
      %cst_93 = arith.constant 0.000000e+00 : f32
      %292 = vector.broadcast %cst_93 : f32 to vector<2x128xf32>
      %c0_94 = arith.constant 0 : index
      %c0_95 = arith.constant 0 : index
      %293 = vector.load %arg8[%c0_94, %c0_95] : memref<2x128xf32, #tpu.memory_space<vmem>>, vector<2x128xf32>
      tpu.vector_store %arg8[%c0_94, %c0_95], %292 {strides = array<i32>} : memref<2x128xf32, #tpu.memory_space<vmem>>, vector<2x128xf32>,
    } else {
    }
    %c0 = arith.constant 0 : index
    %c0_1 = arith.constant 0 : index
    %3 = vector.load %arg7[%c0, %c0_1] : memref<2x128xf32, #tpu.memory_space<vmem>>, vector<2x128xf32>
    %c0_2 = arith.constant 0 : index
    %c0_3 = arith.constant 0 : index
    %4 = vector.load %arg8[%c0_2, %c0_3] : memref<2x128xf32, #tpu.memory_space<vmem>>, vector<2x128xf32>
    %c0_i32_4 = arith.constant 0 : i32
    %5 = arith.index_cast %c0_i32_4 : i32 to index
    %c0_5 = arith.constant 0 : index
    %c0_6 = arith.constant 0 : index
    %6 = vector.load %arg2[%5, %c0_5, %c0_6] : memref<8x2x512xf32, #tpu.memory_space<vmem>>, vector<1x2x512xf32>
    %7 = vector.shape_cast %6 : vector<1x2x512xf32> to vector<2x512xf32>
    %c0_7 = arith.constant 0 : index
    %c0_8 = arith.constant 0 : index
    %8 = vector.load %arg3[%c0_7, %c0_8] : memref<128x512xf32, #tpu.memory_space<vmem>>, vector<128x512xf32>
    %cst = arith.constant dense<0.000000e+00> : vector<2x512xf32>
    %9 = tpu.matmul %3, %8, %cst {dimension_numbers = #tpu.dot_dimension_numbers<[1], [0], [0], [1], [0, 0, 1, 1], [], []>} : vector<2x128xf32>, vector<128x512xf32>, vector<2x512xf32> -> vector<2x512xf32>
    %10 = arith.addf %7, %9 : vector<2x512xf32>
    %11 = vector.extract_strided_slice %10 {offsets = [0, 0], sizes = [2, 128], strides = [1, 1]} : vector<2x512xf32> to vector<2x128xf32>
    %12 = arith.negf %11 : vector<2x128xf32>
    %13 = math.exp %12 : vector<2x128xf32>
    %cst_9 = arith.constant 1.000000e+00 : f32
    %14 = vector.broadcast %cst_9 : f32 to vector<2x128xf32>
    %15 = arith.addf %14, %13 : vector<2x128xf32>
    %16 = arith.divf %14, %15 : vector<2x128xf32>
    %17 = vector.extract_strided_slice %10 {offsets = [0, 128], sizes = [2, 128], strides = [1, 1]} : vector<2x512xf32> to vector<2x128xf32>
    %18 = arith.negf %17 : vector<2x128xf32>
    %19 = math.exp %18 : vector<2x128xf32>
    %cst_10 = arith.constant 1.000000e+00 : f32
    %20 = vector.broadcast %cst_10 : f32 to vector<2x128xf32>
    %21 = arith.addf %20, %19 : vector<2x128xf32>
    %22 = arith.divf %20, %21 : vector<2x128xf32>
    %23 = vector.extract_strided_slice %10 {offsets = [0, 256], sizes = [2, 128], strides = [1, 1]} : vector<2x512xf32> to vector<2x128xf32>
    %24 = math.tanh %23 : vector<2x128xf32>
    %25 = vector.extract_strided_slice %10 {offsets = [0, 384], sizes = [2, 128], strides = [1, 1]} : vector<2x512xf32> to vector<2x128xf32>
    %26 = arith.negf %25 : vector<2x128xf32>
    %27 = math.exp %26 : vector<2x128xf32>
    %cst_11 = arith.constant 1.000000e+00 : f32
    %28 = vector.broadcast %cst_11 : f32 to vector<2x128xf32>
    %29 = arith.addf %28, %27 : vector<2x128xf32>
    %30 = arith.divf %28, %29 : vector<2x128xf32>
    %31 = arith.mulf %22, %4 : vector<2x128xf32>
    %32 = arith.mulf %16, %24 : vector<2x128xf32>
    %33 = arith.addf %31, %32 : vector<2x128xf32>
    %34 = math.tanh %33 : vector<2x128xf32>
    %35 = arith.mulf %30, %34 : vector<2x128xf32>
    %36 = arith.index_cast %c0_i32_4 : i32 to index
    %c0_12 = arith.constant 0 : index
    %c0_13 = arith.constant 0 : index
    %37 = vector.load %arg4[%36, %c0_12, %c0_13] : memref<8x2x128xf32, #tpu.memory_space<vmem>>, vector<1x2x128xf32>
    %38 = vector.shape_cast %37 : vector<1x2x128xf32> to vector<2x128xf32>
    %39 = vector.shape_cast %35 : vector<2x128xf32> to vector<1x2x128xf32>
    tpu.vector_store %arg4[%36, %c0_12, %c0_13], %39 {strides = array<i32>} : memref<8x2x128xf32, #tpu.memory_space<vmem>>, vector<1x2x128xf32>,
    %c1_i32 = arith.constant 1 : i32
    %40 = arith.index_cast %c1_i32 : i32 to index
    %c0_14 = arith.constant 0 : index
    %c0_15 = arith.constant 0 : index
    %41 = vector.load %arg2[%40, %c0_14, %c0_15] : memref<8x2x512xf32, #tpu.memory_space<vmem>>, vector<1x2x512xf32>
    %42 = vector.shape_cast %41 : vector<1x2x512xf32> to vector<2x512xf32>
    %c0_16 = arith.constant 0 : index
    %c0_17 = arith.constant 0 : index
    %43 = vector.load %arg3[%c0_16, %c0_17] : memref<128x512xf32, #tpu.memory_space<vmem>>, vector<128x512xf32>
    %cst_18 = arith.constant dense<0.000000e+00> : vector<2x512xf32>
    %44 = tpu.matmul %35, %43, %cst_18 {dimension_numbers = #tpu.dot_dimension_numbers<[1], [0], [0], [1], [0, 0, 1, 1], [], []>} : vector<2x128xf32>, vector<128x512xf32>, vector<2x512xf32> -> vector<2x512xf32>
    %45 = arith.addf %42, %44 : vector<2x512xf32>
    %46 = vector.extract_strided_slice %45 {offsets = [0, 0], sizes = [2, 128], strides = [1, 1]} : vector<2x512xf32> to vector<2x128xf32>
    %47 = arith.negf %46 : vector<2x128xf32>
    %48 = math.exp %47 : vector<2x128xf32>
    %cst_19 = arith.constant 1.000000e+00 : f32
    %49 = vector.broadcast %cst_19 : f32 to vector<2x128xf32>
    %50 = arith.addf %49, %48 : vector<2x128xf32>
    %51 = arith.divf %49, %50 : vector<2x128xf32>
    %52 = vector.extract_strided_slice %45 {offsets = [0, 128], sizes = [2, 128], strides = [1, 1]} : vector<2x512xf32> to vector<2x128xf32>
    %53 = arith.negf %52 : vector<2x128xf32>
    %54 = math.exp %53 : vector<2x128xf32>
    %cst_20 = arith.constant 1.000000e+00 : f32
    %55 = vector.broadcast %cst_20 : f32 to vector<2x128xf32>
    %56 = arith.addf %55, %54 : vector<2x128xf32>
    %57 = arith.divf %55, %56 : vector<2x128xf32>
    %58 = vector.extract_strided_slice %45 {offsets = [0, 256], sizes = [2, 128], strides = [1, 1]} : vector<2x512xf32> to vector<2x128xf32>
    %59 = math.tanh %58 : vector<2x128xf32>
    %60 = vector.extract_strided_slice %45 {offsets = [0, 384], sizes = [2, 128], strides = [1, 1]} : vector<2x512xf32> to vector<2x128xf32>
    %61 = arith.negf %60 : vector<2x128xf32>
    %62 = math.exp %61 : vector<2x128xf32>
    %cst_21 = arith.constant 1.000000e+00 : f32
    %63 = vector.broadcast %cst_21 : f32 to vector<2x128xf32>
    %64 = arith.addf %63, %62 : vector<2x128xf32>
    %65 = arith.divf %63, %64 : vector<2x128xf32>
    %66 = arith.mulf %57, %33 : vector<2x128xf32>
    %67 = arith.mulf %51, %59 : vector<2x128xf32>
    %68 = arith.addf %66, %67 : vector<2x128xf32>
    %69 = math.tanh %68 : vector<2x128xf32>
    %70 = arith.mulf %65, %69 : vector<2x128xf32>
    %71 = arith.index_cast %c1_i32 : i32 to index
    %c0_22 = arith.constant 0 : index
    %c0_23 = arith.constant 0 : index
    %72 = vector.load %arg4[%71, %c0_22, %c0_23] : memref<8x2x128xf32, #tpu.memory_space<vmem>>, vector<1x2x128xf32>
    %73 = vector.shape_cast %72 : vector<1x2x128xf32> to vector<2x128xf32>
    %74 = vector.shape_cast %70 : vector<2x128xf32> to vector<1x2x128xf32>
    tpu.vector_store %arg4[%71, %c0_22, %c0_23], %74 {strides = array<i32>} : memref<8x2x128xf32, #tpu.memory_space<vmem>>, vector<1x2x128xf32>,
    %c2_i32 = arith.constant 2 : i32
    %75 = arith.index_cast %c2_i32 : i32 to index
    %c0_24 = arith.constant 0 : index
    %c0_25 = arith.constant 0 : index
    %76 = vector.load %arg2[%75, %c0_24, %c0_25] : memref<8x2x512xf32, #tpu.memory_space<vmem>>, vector<1x2x512xf32>
    %77 = vector.shape_cast %76 : vector<1x2x512xf32> to vector<2x512xf32>
    %c0_26 = arith.constant 0 : index
    %c0_27 = arith.constant 0 : index
    %78 = vector.load %arg3[%c0_26, %c0_27] : memref<128x512xf32, #tpu.memory_space<vmem>>, vector<128x512xf32>
    %cst_28 = arith.constant dense<0.000000e+00> : vector<2x512xf32>
    %79 = tpu.matmul %70, %78, %cst_28 {dimension_numbers = #tpu.dot_dimension_numbers<[1], [0], [0], [1], [0, 0, 1, 1], [], []>} : vector<2x128xf32>, vector<128x512xf32>, vector<2x512xf32> -> vector<2x512xf32>
    %80 = arith.addf %77, %79 : vector<2x512xf32>
    %81 = vector.extract_strided_slice %80 {offsets = [0, 0], sizes = [2, 128], strides = [1, 1]} : vector<2x512xf32> to vector<2x128xf32>
    %82 = arith.negf %81 : vector<2x128xf32>
    %83 = math.exp %82 : vector<2x128xf32>
    %cst_29 = arith.constant 1.000000e+00 : f32
    %84 = vector.broadcast %cst_29 : f32 to vector<2x128xf32>
    %85 = arith.addf %84, %83 : vector<2x128xf32>
    %86 = arith.divf %84, %85 : vector<2x128xf32>
    %87 = vector.extract_strided_slice %80 {offsets = [0, 128], sizes = [2, 128], strides = [1, 1]} : vector<2x512xf32> to vector<2x128xf32>
    %88 = arith.negf %87 : vector<2x128xf32>
    %89 = math.exp %88 : vector<2x128xf32>
    %cst_30 = arith.constant 1.000000e+00 : f32
    %90 = vector.broadcast %cst_30 : f32 to vector<2x128xf32>
    %91 = arith.addf %90, %89 : vector<2x128xf32>
    %92 = arith.divf %90, %91 : vector<2x128xf32>
    %93 = vector.extract_strided_slice %80 {offsets = [0, 256], sizes = [2, 128], strides = [1, 1]} : vector<2x512xf32> to vector<2x128xf32>
    %94 = math.tanh %93 : vector<2x128xf32>
    %95 = vector.extract_strided_slice %80 {offsets = [0, 384], sizes = [2, 128], strides = [1, 1]} : vector<2x512xf32> to vector<2x128xf32>
    %96 = arith.negf %95 : vector<2x128xf32>
    %97 = math.exp %96 : vector<2x128xf32>
    %cst_31 = arith.constant 1.000000e+00 : f32
    %98 = vector.broadcast %cst_31 : f32 to vector<2x128xf32>
    %99 = arith.addf %98, %97 : vector<2x128xf32>
    %100 = arith.divf %98, %99 : vector<2x128xf32>
    %101 = arith.mulf %92, %68 : vector<2x128xf32>
    %102 = arith.mulf %86, %94 : vector<2x128xf32>
    %103 = arith.addf %101, %102 : vector<2x128xf32>
    %104 = math.tanh %103 : vector<2x128xf32>
    %105 = arith.mulf %100, %104 : vector<2x128xf32>
    %106 = arith.index_cast %c2_i32 : i32 to index
    %c0_32 = arith.constant 0 : index
    %c0_33 = arith.constant 0 : index
    %107 = vector.load %arg4[%106, %c0_32, %c0_33] : memref<8x2x128xf32, #tpu.memory_space<vmem>>, vector<1x2x128xf32>
    %108 = vector.shape_cast %107 : vector<1x2x128xf32> to vector<2x128xf32>
    %109 = vector.shape_cast %105 : vector<2x128xf32> to vector<1x2x128xf32>
    tpu.vector_store %arg4[%106, %c0_32, %c0_33], %109 {strides = array<i32>} : memref<8x2x128xf32, #tpu.memory_space<vmem>>, vector<1x2x128xf32>,
    %c3_i32 = arith.constant 3 : i32
    %110 = arith.index_cast %c3_i32 : i32 to index
    %c0_34 = arith.constant 0 : index
    %c0_35 = arith.constant 0 : index
    %111 = vector.load %arg2[%110, %c0_34, %c0_35] : memref<8x2x512xf32, #tpu.memory_space<vmem>>, vector<1x2x512xf32>
    %112 = vector.shape_cast %111 : vector<1x2x512xf32> to vector<2x512xf32>
    %c0_36 = arith.constant 0 : index
    %c0_37 = arith.constant 0 : index
    %113 = vector.load %arg3[%c0_36, %c0_37] : memref<128x512xf32, #tpu.memory_space<vmem>>, vector<128x512xf32>
    %cst_38 = arith.constant dense<0.000000e+00> : vector<2x512xf32>
    %114 = tpu.matmul %105, %113, %cst_38 {dimension_numbers = #tpu.dot_dimension_numbers<[1], [0], [0], [1], [0, 0, 1, 1], [], []>} : vector<2x128xf32>, vector<128x512xf32>, vector<2x512xf32> -> vector<2x512xf32>
    %115 = arith.addf %112, %114 : vector<2x512xf32>
    %116 = vector.extract_strided_slice %115 {offsets = [0, 0], sizes = [2, 128], strides = [1, 1]} : vector<2x512xf32> to vector<2x128xf32>
    %117 = arith.negf %116 : vector<2x128xf32>
    %118 = math.exp %117 : vector<2x128xf32>
    %cst_39 = arith.constant 1.000000e+00 : f32
    %119 = vector.broadcast %cst_39 : f32 to vector<2x128xf32>
    %120 = arith.addf %119, %118 : vector<2x128xf32>
    %121 = arith.divf %119, %120 : vector<2x128xf32>
    %122 = vector.extract_strided_slice %115 {offsets = [0, 128], sizes = [2, 128], strides = [1, 1]} : vector<2x512xf32> to vector<2x128xf32>
    %123 = arith.negf %122 : vector<2x128xf32>
    %124 = math.exp %123 : vector<2x128xf32>
    %cst_40 = arith.constant 1.000000e+00 : f32
    %125 = vector.broadcast %cst_40 : f32 to vector<2x128xf32>
    %126 = arith.addf %125, %124 : vector<2x128xf32>
    %127 = arith.divf %125, %126 : vector<2x128xf32>
    %128 = vector.extract_strided_slice %115 {offsets = [0, 256], sizes = [2, 128], strides = [1, 1]} : vector<2x512xf32> to vector<2x128xf32>
    %129 = math.tanh %128 : vector<2x128xf32>
    %130 = vector.extract_strided_slice %115 {offsets = [0, 384], sizes = [2, 128], strides = [1, 1]} : vector<2x512xf32> to vector<2x128xf32>
    %131 = arith.negf %130 : vector<2x128xf32>
    %132 = math.exp %131 : vector<2x128xf32>
    %cst_41 = arith.constant 1.000000e+00 : f32
    %133 = vector.broadcast %cst_41 : f32 to vector<2x128xf32>
    %134 = arith.addf %133, %132 : vector<2x128xf32>
    %135 = arith.divf %133, %134 : vector<2x128xf32>
    %136 = arith.mulf %127, %103 : vector<2x128xf32>
    %137 = arith.mulf %121, %129 : vector<2x128xf32>
    %138 = arith.addf %136, %137 : vector<2x128xf32>
    %139 = math.tanh %138 : vector<2x128xf32>
    %140 = arith.mulf %135, %139 : vector<2x128xf32>
    %141 = arith.index_cast %c3_i32 : i32 to index
    %c0_42 = arith.constant 0 : index
    %c0_43 = arith.constant 0 : index
    %142 = vector.load %arg4[%141, %c0_42, %c0_43] : memref<8x2x128xf32, #tpu.memory_space<vmem>>, vector<1x2x128xf32>
    %143 = vector.shape_cast %142 : vector<1x2x128xf32> to vector<2x128xf32>
    %144 = vector.shape_cast %140 : vector<2x128xf32> to vector<1x2x128xf32>
    tpu.vector_store %arg4[%141, %c0_42, %c0_43], %144 {strides = array<i32>} : memref<8x2x128xf32, #tpu.memory_space<vmem>>, vector<1x2x128xf32>,
    %c4_i32 = arith.constant 4 : i32
    %145 = arith.index_cast %c4_i32 : i32 to index
    %c0_44 = arith.constant 0 : index
    %c0_45 = arith.constant 0 : index
    %146 = vector.load %arg2[%145, %c0_44, %c0_45] : memref<8x2x512xf32, #tpu.memory_space<vmem>>, vector<1x2x512xf32>
    %147 = vector.shape_cast %146 : vector<1x2x512xf32> to vector<2x512xf32>
    %c0_46 = arith.constant 0 : index
    %c0_47 = arith.constant 0 : index
    %148 = vector.load %arg3[%c0_46, %c0_47] : memref<128x512xf32, #tpu.memory_space<vmem>>, vector<128x512xf32>
    %cst_48 = arith.constant dense<0.000000e+00> : vector<2x512xf32>
    %149 = tpu.matmul %140, %148, %cst_48 {dimension_numbers = #tpu.dot_dimension_numbers<[1], [0], [0], [1], [0, 0, 1, 1], [], []>} : vector<2x128xf32>, vector<128x512xf32>, vector<2x512xf32> -> vector<2x512xf32>
    %150 = arith.addf %147, %149 : vector<2x512xf32>
    %151 = vector.extract_strided_slice %150 {offsets = [0, 0], sizes = [2, 128], strides = [1, 1]} : vector<2x512xf32> to vector<2x128xf32>
    %152 = arith.negf %151 : vector<2x128xf32>
    %153 = math.exp %152 : vector<2x128xf32>
    %cst_49 = arith.constant 1.000000e+00 : f32
    %154 = vector.broadcast %cst_49 : f32 to vector<2x128xf32>
    %155 = arith.addf %154, %153 : vector<2x128xf32>
    %156 = arith.divf %154, %155 : vector<2x128xf32>
    %157 = vector.extract_strided_slice %150 {offsets = [0, 128], sizes = [2, 128], strides = [1, 1]} : vector<2x512xf32> to vector<2x128xf32>
    %158 = arith.negf %157 : vector<2x128xf32>
    %159 = math.exp %158 : vector<2x128xf32>
    %cst_50 = arith.constant 1.000000e+00 : f32
    %160 = vector.broadcast %cst_50 : f32 to vector<2x128xf32>
    %161 = arith.addf %160, %159 : vector<2x128xf32>
    %162 = arith.divf %160, %161 : vector<2x128xf32>
    %163 = vector.extract_strided_slice %150 {offsets = [0, 256], sizes = [2, 128], strides = [1, 1]} : vector<2x512xf32> to vector<2x128xf32>
    %164 = math.tanh %163 : vector<2x128xf32>
    %165 = vector.extract_strided_slice %150 {offsets = [0, 384], sizes = [2, 128], strides = [1, 1]} : vector<2x512xf32> to vector<2x128xf32>
    %166 = arith.negf %165 : vector<2x128xf32>
    %167 = math.exp %166 : vector<2x128xf32>
    %cst_51 = arith.constant 1.000000e+00 : f32
    %168 = vector.broadcast %cst_51 : f32 to vector<2x128xf32>
    %169 = arith.addf %168, %167 : vector<2x128xf32>
    %170 = arith.divf %168, %169 : vector<2x128xf32>
    %171 = arith.mulf %162, %138 : vector<2x128xf32>
    %172 = arith.mulf %156, %164 : vector<2x128xf32>
    %173 = arith.addf %171, %172 : vector<2x128xf32>
    %174 = math.tanh %173 : vector<2x128xf32>
    %175 = arith.mulf %170, %174 : vector<2x128xf32>
    %176 = arith.index_cast %c4_i32 : i32 to index
    %c0_52 = arith.constant 0 : index
    %c0_53 = arith.constant 0 : index
    %177 = vector.load %arg4[%176, %c0_52, %c0_53] : memref<8x2x128xf32, #tpu.memory_space<vmem>>, vector<1x2x128xf32>
    %178 = vector.shape_cast %177 : vector<1x2x128xf32> to vector<2x128xf32>
    %179 = vector.shape_cast %175 : vector<2x128xf32> to vector<1x2x128xf32>
    tpu.vector_store %arg4[%176, %c0_52, %c0_53], %179 {strides = array<i32>} : memref<8x2x128xf32, #tpu.memory_space<vmem>>, vector<1x2x128xf32>,
    %c5_i32 = arith.constant 5 : i32
    %180 = arith.index_cast %c5_i32 : i32 to index
    %c0_54 = arith.constant 0 : index
    %c0_55 = arith.constant 0 : index
    %181 = vector.load %arg2[%180, %c0_54, %c0_55] : memref<8x2x512xf32, #tpu.memory_space<vmem>>, vector<1x2x512xf32>
    %182 = vector.shape_cast %181 : vector<1x2x512xf32> to vector<2x512xf32>
    %c0_56 = arith.constant 0 : index
    %c0_57 = arith.constant 0 : index
    %183 = vector.load %arg3[%c0_56, %c0_57] : memref<128x512xf32, #tpu.memory_space<vmem>>, vector<128x512xf32>
    %cst_58 = arith.constant dense<0.000000e+00> : vector<2x512xf32>
    %184 = tpu.matmul %175, %183, %cst_58 {dimension_numbers = #tpu.dot_dimension_numbers<[1], [0], [0], [1], [0, 0, 1, 1], [], []>} : vector<2x128xf32>, vector<128x512xf32>, vector<2x512xf32> -> vector<2x512xf32>
    %185 = arith.addf %182, %184 : vector<2x512xf32>
    %186 = vector.extract_strided_slice %185 {offsets = [0, 0], sizes = [2, 128], strides = [1, 1]} : vector<2x512xf32> to vector<2x128xf32>
    %187 = arith.negf %186 : vector<2x128xf32>
    %188 = math.exp %187 : vector<2x128xf32>
    %cst_59 = arith.constant 1.000000e+00 : f32
    %189 = vector.broadcast %cst_59 : f32 to vector<2x128xf32>
    %190 = arith.addf %189, %188 : vector<2x128xf32>
    %191 = arith.divf %189, %190 : vector<2x128xf32>
    %192 = vector.extract_strided_slice %185 {offsets = [0, 128], sizes = [2, 128], strides = [1, 1]} : vector<2x512xf32> to vector<2x128xf32>
    %193 = arith.negf %192 : vector<2x128xf32>
    %194 = math.exp %193 : vector<2x128xf32>
    %cst_60 = arith.constant 1.000000e+00 : f32
    %195 = vector.broadcast %cst_60 : f32 to vector<2x128xf32>
    %196 = arith.addf %195, %194 : vector<2x128xf32>
    %197 = arith.divf %195, %196 : vector<2x128xf32>
    %198 = vector.extract_strided_slice %185 {offsets = [0, 256], sizes = [2, 128], strides = [1, 1]} : vector<2x512xf32> to vector<2x128xf32>
    %199 = math.tanh %198 : vector<2x128xf32>
    %200 = vector.extract_strided_slice %185 {offsets = [0, 384], sizes = [2, 128], strides = [1, 1]} : vector<2x512xf32> to vector<2x128xf32>
    %201 = arith.negf %200 : vector<2x128xf32>
    %202 = math.exp %201 : vector<2x128xf32>
    %cst_61 = arith.constant 1.000000e+00 : f32
    %203 = vector.broadcast %cst_61 : f32 to vector<2x128xf32>
    %204 = arith.addf %203, %202 : vector<2x128xf32>
    %205 = arith.divf %203, %204 : vector<2x128xf32>
    %206 = arith.mulf %197, %173 : vector<2x128xf32>
    %207 = arith.mulf %191, %199 : vector<2x128xf32>
    %208 = arith.addf %206, %207 : vector<2x128xf32>
    %209 = math.tanh %208 : vector<2x128xf32>
    %210 = arith.mulf %205, %209 : vector<2x128xf32>
    %211 = arith.index_cast %c5_i32 : i32 to index
    %c0_62 = arith.constant 0 : index
    %c0_63 = arith.constant 0 : index
    %212 = vector.load %arg4[%211, %c0_62, %c0_63] : memref<8x2x128xf32, #tpu.memory_space<vmem>>, vector<1x2x128xf32>
    %213 = vector.shape_cast %212 : vector<1x2x128xf32> to vector<2x128xf32>
    %214 = vector.shape_cast %210 : vector<2x128xf32> to vector<1x2x128xf32>
    tpu.vector_store %arg4[%211, %c0_62, %c0_63], %214 {strides = array<i32>} : memref<8x2x128xf32, #tpu.memory_space<vmem>>, vector<1x2x128xf32>,
    %c6_i32 = arith.constant 6 : i32
    %215 = arith.index_cast %c6_i32 : i32 to index
    %c0_64 = arith.constant 0 : index
    %c0_65 = arith.constant 0 : index
    %216 = vector.load %arg2[%215, %c0_64, %c0_65] : memref<8x2x512xf32, #tpu.memory_space<vmem>>, vector<1x2x512xf32>
    %217 = vector.shape_cast %216 : vector<1x2x512xf32> to vector<2x512xf32>
    %c0_66 = arith.constant 0 : index
    %c0_67 = arith.constant 0 : index
    %218 = vector.load %arg3[%c0_66, %c0_67] : memref<128x512xf32, #tpu.memory_space<vmem>>, vector<128x512xf32>
    %cst_68 = arith.constant dense<0.000000e+00> : vector<2x512xf32>
    %219 = tpu.matmul %210, %218, %cst_68 {dimension_numbers = #tpu.dot_dimension_numbers<[1], [0], [0], [1], [0, 0, 1, 1], [], []>} : vector<2x128xf32>, vector<128x512xf32>, vector<2x512xf32> -> vector<2x512xf32>
    %220 = arith.addf %217, %219 : vector<2x512xf32>
    %221 = vector.extract_strided_slice %220 {offsets = [0, 0], sizes = [2, 128], strides = [1, 1]} : vector<2x512xf32> to vector<2x128xf32>
    %222 = arith.negf %221 : vector<2x128xf32>
    %223 = math.exp %222 : vector<2x128xf32>
    %cst_69 = arith.constant 1.000000e+00 : f32
    %224 = vector.broadcast %cst_69 : f32 to vector<2x128xf32>
    %225 = arith.addf %224, %223 : vector<2x128xf32>
    %226 = arith.divf %224, %225 : vector<2x128xf32>
    %227 = vector.extract_strided_slice %220 {offsets = [0, 128], sizes = [2, 128], strides = [1, 1]} : vector<2x512xf32> to vector<2x128xf32>
    %228 = arith.negf %227 : vector<2x128xf32>
    %229 = math.exp %228 : vector<2x128xf32>
    %cst_70 = arith.constant 1.000000e+00 : f32
    %230 = vector.broadcast %cst_70 : f32 to vector<2x128xf32>
    %231 = arith.addf %230, %229 : vector<2x128xf32>
    %232 = arith.divf %230, %231 : vector<2x128xf32>
    %233 = vector.extract_strided_slice %220 {offsets = [0, 256], sizes = [2, 128], strides = [1, 1]} : vector<2x512xf32> to vector<2x128xf32>
    %234 = math.tanh %233 : vector<2x128xf32>
    %235 = vector.extract_strided_slice %220 {offsets = [0, 384], sizes = [2, 128], strides = [1, 1]} : vector<2x512xf32> to vector<2x128xf32>
    %236 = arith.negf %235 : vector<2x128xf32>
    %237 = math.exp %236 : vector<2x128xf32>
    %cst_71 = arith.constant 1.000000e+00 : f32
    %238 = vector.broadcast %cst_71 : f32 to vector<2x128xf32>
    %239 = arith.addf %238, %237 : vector<2x128xf32>
    %240 = arith.divf %238, %239 : vector<2x128xf32>
    %241 = arith.mulf %232, %208 : vector<2x128xf32>
    %242 = arith.mulf %226, %234 : vector<2x128xf32>
    %243 = arith.addf %241, %242 : vector<2x128xf32>
    %244 = math.tanh %243 : vector<2x128xf32>
    %245 = arith.mulf %240, %244 : vector<2x128xf32>
    %246 = arith.index_cast %c6_i32 : i32 to index
    %c0_72 = arith.constant 0 : index
    %c0_73 = arith.constant 0 : index
    %247 = vector.load %arg4[%246, %c0_72, %c0_73] : memref<8x2x128xf32, #tpu.memory_space<vmem>>, vector<1x2x128xf32>
    %248 = vector.shape_cast %247 : vector<1x2x128xf32> to vector<2x128xf32>
    %249 = vector.shape_cast %245 : vector<2x128xf32> to vector<1x2x128xf32>
    tpu.vector_store %arg4[%246, %c0_72, %c0_73], %249 {strides = array<i32>} : memref<8x2x128xf32, #tpu.memory_space<vmem>>, vector<1x2x128xf32>,
    %c7_i32 = arith.constant 7 : i32
    %250 = arith.index_cast %c7_i32 : i32 to index
    %c0_74 = arith.constant 0 : index
    %c0_75 = arith.constant 0 : index
    %251 = vector.load %arg2[%250, %c0_74, %c0_75] : memref<8x2x512xf32, #tpu.memory_space<vmem>>, vector<1x2x512xf32>
    %252 = vector.shape_cast %251 : vector<1x2x512xf32> to vector<2x512xf32>
    %c0_76 = arith.constant 0 : index
    %c0_77 = arith.constant 0 : index
    %253 = vector.load %arg3[%c0_76, %c0_77] : memref<128x512xf32, #tpu.memory_space<vmem>>, vector<128x512xf32>
    %cst_78 = arith.constant dense<0.000000e+00> : vector<2x512xf32>
    %254 = tpu.matmul %245, %253, %cst_78 {dimension_numbers = #tpu.dot_dimension_numbers<[1], [0], [0], [1], [0, 0, 1, 1], [], []>} : vector<2x128xf32>, vector<128x512xf32>, vector<2x512xf32> -> vector<2x512xf32>
    %255 = arith.addf %252, %254 : vector<2x512xf32>
    %256 = vector.extract_strided_slice %255 {offsets = [0, 0], sizes = [2, 128], strides = [1, 1]} : vector<2x512xf32> to vector<2x128xf32>
    %257 = arith.negf %256 : vector<2x128xf32>
    %258 = math.exp %257 : vector<2x128xf32>
    %cst_79 = arith.constant 1.000000e+00 : f32
    %259 = vector.broadcast %cst_79 : f32 to vector<2x128xf32>
    %260 = arith.addf %259, %258 : vector<2x128xf32>
    %261 = arith.divf %259, %260 : vector<2x128xf32>
    %262 = vector.extract_strided_slice %255 {offsets = [0, 128], sizes = [2, 128], strides = [1, 1]} : vector<2x512xf32> to vector<2x128xf32>
    %263 = arith.negf %262 : vector<2x128xf32>
    %264 = math.exp %263 : vector<2x128xf32>
    %cst_80 = arith.constant 1.000000e+00 : f32
    %265 = vector.broadcast %cst_80 : f32 to vector<2x128xf32>
    %266 = arith.addf %265, %264 : vector<2x128xf32>
    %267 = arith.divf %265, %266 : vector<2x128xf32>
    %268 = vector.extract_strided_slice %255 {offsets = [0, 256], sizes = [2, 128], strides = [1, 1]} : vector<2x512xf32> to vector<2x128xf32>
    %269 = math.tanh %268 : vector<2x128xf32>
    %270 = vector.extract_strided_slice %255 {offsets = [0, 384], sizes = [2, 128], strides = [1, 1]} : vector<2x512xf32> to vector<2x128xf32>
    %271 = arith.negf %270 : vector<2x128xf32>
    %272 = math.exp %271 : vector<2x128xf32>
    %cst_81 = arith.constant 1.000000e+00 : f32
    %273 = vector.broadcast %cst_81 : f32 to vector<2x128xf32>
    %274 = arith.addf %273, %272 : vector<2x128xf32>
    %275 = arith.divf %273, %274 : vector<2x128xf32>
    %276 = arith.mulf %267, %243 : vector<2x128xf32>
    %277 = arith.mulf %261, %269 : vector<2x128xf32>
    %278 = arith.addf %276, %277 : vector<2x128xf32>
    %279 = math.tanh %278 : vector<2x128xf32>
    %280 = arith.mulf %275, %279 : vector<2x128xf32>
    %281 = arith.index_cast %c7_i32 : i32 to index
    %c0_82 = arith.constant 0 : index
    %c0_83 = arith.constant 0 : index
    %282 = vector.load %arg4[%281, %c0_82, %c0_83] : memref<8x2x128xf32, #tpu.memory_space<vmem>>, vector<1x2x128xf32>
    %283 = vector.shape_cast %282 : vector<1x2x128xf32> to vector<2x128xf32>
    %284 = vector.shape_cast %280 : vector<2x128xf32> to vector<1x2x128xf32>
    tpu.vector_store %arg4[%281, %c0_82, %c0_83], %284 {strides = array<i32>} : memref<8x2x128xf32, #tpu.memory_space<vmem>>, vector<1x2x128xf32>,
    %c8_i32 = arith.constant 8 : i32
    %c0_84 = arith.constant 0 : index
    %c0_85 = arith.constant 0 : index
    %285 = vector.load %arg7[%c0_84, %c0_85] : memref<2x128xf32, #tpu.memory_space<vmem>>, vector<2x128xf32>
    tpu.vector_store %arg7[%c0_84, %c0_85], %280 {strides = array<i32>} : memref<2x128xf32, #tpu.memory_space<vmem>>, vector<2x128xf32>,
    %c0_86 = arith.constant 0 : index
    %c0_87 = arith.constant 0 : index
    %286 = vector.load %arg8[%c0_86, %c0_87] : memref<2x128xf32, #tpu.memory_space<vmem>>, vector<2x128xf32>
    tpu.vector_store %arg8[%c0_86, %c0_87], %278 {strides = array<i32>} : memref<2x128xf32, #tpu.memory_space<vmem>>, vector<2x128xf32>,
    %c0_i32_88 = arith.constant 0 : i32
    %287 = arith.cmpi eq, %arg1, %c0_i32_88 : i32
    %288 = arith.extui %287 : i1 to i32
    %c0_i32_89 = arith.constant 0 : i32
    %289 = arith.cmpi ne, %288, %c0_i32_89 : i32
    scf.if %289 {
      %c0_90 = arith.constant 0 : index
      %c0_91 = arith.constant 0 : index
      %290 = vector.load %arg5[%c0_90, %c0_91] : memref<2x128xf32, #tpu.memory_space<vmem>>, vector<2x128xf32>
      tpu.vector_store %arg5[%c0_90, %c0_91], %280 {strides = array<i32>} : memref<2x128xf32, #tpu.memory_space<vmem>>, vector<2x128xf32>,
      %c0_92 = arith.constant 0 : index
      %c0_93 = arith.constant 0 : index
      %291 = vector.load %arg6[%c0_92, %c0_93] : memref<2x128xf32, #tpu.memory_space<vmem>>, vector<2x128xf32>
      tpu.vector_store %arg6[%c0_92, %c0_93], %278 {strides = array<i32>} : memref<2x128xf32, #tpu.memory_space<vmem>>, vector<2x128xf32>,
    } else {
    }
    return
  }
  func.func @transform_0(%arg0: i32, %arg1: i32) -> (i32, i32, i32) {
    %c0_i32 = arith.constant 0 : i32
    %c0_i32_0 = arith.constant 0 : i32
    return %arg1, %arg0, %c0_i32 : i32, i32, i32
  }
  func.func @transform_1(%arg0: i32, %arg1: i32) -> (i32, i32) {
    %c0_i32 = arith.constant 0 : i32
    %c0_i32_0 = arith.constant 0 : i32
    %c0_i32_1 = arith.constant 0 : i32
    return %c0_i32, %c0_i32_0 : i32, i32
  }
  func.func @transform_2(%arg0: i32, %arg1: i32) -> (i32, i32, i32) {
    %c0_i32 = arith.constant 0 : i32
    %c0_i32_0 = arith.constant 0 : i32
    return %arg1, %arg0, %c0_i32 : i32, i32, i32
  }
  func.func @transform_3(%arg0: i32, %arg1: i32) -> (i32, i32) {
    %c0_i32 = arith.constant 0 : i32
    %c0_i32_0 = arith.constant 0 : i32
    return %arg0, %c0_i32 : i32, i32
  }
  func.func @transform_4(%arg0: i32, %arg1: i32) -> (i32, i32) {
    %c0_i32 = arith.constant 0 : i32
    %c0_i32_0 = arith.constant 0 : i32
    return %arg0, %c0_i32 : i32, i32
  }
}

module attributes {stable_mosaic.version = 11 : i64} {
  func.func @kernel(%arg0: i32, %arg1: memref<16x128xf32, #tpu.memory_space<vmem>>, %arg2: memref<128x256xbf16, #tpu.memory_space<vmem>>, %arg3: memref<1x256xf32, #tpu.memory_space<vmem>>, %arg4: memref<16x256xf32, #tpu.memory_space<vmem>>) attributes {dimension_semantics = [#tpu.dimension_semantics<parallel>], iteration_bounds = array<i64: 1>, scalar_prefetch = 0 : i64, scratch_operands = 0 : i64, tpu.core_type = #tpu.core_type<tc>, window_params = [{transform_indices = @transform_0, window_bounds = array<i64: 16, 128>}, {pipeline_mode = #tpu.pipeline_mode<synchronous>, transform_indices = @transform_1, window_bounds = array<i64: 128, 256>}, {pipeline_mode = #tpu.pipeline_mode<synchronous>, transform_indices = @transform_2, window_bounds = array<i64: 1, 256>}, {transform_indices = @transform_3, window_bounds = array<i64: 16, 256>}]} {
    %c0 = arith.constant 0 : index
    %c0_0 = arith.constant 0 : index
    %0 = vector.load %arg3[%c0, %c0_0] : memref<1x256xf32, #tpu.memory_space<vmem>>, vector<1x256xf32>
    %c0_1 = arith.constant 0 : index
    %c0_2 = arith.constant 0 : index
    %1 = vector.load %arg1[%c0_1, %c0_2] : memref<16x128xf32, #tpu.memory_space<vmem>>, vector<16x128xf32>
    %2 = arith.truncf %1 : vector<16x128xf32> to vector<16x128xbf16>
    %c0_3 = arith.constant 0 : index
    %c0_4 = arith.constant 0 : index
    %3 = vector.load %arg2[%c0_3, %c0_4] : memref<128x256xbf16, #tpu.memory_space<vmem>>, vector<128x256xbf16>
    %cst = arith.constant dense<0.000000e+00> : vector<16x256xf32>
    %4 = tpu.matmul %2, %3, %cst {dimension_numbers = #tpu.dot_dimension_numbers<[1], [0], [0], [1], [0, 0, 1, 1], [], []>} : vector<16x128xbf16>, vector<128x256xbf16>, vector<16x256xf32> -> vector<16x256xf32>
    %5 = vector.broadcast %0 : vector<1x256xf32> to vector<16x256xf32>
    %6 = arith.addf %5, %4 : vector<16x256xf32>
    %c0_5 = arith.constant 0 : index
    %c0_6 = arith.constant 0 : index
    %7 = vector.load %arg4[%c0_5, %c0_6] : memref<16x256xf32, #tpu.memory_space<vmem>>, vector<16x256xf32>
    tpu.vector_store %arg4[%c0_5, %c0_6], %6 {strides = array<i32>} : memref<16x256xf32, #tpu.memory_space<vmem>>, vector<16x256xf32>,
    return
  }
  func.func @transform_0(%arg0: i32) -> (i32, i32) {
    %c0_i32 = arith.constant 0 : i32
    %c0_i32_0 = arith.constant 0 : i32
    return %arg0, %c0_i32 : i32, i32
  }
  func.func @transform_1(%arg0: i32) -> (i32, i32) {
    %c0_i32 = arith.constant 0 : i32
    %c0_i32_0 = arith.constant 0 : i32
    %c0_i32_1 = arith.constant 0 : i32
    return %c0_i32, %c0_i32_0 : i32, i32
  }
  func.func @transform_2(%arg0: i32) -> (i32, i32) {
    %c0_i32 = arith.constant 0 : i32
    %c0_i32_0 = arith.constant 0 : i32
    %c0_i32_1 = arith.constant 0 : i32
    return %c0_i32, %c0_i32_0 : i32, i32
  }
  func.func @transform_3(%arg0: i32) -> (i32, i32) {
    %c0_i32 = arith.constant 0 : i32
    %c0_i32_0 = arith.constant 0 : i32
    return %arg0, %c0_i32 : i32, i32
  }
}

</mosaic_0001>

<llo_original>
// kernel: tpu_custom_call.1
$region0: #{tpu_custom_call.1}
  #allocation0 [shape = 'u32[]', space=smem, size = 0x4, offset = 0x4, fixed_abs, tag = 'smem constant byte address 0x4 - core index']
  #allocation1 [shape = 'u32[144,128]{1,0:T(1,128)}', space=vmem, size = 0x12000, scoped, tag = 'internal scratch']
  %s0 = inlined_call_operand.hbm [shape: f32[16,128], index: 0, kind: input, shape index: {}]
  %s1 = inlined_call_operand.hbm [shape: f32[8,128], index: 1, kind: input, shape index: {}]
  %s2 = inlined_call_operand.hbm [shape: f32[16,128], index: 2, kind: output, shape index: {}]
  %s3 = sld [smem:[#allocation0]]
  $region49: #{tpu_custom_call.1} parent=0
    _
  %s5 = ssub.s32 1, %s3
  %s6 = scalar_select 0, %s5, %s3
  $region1: #{tpu_custom_call.1} parent=0
    #allocation2 [shape = 'u8[8192]{0}', space=vmem, size = 0x2000, scoped, tag = 'input window, operand 0']
    #allocation3 [shape = 's32[2]{0}', space=sflag, size = 0x8, scoped, tag = 'scoped memory for tpu_custom_call.1']
    #allocation4 [shape = 's32[2]{0}', space=sflag, size = 0x8, scoped, tag = 'scoped memory for tpu_custom_call.1']
    #allocation5 [shape = 'u8[4096]{0}', space=vmem, size = 0x1000, scoped, tag = 'input window, operand 1, single buffered']
    #allocation6 [shape = 's32[1]{0}', space=sflag, size = 0x4, scoped, tag = 'scoped memory for tpu_custom_call.1']
    #allocation7 [shape = 'u8[8192]{0}', space=vmem, size = 0x2000, scoped, tag = 'output window, operand 0']
    %7 = vsyncpa [#allocation3], 0
    %s8 = scalar_lea.sflag [#allocation3], 1
    %9 = vsyncpa %s8, 0
    %10 = vsyncpa [#allocation6], 0
    %11 = vsyncpa [#allocation4], 0
    %s12 = scalar_lea.sflag [#allocation4], 1
    %13 = vsyncpa %s12, 0
    loop: start=0, step=1, limit=4
    $region2: #{tpu_custom_call.1} parent=1 // loop_pre_header
      _
    $region3: #{tpu_custom_call.1} parent=1 // loop_header
      %s15 = sphi 0, %s19
      %p16 = scmp.ge.s32.totalorder %s15, 4
      %s25 = sphi 0, %s27
      %s28 = sphi 0, %s25
      %s29 = sphi 0, %s28
      %s45 = sphi 0, %s29
      %s49 = sphi 0, %s49
      %s51 = sphi 0, %s49
      %s52 = sphi 0, %s51
      %s66 = sphi 0, %s52
      %s72 = sphi 0, %s74
      %s75 = sphi 0, %s72
      %s76 = sphi 0, %s75
      %s92 = sphi 0, %s76
    $region4: #{tpu_custom_call.1} parent=1 // loop_header_branch
      %18 = sbr.rel (%p16) target = $region8
    $region5: #{tpu_custom_call.1} parent=1 // loop_body
      %s20 = ssub.s32 %s15, 1
      %s21 = ssub.s32 %s15, 2
      %s22 = sadd.s32 %s15, 1
      %s23 = ssub.s32 %s15, %s22
      %p24 = scmp.eq.s32.totalorder %s23, 0
      %s26 = sadd.s32 %s25, 1
      %s27 = scalar_select %p24, %s25, %s26
      %p30 = pneg %p24
      %p31 = scmp.eq.s32.totalorder %s15, 1
      %p32 = por %p30, %p31
      %p33 = scmp.ne.s32.totalorder %s25, %s28
      %p34 = scmp.eq.s32.totalorder %s15, 0
      %p35 = por %p33, %p34
      %p36 = scmp.ne.s32.totalorder %s25, %s28
      %p37 = scmp.eq.s32.totalorder %s20, 1
      %p38 = por %p36, %p37
      %p39 = scmp.ne.s32.totalorder %s28, %s29
      %p40 = scmp.eq.s32.totalorder %s20, 0
      %p41 = por %p39, %p40
      %p42 = scmp.ne.s32.totalorder %s28, %s29
      %p43 = scmp.eq.s32.totalorder %s21, 1
      %p44 = por %p42, %p43
      %p46 = scmp.ne.s32.totalorder %s29, %s45
      %p47 = scmp.eq.s32.totalorder %s21, 0
      %p48 = por %p46, %p47
      %s50 = sadd.s32 %s49, 1
      %p53 = scmp.eq.s32.totalorder %s15, 1
      %p54 = scmp.ne.s32.totalorder %s49, %s51
      %p55 = scmp.eq.s32.totalorder %s15, 0
      %p56 = por %p54, %p55
      %p57 = scmp.ne.s32.totalorder %s49, %s51
      %p58 = scmp.eq.s32.totalorder %s20, 1
      %p59 = por %p57, %p58
      %p60 = scmp.ne.s32.totalorder %s51, %s52
      %p61 = scmp.eq.s32.totalorder %s20, 0
      %p62 = por %p60, %p61
      %p63 = scmp.ne.s32.totalorder %s51, %s52
      %p64 = scmp.eq.s32.totalorder %s21, 1
      %p65 = por %p63, %p64
      %p67 = scmp.ne.s32.totalorder %s52, %s66
      %p68 = scmp.eq.s32.totalorder %s21, 0
      %p69 = por %p67, %p68
      %s70 = ssub.s32 %s15, %s22
      %p71 = scmp.eq.s32.totalorder %s70, 0
      %s73 = sadd.s32 %s72, 1
      %s74 = scalar_select %p71, %s72, %s73
      %p77 = pneg %p71
      %p78 = scmp.eq.s32.totalorder %s15, 1
      %p79 = por %p77, %p78
      %p80 = scmp.ne.s32.totalorder %s72, %s75
      %p81 = scmp.eq.s32.totalorder %s15, 0
      %p82 = por %p80, %p81
      %p83 = scmp.ne.s32.totalorder %s72, %s75
      %p84 = scmp.eq.s32.totalorder %s20, 1
      %p85 = por %p83, %p84
      %p86 = scmp.ne.s32.totalorder %s75, %s76
      %p87 = scmp.eq.s32.totalorder %s20, 0
      %p88 = por %p86, %p87
      %p89 = scmp.ne.s32.totalorder %s75, %s76
      %p90 = scmp.eq.s32.totalorder %s21, 1
      %p91 = por %p89, %p90
      %p93 = scmp.ne.s32.totalorder %s76, %s92
      %p94 = scmp.eq.s32.totalorder %s21, 0
      %p95 = por %p93, %p94
      %p96 = scmp.le.s32.totalorder 1, %s15
      %p97 = scmp.lt.s32.totalorder %s15, 3
      %p98 = pnand %p96, %p97
      %p99 = pneg %p98
      // Predicated region
      $region9: #{tpu_custom_call.1} parent=5 // pred_check
        _
      $region10: #{tpu_custom_call.1} parent=5 // pred_check_branch
        %101 = sbr.rel (%p98) target = $region12
      $region11: #{tpu_custom_call.1} parent=5 // pred_region
        %s102 = ssub.s32 %s15, 1
        // Predicated region
        $region13: #{tpu_custom_call.1} parent=11 // pred_check
          %p103 = pneg %p62
        $region14: #{tpu_custom_call.1} parent=11 // pred_check_branch
          %105 = sbr.rel (%p103) target = $region16
        $region15: #{tpu_custom_call.1} parent=11 // pred_region
          %s107 = ssub.s32 128, 128
          %108 = vsyncadd [#allocation6], %s107
          %s110 = sshll.u32 [#allocation5], 4
          %s111 = int_to_ptr.vmem [resolvable:$true] %s110
          %113 = dma.hbm_to_vmem [thread:$0]  %s1, 128, %s111, [#allocation6]
        $region16: #{tpu_custom_call.1} parent=11 // pred_fallthru
          _
      $region12: #{tpu_custom_call.1} parent=5 // pred_fallthru
        _
      %p114 = scmp.lt.s32.totalorder %s15, 2
      // Predicated region
      $region17: #{tpu_custom_call.1} parent=5 // pred_check
        %p115 = pneg %p114
      $region18: #{tpu_custom_call.1} parent=5 // pred_check_branch
        %117 = sbr.rel (%p115) target = $region20
      $region19: #{tpu_custom_call.1} parent=5 // pred_region
        // Predicated region
        $region21: #{tpu_custom_call.1} parent=19 // pred_check
          %p118 = pneg %p35
        $region22: #{tpu_custom_call.1} parent=19 // pred_check_branch
          %120 = sbr.rel (%p118) target = $region24
        $region23: #{tpu_custom_call.1} parent=19 // pred_region
          %s121 = sand.u32 %s25, 1
          %s122 = scalar_lea.sflag [#allocation3], %s121
          %s123 = sand.u32 %s25, 1
          %s124 = smul.addr %s123, 8
          %s125 = scalar_lea.vmem [#allocation2], %s124
          %s127 = ssub.s32 128, 128
          %128 = vsyncadd %s122, %s127
          %s129 = smul.addr %s15, 128
          %s130 = scalar_lea.hbm %s0, %s129
          %s132 = sshll.u32 %s125, 4
          %s133 = int_to_ptr.vmem [resolvable:$true] %s132
          %135 = dma.hbm_to_vmem [thread:$0]  %s130, 128, %s133, %s122
        $region24: #{tpu_custom_call.1} parent=19 // pred_fallthru
          _
      $region20: #{tpu_custom_call.1} parent=5 // pred_fallthru
        _
      %p136 = scmp.le.s32.totalorder 1, %s15
      %p137 = scmp.lt.s32.totalorder %s15, 3
      %p138 = pnand %p136, %p137
      %p139 = pneg %p138
      // Predicated region
      $region25: #{tpu_custom_call.1} parent=5 // pred_check
        _
      $region26: #{tpu_custom_call.1} parent=5 // pred_check_branch
        %141 = sbr.rel (%p138) target = $region28
      $region27: #{tpu_custom_call.1} parent=5 // pred_region
        %s142 = ssub.s32 %s15, 1
        %s143 = sand.u32 %s28, 1
        %s144 = scalar_lea.sflag [#allocation3], %s143
        %s145 = sand.u32 %s28, 1
        %s146 = smul.addr %s145, 8
        %s147 = scalar_lea.vmem [#allocation2], %s146
        // Predicated region
        $region29: #{tpu_custom_call.1} parent=27 // pred_check
          %p148 = pneg %p41
        $region30: #{tpu_custom_call.1} parent=27 // pred_check_branch
          %150 = sbr.rel (%p148) target = $region32
        $region31: #{tpu_custom_call.1} parent=27 // pred_region
          %151 = dma.done %s144, 128
        $region32: #{tpu_custom_call.1} parent=27 // pred_fallthru
          _
        // Predicated region
        $region33: #{tpu_custom_call.1} parent=27 // pred_check
          %p152 = pneg %p62
        $region34: #{tpu_custom_call.1} parent=27 // pred_check_branch
          %154 = sbr.rel (%p152) target = $region36
        $region35: #{tpu_custom_call.1} parent=27 // pred_region
          %155 = dma.done [#allocation6], 128
        $region36: #{tpu_custom_call.1} parent=27 // pred_fallthru
          _
        %s156 = sand.u32 %s28, 1
        %s157 = scalar_lea.sflag [#allocation3], %s156
        %s158 = sand.u32 %s28, 1
        %s159 = smul.addr %s158, 8
        %s160 = scalar_lea.vmem [#allocation2], %s159
        %p161 = pneg %p41
        %p162 = pneg %p38
        %p163 = pneg %p62
        %p164 = pneg %p59
        %p165 = pneg %p88
        %p166 = pneg %p85
        %s167 = sand.u32 %s75, 1
        %s168 = scalar_lea.sflag [#allocation4], %s167
        %s169 = sand.u32 %s75, 1
        %s170 = smul.addr %s169, 8
        %s171 = scalar_lea.vmem [#allocation7], %s170
        %v172 = vld [vmem:[%s147] sm:$0xff]
        %v173 = vld [vmem:[#allocation5] sm:$0xff]
        %v174 = vadd.f32 %v172, %v173
        %175 = vst [vmem:[%s171] sm:$0xff] %v174
        %s176 = sand.u32 %s75, 1
        %s177 = scalar_lea.sflag [#allocation4], %s176
        %s178 = sand.u32 %s75, 1
        %s179 = smul.addr %s178, 8
        %s180 = scalar_lea.vmem [#allocation7], %s179
        // Predicated region
        $region37: #{tpu_custom_call.1} parent=27 // pred_check
          %p181 = pneg %p85
        $region38: #{tpu_custom_call.1} parent=27 // pred_check_branch
          %183 = sbr.rel (%p181) target = $region40
        $region39: #{tpu_custom_call.1} parent=27 // pred_region
          %s185 = ssub.s32 128, 128
          %186 = vsyncadd %s177, %s185
          %s187 = smul.addr %s20, 128
          %s188 = scalar_lea.hbm %s2, %s187
          %s190 = sshll.u32 %s180, 4
          %s191 = int_to_ptr.vmem [resolvable:$true] %s190
          %193 = dma.vmem_to_hbm [thread:$0]  %s191, 128, %s188, %s177
        $region40: #{tpu_custom_call.1} parent=27 // pred_fallthru
          _
      $region28: #{tpu_custom_call.1} parent=5 // pred_fallthru
        _
      %p194 = scmp.le.s32.totalorder 2, %s15
      // Predicated region
      $region41: #{tpu_custom_call.1} parent=5 // pred_check
        %p195 = pneg %p194
      $region42: #{tpu_custom_call.1} parent=5 // pred_check_branch
        %197 = sbr.rel (%p195) target = $region44
      $region43: #{tpu_custom_call.1} parent=5 // pred_region
        %s198 = ssub.s32 %s15, 2
        // Predicated region
        $region45: #{tpu_custom_call.1} parent=43 // pred_check
          %p199 = pneg %p91
        $region46: #{tpu_custom_call.1} parent=43 // pred_check_branch
          %201 = sbr.rel (%p199) target = $region48
        $region47: #{tpu_custom_call.1} parent=43 // pred_region
          %s202 = sand.u32 %s76, 1
          %s203 = scalar_lea.sflag [#allocation4], %s202
          %s204 = sand.u32 %s76, 1
          %s205 = smul.addr %s204, 8
          %s206 = scalar_lea.vmem [#allocation7], %s205
          %207 = dma.done %s203, 128
        $region48: #{tpu_custom_call.1} parent=43 // pred_fallthru
          _
      $region44: #{tpu_custom_call.1} parent=5 // pred_fallthru
        _
    $region6: #{tpu_custom_call.1} parent=1 // loop_footer
      %s19 = sadd.s32 1, %s15
    $region7: #{tpu_custom_call.1} parent=1 // loop_footer_branch
      %14 = sbr.rel target = $region3
    $region8: #{tpu_custom_call.1} parent=1 // loop_exit
      _
    %208 = vsyncpa [#allocation3], 1
    %s209 = scalar_lea.sflag [#allocation3], 1
    %210 = vsyncpa %s209, 1
    %211 = vsyncpa [#allocation6], 1
    %212 = vsyncpa [#allocation4], 1
    %s213 = scalar_lea.sflag [#allocation4], 1
    %214 = vsyncpa %s213, 1

// kernel: rnn_perception_action_forward.5
$region0: #{rnn_perception_action_forward.5}
  #allocation0 [shape = 'u32[]', space=smem, size = 0x4, offset = 0x4, fixed_abs, tag = 'smem constant byte address 0x4 - core index']
  #allocation1 [shape = 'u32[144,128]{1,0:T(1,128)}', space=vmem, size = 0x12000, scoped, tag = 'internal scratch']
  %s0 = inlined_call_operand.vmem [shape: f32[16,128], index: 0, kind: input, shape index: {}]
  %s1 = inlined_call_operand.vmem [shape: bf16[128,256], index: 1, kind: input, shape index: {}]
  %s2 = inlined_call_operand.vmem [shape: f32[1,256], index: 2, kind: input, shape index: {}]
  %s3 = inlined_call_operand.hbm [shape: f32[16,256], index: 3, kind: output, shape index: {}]
  %s4 = sld [smem:[#allocation0]]
  $region22: #{rnn_perception_action_forward.5} parent=0
    _
  %s6 = ssub.s32 1, %s4
  %s7 = scalar_select 0, %s6, %s4
  $region1: #{rnn_perception_action_forward.5} parent=0
    #allocation2 [shape = 'u8[16384]{0}', space=vmem, size = 0x4000, scoped, tag = 'output window, operand 0, single buffered']
    #allocation3 [shape = 's32[1]{0}', space=sflag, size = 0x4, scoped, tag = 'scoped memory for rnn_perception_action_forward.5']
    %8 = vsyncpa [#allocation3], 0
    // Predicated region
    $region2: #{rnn_perception_action_forward.5} parent=1 // pred_check
      _
    $region3: #{rnn_perception_action_forward.5} parent=1 // pred_check_branch
      %10 = sbr.rel (0) target = $region5
    $region4: #{rnn_perception_action_forward.5} parent=1 // pred_region
      _
    $region5: #{rnn_perception_action_forward.5} parent=1 // pred_fallthru
      _
    // Predicated region
    $region6: #{rnn_perception_action_forward.5} parent=1 // pred_check
      _
    $region7: #{rnn_perception_action_forward.5} parent=1 // pred_check_branch
      %12 = sbr.rel (0) target = $region9
    $region8: #{rnn_perception_action_forward.5} parent=1 // pred_region
      _
    $region9: #{rnn_perception_action_forward.5} parent=1 // pred_fallthru
      _
    // Predicated region
    $region10: #{rnn_perception_action_forward.5} parent=1 // pred_check
      _
    $region11: #{rnn_perception_action_forward.5} parent=1 // pred_check_branch
      %14 = sbr.rel (0) target = $region13
    $region12: #{rnn_perception_action_forward.5} parent=1 // pred_region
      _
    $region13: #{rnn_perception_action_forward.5} parent=1 // pred_fallthru
      _
    %v16 = vld [vmem:[%s2] sm:$0x3]
    %v17 = vld [vmem:[%s0] sm:$0xff]
    %v18 = vld [vmem:[%s0 + $0x8] sm:$0xff]
    %v19 = vpack.c.bf16 %v18, %v17
    %v20 = vld [vmem:[%s1] sm:$0xff]
    %v21 = vld [vmem:[%s1 + $0x8] sm:$0xff]
    %v22 = vld [vmem:[%s1 + $0x10] sm:$0xff]
    %v23 = vld [vmem:[%s1 + $0x18] sm:$0xff]
    %v24 = vld [vmem:[%s1 + $0x20] sm:$0xff]
    %v25 = vld [vmem:[%s1 + $0x28] sm:$0xff]
    %v26 = vld [vmem:[%s1 + $0x30] sm:$0xff]
    %v27 = vld [vmem:[%s1 + $0x38] sm:$0xff]
    %v28 = vld [vmem:[%s1 + $0x40] sm:$0xff]
    %v29 = vld [vmem:[%s1 + $0x48] sm:$0xff]
    %v30 = vld [vmem:[%s1 + $0x50] sm:$0xff]
    %v31 = vld [vmem:[%s1 + $0x58] sm:$0xff]
    %v32 = vld [vmem:[%s1 + $0x60] sm:$0xff]
    %v33 = vld [vmem:[%s1 + $0x68] sm:$0xff]
    %v34 = vld [vmem:[%s1 + $0x70] sm:$0xff]
    %v35 = vld [vmem:[%s1 + $0x78] sm:$0xff]
    %v52 = vunpack.c.l.b16 %v20
    %v53 = vunpack.c.h.b16 %v20
    %v54 = vunpack.c.l.b16 %v21
    %v55 = vunpack.c.h.b16 %v21
    %v56 = vunpack.c.l.b16 %v22
    %v57 = vunpack.c.h.b16 %v22
    %v58 = vunpack.c.l.b16 %v23
    %v59 = vunpack.c.h.b16 %v23
    %v60 = vunpack.c.l.b16 %v24
    %v61 = vunpack.c.h.b16 %v24
    %v62 = vunpack.c.l.b16 %v25
    %v63 = vunpack.c.h.b16 %v25
    %v64 = vunpack.c.l.b16 %v26
    %v65 = vunpack.c.h.b16 %v26
    %v66 = vunpack.c.l.b16 %v27
    %v67 = vunpack.c.h.b16 %v27
    %v68 = vunpack.c.l.b16 %v28
    %v69 = vunpack.c.h.b16 %v28
    %v70 = vunpack.c.l.b16 %v29
    %v71 = vunpack.c.h.b16 %v29
    %v72 = vunpack.c.l.b16 %v30
    %v73 = vunpack.c.h.b16 %v30
    %v74 = vunpack.c.l.b16 %v31
    %v75 = vunpack.c.h.b16 %v31
    %v76 = vunpack.c.l.b16 %v32
    %v77 = vunpack.c.h.b16 %v32
    %v78 = vunpack.c.l.b16 %v33
    %v79 = vunpack.c.h.b16 %v33
    %v80 = vunpack.c.l.b16 %v34
    %v81 = vunpack.c.h.b16 %v34
    %v82 = vunpack.c.l.b16 %v35
    %v83 = vunpack.c.h.b16 %v35
    %v84 = vpack.c.b16 %v54, %v52
    %v85 = vpack.c.b16 %v55, %v53
    %v86 = vpack.c.b16 %v58, %v56
    %v87 = vpack.c.b16 %v59, %v57
    %v88 = vpack.c.b16 %v62, %v60
    %v89 = vpack.c.b16 %v63, %v61
    %v90 = vpack.c.b16 %v66, %v64
    %v91 = vpack.c.b16 %v67, %v65
    %v92 = vpack.c.b16 %v70, %v68
    %v93 = vpack.c.b16 %v71, %v69
    %v94 = vpack.c.b16 %v74, %v72
    %v95 = vpack.c.b16 %v75, %v73
    %v96 = vpack.c.b16 %v78, %v76
    %v97 = vpack.c.b16 %v79, %v77
    %v98 = vpack.c.b16 %v82, %v80
    %v99 = vpack.c.b16 %v83, %v81
    %116 = vmatprep.subr.bf16.mxu0 %v85
    %117 = vmatpush1.bf16.msra.mxu0 %v84
    %118 = vmatprep.subr.bf16.mxu0 %v87
    %119 = vmatpush1.bf16.msra.mxu0 %v86
    %120 = vmatprep.subr.bf16.mxu0 %v89
    %121 = vmatpush1.bf16.msra.mxu0 %v88
    %122 = vmatprep.subr.bf16.mxu0 %v91
    %123 = vmatpush1.bf16.msra.mxu0 %v90
    %124 = vmatprep.subr.bf16.mxu0 %v93
    %125 = vmatpush1.bf16.msra.mxu0 %v92
    %126 = vmatprep.subr.bf16.mxu0 %v95
    %127 = vmatpush1.bf16.msra.mxu0 %v94
    %128 = vmatprep.subr.bf16.mxu0 %v97
    %129 = vmatpush1.bf16.msra.mxu0 %v96
    %130 = vmatprep.subr.bf16.mxu0 %v99
    %131 = vmatpush1.bf16.msra.mxu0 %v98
    %132 = vmatprep.subr.bf16.mxu0 0
    %133 = vmatpush1.bf16.msra.mxu0 0
    %134 = vmatprep.subr.bf16.mxu0 0
    %135 = vmatpush1.bf16.msra.mxu0 0
    %136 = vmatprep.subr.bf16.mxu0 0
    %137 = vmatpush1.bf16.msra.mxu0 0
    %138 = vmatprep.subr.bf16.mxu0 0
    %139 = vmatpush1.bf16.msra.mxu0 0
    %140 = vmatprep.subr.bf16.mxu0 0
    %141 = vmatpush1.bf16.msra.mxu0 0
    %142 = vmatprep.subr.bf16.mxu0 0
    %143 = vmatpush1.bf16.msra.mxu0 0
    %144 = vmatprep.subr.bf16.mxu0 0
    %145 = vmatpush1.bf16.msra.mxu0 0
    %146 = vmatprep.subr.bf16.mxu0 0
    %147 = vmatpush1.bf16.msra.mxu0 0
    %148 = vmatprep.mubr.bf16.mxu0 0
    %149 = vmatmul.mubr.bf16.gmra.mrb[0].mxu0 %v19
    %v150 = vpop.f32.mrb[0].mxu0
    %v151 = vadd.f32 0.0, %v150
    %v152 = vpop.f32.mrb[0].mxu0
    %v153 = vadd.f32 0.0, %v152
    %v154 = vpop.f32.mrb[0].mxu0
    %v155 = vadd.f32 0.0, %v154
    %v156 = vpop.f32.mrb[0].mxu0
    %v157 = vadd.f32 0.0, %v156
    %158 = vdwg.mxu0
    %v160 = vlaneseq
    %v161 = vshrl.u32 %v160, 7
    %v162 = vsub.s32 0, %v161
    %v163 = vrot.slane %v16, %v162
    %v164 = vlaneseq
    %v165 = vshrl.u32 %v164, 7
    %v166 = vsub.s32 1, %v165
    %v167 = vrot.slane %v16, %v166
    %v170 = vadd.f32 %v163, %v151
    %v171 = vadd.f32 %v167, %v153
    %v172 = vadd.f32 %v163, %v155
    %v173 = vadd.f32 %v167, %v157
    %174 = vst [vmem:[#allocation2] sm:$0xff] %v170
    %175 = vst [vmem:[#allocation2 + $0x8] sm:$0xff] %v171
    %176 = vst [vmem:[#allocation2 + $0x10] sm:$0xff] %v172
    %177 = vst [vmem:[#allocation2 + $0x18] sm:$0xff] %v173
    // Predicated region
    $region14: #{rnn_perception_action_forward.5} parent=1 // pred_check
      _
    $region15: #{rnn_perception_action_forward.5} parent=1 // pred_check_branch
      %179 = sbr.rel (0) target = $region17
    $region16: #{rnn_perception_action_forward.5} parent=1 // pred_region
      %s181 = ssub.s32 512, 512
      %182 = vsyncadd [#allocation3], %s181
      %s183 = sshll.u32 [#allocation2], 4
      %s184 = int_to_ptr.vmem [resolvable:$true] %s183
      %189 = dma.vmem_to_hbm [thread:$0]  %s184, 512, %s3, [#allocation3], 256, 256, 16
    $region17: #{rnn_perception_action_forward.5} parent=1 // pred_fallthru
      _
    // Predicated region
    $region18: #{rnn_perception_action_forward.5} parent=1 // pred_check
      _
    $region19: #{rnn_perception_action_forward.5} parent=1 // pred_check_branch
      %191 = sbr.rel (0) target = $region21
    $region20: #{rnn_perception_action_forward.5} parent=1 // pred_region
      %192 = dma.done [#allocation3], 512
    $region21: #{rnn_perception_action_forward.5} parent=1 // pred_fallthru
      _
    %193 = vsyncpa [#allocation3], 1

// kernel: rnn_perception_action_forward.3
$region0: #{rnn_perception_action_forward.3}
  #allocation0 [shape = 'u32[]', space=smem, size = 0x4, offset = 0x4, fixed_abs, tag = 'smem constant byte address 0x4 - core index']
  #allocation1 [shape = 'u32[144,128]{1,0:T(1,128)}', space=vmem, size = 0x12000, scoped, tag = 'internal scratch']
  %s0 = inlined_call_operand.hbm [shape: f32[16,256], index: 0, kind: input, shape index: {}]
  %s1 = inlined_call_operand.hbm [shape: f32[16,8], index: 1, kind: input, shape index: {}]
  %s2 = inlined_call_operand.hbm [shape: bf16[256,512], index: 2, kind: input, shape index: {}]
  %s3 = inlined_call_operand.vmem [shape: bf16[8,512], index: 3, kind: input, shape index: {}]
  %s4 = inlined_call_operand.hbm [shape: f32[1,512], index: 4, kind: input, shape index: {}]
  %s5 = inlined_call_operand.vmem [shape: f32[16,512], index: 5, kind: output, shape index: {}]
  %s6 = sld [smem:[#allocation0]]
  $region46: #{rnn_perception_action_forward.3} parent=0
    _
  %s8 = ssub.s32 1, %s6
  %s9 = scalar_select 0, %s8, %s6
  $region1: #{rnn_perception_action_forward.3} parent=0
    #allocation2 [shape = 'u8[16384]{0}', space=vmem, size = 0x4000, scoped, tag = 'input window, operand 0, single buffered']
    #allocation3 [shape = 's32[1]{0}', space=sflag, size = 0x4, scoped, tag = 'scoped memory for rnn_perception_action_forward.3']
    #allocation4 [shape = 'u8[8192]{0}', space=vmem, size = 0x2000, scoped, tag = 'input window, operand 1, single buffered']
    #allocation5 [shape = 's32[1]{0}', space=sflag, size = 0x4, scoped, tag = 'scoped memory for rnn_perception_action_forward.3']
    #allocation6 [shape = 'u8[262144]{0}', space=vmem, size = 0x40000, scoped, tag = 'input window, operand 2, single buffered']
    #allocation7 [shape = 'u8[2048]{0}', space=vmem, size = 0x800, scoped, tag = 'input window, operand 4, single buffered']
    #allocation8 [shape = 's32[1]{0}', space=sflag, size = 0x4, scoped, tag = 'scoped memory for rnn_perception_action_forward.3']
    %10 = vsyncpa [#allocation3], 0
    %11 = vsyncpa [#allocation5], 0
    %12 = vsyncpa [#allocation8], 0
    // Predicated region
    $region2: #{rnn_perception_action_forward.3} parent=1 // pred_check
      _
    $region3: #{rnn_perception_action_forward.3} parent=1 // pred_check_branch
      %14 = sbr.rel (0) target = $region5
    $region4: #{rnn_perception_action_forward.3} parent=1 // pred_region
      %s16 = ssub.s32 512, 512
      %17 = vsyncadd [#allocation3], %s16
      %s18 = sshll.u32 [#allocation2], 4
      %s19 = int_to_ptr.vmem [resolvable:$true] %s18
      %24 = dma.hbm_to_vmem [thread:$0]  %s0, 512, %s19, [#allocation3], 256, 256, 16
    $region5: #{rnn_perception_action_forward.3} parent=1 // pred_fallthru
      _
    // Predicated region
    $region6: #{rnn_perception_action_forward.3} parent=1 // pred_check
      _
    $region7: #{rnn_perception_action_forward.3} parent=1 // pred_check_branch
      %26 = sbr.rel (0) target = $region9
    $region8: #{rnn_perception_action_forward.3} parent=1 // pred_region
      %s28 = ssub.s32 256, 256
      %29 = vsyncadd [#allocation5], %s28
      %s30 = sshll.u32 [#allocation4], 4
      %s31 = int_to_ptr.vmem [resolvable:$true] %s30
      %36 = dma.hbm_to_vmem [thread:$0]  %s1, 256, %s31, [#allocation5], 128, 128, 8
    $region9: #{rnn_perception_action_forward.3} parent=1 // pred_fallthru
      _
    // Predicated region
    $region10: #{rnn_perception_action_forward.3} parent=1 // pred_check
      _
    $region11: #{rnn_perception_action_forward.3} parent=1 // pred_check_branch
      %38 = sbr.rel (0) target = $region13
    $region12: #{rnn_perception_action_forward.3} parent=1 // pred_region
      %s40 = ssub.s32 8192, 8192
      %41 = vsyncadd [#allocation5], %s40
      %s42 = sshll.u32 [#allocation6], 4
      %s43 = int_to_ptr.vmem [resolvable:$true] %s42
      %48 = dma.hbm_to_vmem [thread:$0]  %s2, 8192, %s43, [#allocation5], 256, 256, 16
    $region13: #{rnn_perception_action_forward.3} parent=1 // pred_fallthru
      _
    // Predicated region
    $region14: #{rnn_perception_action_forward.3} parent=1 // pred_check
      _
    $region15: #{rnn_perception_action_forward.3} parent=1 // pred_check_branch
      %50 = sbr.rel (0) target = $region17
    $region16: #{rnn_perception_action_forward.3} parent=1 // pred_region
      _
    $region17: #{rnn_perception_action_forward.3} parent=1 // pred_fallthru
      _
    // Predicated region
    $region18: #{rnn_perception_action_forward.3} parent=1 // pred_check
      _
    $region19: #{rnn_perception_action_forward.3} parent=1 // pred_check_branch
      %52 = sbr.rel (0) target = $region21
    $region20: #{rnn_perception_action_forward.3} parent=1 // pred_region
      %s54 = ssub.s32 64, 64
      %55 = vsyncadd [#allocation8], %s54
      %s57 = sshll.u32 [#allocation7], 4
      %s58 = int_to_ptr.vmem [resolvable:$true] %s57
      %60 = dma.hbm_to_vmem [thread:$0]  %s4, 64, %s58, [#allocation8]
    $region21: #{rnn_perception_action_forward.3} parent=1 // pred_fallthru
      _
    // Predicated region
    $region22: #{rnn_perception_action_forward.3} parent=1 // pred_check
      _
    $region23: #{rnn_perception_action_forward.3} parent=1 // pred_check_branch
      %62 = sbr.rel (0) target = $region25
    $region24: #{rnn_perception_action_forward.3} parent=1 // pred_region
      %63 = dma.done [#allocation3], 512
    $region25: #{rnn_perception_action_forward.3} parent=1 // pred_fallthru
      _
    // Predicated region
    $region26: #{rnn_perception_action_forward.3} parent=1 // pred_check
      _
    $region27: #{rnn_perception_action_forward.3} parent=1 // pred_check_branch
      %65 = sbr.rel (0) target = $region29
    $region28: #{rnn_perception_action_forward.3} parent=1 // pred_region
      %66 = dma.done [#allocation5], 256
    $region29: #{rnn_perception_action_forward.3} parent=1 // pred_fallthru
      _
    // Predicated region
    $region30: #{rnn_perception_action_forward.3} parent=1 // pred_check
      _
    $region31: #{rnn_perception_action_forward.3} parent=1 // pred_check_branch
      %68 = sbr.rel (0) target = $region33
    $region32: #{rnn_perception_action_forward.3} parent=1 // pred_region
      %69 = dma.done [#allocation5], 8192
    $region33: #{rnn_perception_action_forward.3} parent=1 // pred_fallthru
      _
    // Predicated region
    $region34: #{rnn_perception_action_forward.3} parent=1 // pred_check
      _
    $region35: #{rnn_perception_action_forward.3} parent=1 // pred_check_branch
      %71 = sbr.rel (0) target = $region37
    $region36: #{rnn_perception_action_forward.3} parent=1 // pred_region
      %72 = dma.done [#allocation8], 64
    $region37: #{rnn_perception_action_forward.3} parent=1 // pred_fallthru
      _
    %v74 = vld [vmem:[#allocation7] sm:$0xf]
    %v75 = vld [vmem:[#allocation2] sm:$0xff]
    %v76 = vld [vmem:[#allocation2 + $0x8] sm:$0xff]
    %v77 = vld [vmem:[#allocation2 + $0x10] sm:$0xff]
    %v78 = vld [vmem:[#allocation2 + $0x18] sm:$0xff]
    %v79 = vpack.c.bf16 %v77, %v75
    %v80 = vpack.c.bf16 %v78, %v76
    %v81 = vld [vmem:[#allocation6] sm:$0xff]
    %v82 = vld [vmem:[#allocation6 + $0x8] sm:$0xff]
    %v83 = vld [vmem:[#allocation6 + $0x10] sm:$0xff]
    %v84 = vld [vmem:[#allocation6 + $0x18] sm:$0xff]
    %v85 = vld [vmem:[#allocation6 + $0x20] sm:$0xff]
    %v86 = vld [vmem:[#allocation6 + $0x28] sm:$0xff]
    %v87 = vld [vmem:[#allocation6 + $0x30] sm:$0xff]
    %v88 = vld [vmem:[#allocation6 + $0x38] sm:$0xff]
    %v89 = vld [vmem:[#allocation6 + $0x40] sm:$0xff]
    %v90 = vld [vmem:[#allocation6 + $0x48] sm:$0xff]
    %v91 = vld [vmem:[#allocation6 + $0x50] sm:$0xff]
    %v92 = vld [vmem:[#allocation6 + $0x58] sm:$0xff]
    %v93 = vld [vmem:[#allocation6 + $0x60] sm:$0xff]
    %v94 = vld [vmem:[#allocation6 + $0x68] sm:$0xff]
    %v95 = vld [vmem:[#allocation6 + $0x70] sm:$0xff]
    %v96 = vld [vmem:[#allocation6 + $0x78] sm:$0xff]
    %v97 = vld [vmem:[#allocation6 + $0x80] sm:$0xff]
    %v98 = vld [vmem:[#allocation6 + $0x88] sm:$0xff]
    %v99 = vld [vmem:[#allocation6 + $0x90] sm:$0xff]
    %v100 = vld [vmem:[#allocation6 + $0x98] sm:$0xff]
    %v101 = vld [vmem:[#allocation6 + $0xa0] sm:$0xff]
    %v102 = vld [vmem:[#allocation6 + $0xa8] sm:$0xff]
    %v103 = vld [vmem:[#allocation6 + $0xb0] sm:$0xff]
    %v104 = vld [vmem:[#allocation6 + $0xb8] sm:$0xff]
    %v105 = vld [vmem:[#allocation6 + $0xc0] sm:$0xff]
    %v106 = vld [vmem:[#allocation6 + $0xc8] sm:$0xff]
    %v107 = vld [vmem:[#allocation6 + $0xd0] sm:$0xff]
    %v108 = vld [vmem:[#allocation6 + $0xd8] sm:$0xff]
    %v109 = vld [vmem:[#allocation6 + $0xe0] sm:$0xff]
    %v110 = vld [vmem:[#allocation6 + $0xe8] sm:$0xff]
    %v111 = vld [vmem:[#allocation6 + $0xf0] sm:$0xff]
    %v112 = vld [vmem:[#allocation6 + $0xf8] sm:$0xff]
    %v113 = vld [vmem:[#allocation6 + $0x100] sm:$0xff]
    %v114 = vld [vmem:[#allocation6 + $0x108] sm:$0xff]
    %v115 = vld [vmem:[#allocation6 + $0x110] sm:$0xff]
    %v116 = vld [vmem:[#allocation6 + $0x118] sm:$0xff]
    %v117 = vld [vmem:[#allocation6 + $0x120] sm:$0xff]
    %v118 = vld [vmem:[#allocation6 + $0x128] sm:$0xff]
    %v119 = vld [vmem:[#allocation6 + $0x130] sm:$0xff]
    %v120 = vld [vmem:[#allocation6 + $0x138] sm:$0xff]
    %v121 = vld [vmem:[#allocation6 + $0x140] sm:$0xff]
    %v122 = vld [vmem:[#allocation6 + $0x148] sm:$0xff]
    %v123 = vld [vmem:[#allocation6 + $0x150] sm:$0xff]
    %v124 = vld [vmem:[#allocation6 + $0x158] sm:$0xff]
    %v125 = vld [vmem:[#allocation6 + $0x160] sm:$0xff]
    %v126 = vld [vmem:[#allocation6 + $0x168] sm:$0xff]
    %v127 = vld [vmem:[#allocation6 + $0x170] sm:$0xff]
    %v128 = vld [vmem:[#allocation6 + $0x178] sm:$0xff]
    %v129 = vld [vmem:[#allocation6 + $0x180] sm:$0xff]
    %v130 = vld [vmem:[#allocation6 + $0x188] sm:$0xff]
    %v131 = vld [vmem:[#allocation6 + $0x190] sm:$0xff]
    %v132 = vld [vmem:[#allocation6 + $0x198] sm:$0xff]
    %v133 = vld [vmem:[#allocation6 + $0x1a0] sm:$0xff]
    %v134 = vld [vmem:[#allocation6 + $0x1a8] sm:$0xff]
    %v135 = vld [vmem:[#allocation6 + $0x1b0] sm:$0xff]
    %v136 = vld [vmem:[#allocation6 + $0x1b8] sm:$0xff]
    %v137 = vld [vmem:[#allocation6 + $0x1c0] sm:$0xff]
    %v138 = vld [vmem:[#allocation6 + $0x1c8] sm:$0xff]
    %v139 = vld [vmem:[#allocation6 + $0x1d0] sm:$0xff]
    %v140 = vld [vmem:[#allocation6 + $0x1d8] sm:$0xff]
    %v141 = vld [vmem:[#allocation6 + $0x1e0] sm:$0xff]
    %v142 = vld [vmem:[#allocation6 + $0x1e8] sm:$0xff]
    %v143 = vld [vmem:[#allocation6 + $0x1f0] sm:$0xff]
    %v144 = vld [vmem:[#allocation6 + $0x1f8] sm:$0xff]
    %v209 = vunpack.c.l.b16 %v81
    %v210 = vunpack.c.h.b16 %v81
    %v211 = vunpack.c.l.b16 %v82
    %v212 = vunpack.c.h.b16 %v82
    %v213 = vunpack.c.l.b16 %v83
    %v214 = vunpack.c.h.b16 %v83
    %v215 = vunpack.c.l.b16 %v84
    %v216 = vunpack.c.h.b16 %v84
    %v217 = vunpack.c.l.b16 %v85
    %v218 = vunpack.c.h.b16 %v85
    %v219 = vunpack.c.l.b16 %v86
    %v220 = vunpack.c.h.b16 %v86
    %v221 = vunpack.c.l.b16 %v87
    %v222 = vunpack.c.h.b16 %v87
    %v223 = vunpack.c.l.b16 %v88
    %v224 = vunpack.c.h.b16 %v88
    %v225 = vunpack.c.l.b16 %v89
    %v226 = vunpack.c.h.b16 %v89
    %v227 = vunpack.c.l.b16 %v90
    %v228 = vunpack.c.h.b16 %v90
    %v229 = vunpack.c.l.b16 %v91
    %v230 = vunpack.c.h.b16 %v91
    %v231 = vunpack.c.l.b16 %v92
    %v232 = vunpack.c.h.b16 %v92
    %v233 = vunpack.c.l.b16 %v93
    %v234 = vunpack.c.h.b16 %v93
    %v235 = vunpack.c.l.b16 %v94
    %v236 = vunpack.c.h.b16 %v94
    %v237 = vunpack.c.l.b16 %v95
    %v238 = vunpack.c.h.b16 %v95
    %v239 = vunpack.c.l.b16 %v96
    %v240 = vunpack.c.h.b16 %v96
    %v241 = vunpack.c.l.b16 %v97
    %v242 = vunpack.c.h.b16 %v97
    %v243 = vunpack.c.l.b16 %v98
    %v244 = vunpack.c.h.b16 %v98
    %v245 = vunpack.c.l.b16 %v99
    %v246 = vunpack.c.h.b16 %v99
    %v247 = vunpack.c.l.b16 %v100
    %v248 = vunpack.c.h.b16 %v100
    %v249 = vunpack.c.l.b16 %v101
    %v250 = vunpack.c.h.b16 %v101
    %v251 = vunpack.c.l.b16 %v102
    %v252 = vunpack.c.h.b16 %v102
    %v253 = vunpack.c.l.b16 %v103
    %v254 = vunpack.c.h.b16 %v103
    %v255 = vunpack.c.l.b16 %v104
    %v256 = vunpack.c.h.b16 %v104
    %v257 = vunpack.c.l.b16 %v105
    %v258 = vunpack.c.h.b16 %v105
    %v259 = vunpack.c.l.b16 %v106
    %v260 = vunpack.c.h.b16 %v106
    %v261 = vunpack.c.l.b16 %v107
    %v262 = vunpack.c.h.b16 %v107
    %v263 = vunpack.c.l.b16 %v108
    %v264 = vunpack.c.h.b16 %v108
    %v265 = vunpack.c.l.b16 %v109
    %v266 = vunpack.c.h.b16 %v109
    %v267 = vunpack.c.l.b16 %v110
    %v268 = vunpack.c.h.b16 %v110
    %v269 = vunpack.c.l.b16 %v111
    %v270 = vunpack.c.h.b16 %v111
    %v271 = vunpack.c.l.b16 %v112
    %v272 = vunpack.c.h.b16 %v112
    %v273 = vunpack.c.l.b16 %v113
    %v274 = vunpack.c.h.b16 %v113
    %v275 = vunpack.c.l.b16 %v114
    %v276 = vunpack.c.h.b16 %v114
    %v277 = vunpack.c.l.b16 %v115
    %v278 = vunpack.c.h.b16 %v115
    %v279 = vunpack.c.l.b16 %v116
    %v280 = vunpack.c.h.b16 %v116
    %v281 = vunpack.c.l.b16 %v117
    %v282 = vunpack.c.h.b16 %v117
    %v283 = vunpack.c.l.b16 %v118
    %v284 = vunpack.c.h.b16 %v118
    %v285 = vunpack.c.l.b16 %v119
    %v286 = vunpack.c.h.b16 %v119
    %v287 = vunpack.c.l.b16 %v120
    %v288 = vunpack.c.h.b16 %v120
    %v289 = vunpack.c.l.b16 %v121
    %v290 = vunpack.c.h.b16 %v121
    %v291 = vunpack.c.l.b16 %v122
    %v292 = vunpack.c.h.b16 %v122
    %v293 = vunpack.c.l.b16 %v123
    %v294 = vunpack.c.h.b16 %v123
    %v295 = vunpack.c.l.b16 %v124
    %v296 = vunpack.c.h.b16 %v124
    %v297 = vunpack.c.l.b16 %v125
    %v298 = vunpack.c.h.b16 %v125
    %v299 = vunpack.c.l.b16 %v126
    %v300 = vunpack.c.h.b16 %v126
    %v301 = vunpack.c.l.b16 %v127
    %v302 = vunpack.c.h.b16 %v127
    %v303 = vunpack.c.l.b16 %v128
    %v304 = vunpack.c.h.b16 %v128
    %v305 = vunpack.c.l.b16 %v129
    %v306 = vunpack.c.h.b16 %v129
    %v307 = vunpack.c.l.b16 %v130
    %v308 = vunpack.c.h.b16 %v130
    %v309 = vunpack.c.l.b16 %v131
    %v310 = vunpack.c.h.b16 %v131
    %v311 = vunpack.c.l.b16 %v132
    %v312 = vunpack.c.h.b16 %v132
    %v313 = vunpack.c.l.b16 %v133
    %v314 = vunpack.c.h.b16 %v133
    %v315 = vunpack.c.l.b16 %v134
    %v316 = vunpack.c.h.b16 %v134
    %v317 = vunpack.c.l.b16 %v135
    %v318 = vunpack.c.h.b16 %v135
    %v319 = vunpack.c.l.b16 %v136
    %v320 = vunpack.c.h.b16 %v136
    %v321 = vunpack.c.l.b16 %v137
    %v322 = vunpack.c.h.b16 %v137
    %v323 = vunpack.c.l.b16 %v138
    %v324 = vunpack.c.h.b16 %v138
    %v325 = vunpack.c.l.b16 %v139
    %v326 = vunpack.c.h.b16 %v139
    %v327 = vunpack.c.l.b16 %v140
    %v328 = vunpack.c.h.b16 %v140
    %v329 = vunpack.c.l.b16 %v141
    %v330 = vunpack.c.h.b16 %v141
    %v331 = vunpack.c.l.b16 %v142
    %v332 = vunpack.c.h.b16 %v142
    %v333 = vunpack.c.l.b16 %v143
    %v334 = vunpack.c.h.b16 %v143
    %v335 = vunpack.c.l.b16 %v144
    %v336 = vunpack.c.h.b16 %v144
    %v337 = vpack.c.b16 %v213, %v209
    %v338 = vpack.c.b16 %v214, %v210
    %v339 = vpack.c.b16 %v215, %v211
    %v340 = vpack.c.b16 %v216, %v212
    %v341 = vpack.c.b16 %v221, %v217
    %v342 = vpack.c.b16 %v222, %v218
    %v343 = vpack.c.b16 %v223, %v219
    %v344 = vpack.c.b16 %v224, %v220
    %v345 = vpack.c.b16 %v229, %v225
    %v346 = vpack.c.b16 %v230, %v226
    %v347 = vpack.c.b16 %v231, %v227
    %v348 = vpack.c.b16 %v232, %v228
    %v349 = vpack.c.b16 %v237, %v233
    %v350 = vpack.c.b16 %v238, %v234
    %v351 = vpack.c.b16 %v239, %v235
    %v352 = vpack.c.b16 %v240, %v236
    %v353 = vpack.c.b16 %v245, %v241
    %v354 = vpack.c.b16 %v246, %v242
    %v355 = vpack.c.b16 %v247, %v243
    %v356 = vpack.c.b16 %v248, %v244
    %v357 = vpack.c.b16 %v253, %v249
    %v358 = vpack.c.b16 %v254, %v250
    %v359 = vpack.c.b16 %v255, %v251
    %v360 = vpack.c.b16 %v256, %v252
    %v361 = vpack.c.b16 %v261, %v257
    %v362 = vpack.c.b16 %v262, %v258
    %v363 = vpack.c.b16 %v263, %v259
    %v364 = vpack.c.b16 %v264, %v260
    %v365 = vpack.c.b16 %v269, %v265
    %v366 = vpack.c.b16 %v270, %v266
    %v367 = vpack.c.b16 %v271, %v267
    %v368 = vpack.c.b16 %v272, %v268
    %v369 = vpack.c.b16 %v277, %v273
    %v370 = vpack.c.b16 %v278, %v274
    %v371 = vpack.c.b16 %v279, %v275
    %v372 = vpack.c.b16 %v280, %v276
    %v373 = vpack.c.b16 %v285, %v281
    %v374 = vpack.c.b16 %v286, %v282
    %v375 = vpack.c.b16 %v287, %v283
    %v376 = vpack.c.b16 %v288, %v284
    %v377 = vpack.c.b16 %v293, %v289
    %v378 = vpack.c.b16 %v294, %v290
    %v379 = vpack.c.b16 %v295, %v291
    %v380 = vpack.c.b16 %v296, %v292
    %v381 = vpack.c.b16 %v301, %v297
    %v382 = vpack.c.b16 %v302, %v298
    %v383 = vpack.c.b16 %v303, %v299
    %v384 = vpack.c.b16 %v304, %v300
    %v385 = vpack.c.b16 %v309, %v305
    %v386 = vpack.c.b16 %v310, %v306
    %v387 = vpack.c.b16 %v311, %v307
    %v388 = vpack.c.b16 %v312, %v308
    %v389 = vpack.c.b16 %v317, %v313
    %v390 = vpack.c.b16 %v318, %v314
    %v391 = vpack.c.b16 %v319, %v315
    %v392 = vpack.c.b16 %v320, %v316
    %v393 = vpack.c.b16 %v325, %v321
    %v394 = vpack.c.b16 %v326, %v322
    %v395 = vpack.c.b16 %v327, %v323
    %v396 = vpack.c.b16 %v328, %v324
    %v397 = vpack.c.b16 %v333, %v329
    %v398 = vpack.c.b16 %v334, %v330
    %v399 = vpack.c.b16 %v335, %v331
    %v400 = vpack.c.b16 %v336, %v332
    %465 = vmatprep.subr.bf16.mxu0 %v338
    %466 = vmatpush1.bf16.msra.mxu0 %v337
    %467 = vmatprep.subr.bf16.mxu0 %v342
    %468 = vmatpush1.bf16.msra.mxu0 %v341
    %469 = vmatprep.subr.bf16.mxu0 %v346
    %470 = vmatpush1.bf16.msra.mxu0 %v345
    %471 = vmatprep.subr.bf16.mxu0 %v350
    %472 = vmatpush1.bf16.msra.mxu0 %v349
    %473 = vmatprep.subr.bf16.mxu0 %v354
    %474 = vmatpush1.bf16.msra.mxu0 %v353
    %475 = vmatprep.subr.bf16.mxu0 %v358
    %476 = vmatpush1.bf16.msra.mxu0 %v357
    %477 = vmatprep.subr.bf16.mxu0 %v362
    %478 = vmatpush1.bf16.msra.mxu0 %v361
    %479 = vmatprep.subr.bf16.mxu0 %v366
    %480 = vmatpush1.bf16.msra.mxu0 %v365
    %481 = vmatprep.subr.bf16.mxu0 %v370
    %482 = vmatpush1.bf16.msra.mxu0 %v369
    %483 = vmatprep.subr.bf16.mxu0 %v374
    %484 = vmatpush1.bf16.msra.mxu0 %v373
    %485 = vmatprep.subr.bf16.mxu0 %v378
    %486 = vmatpush1.bf16.msra.mxu0 %v377
    %487 = vmatprep.subr.bf16.mxu0 %v382
    %488 = vmatpush1.bf16.msra.mxu0 %v381
    %489 = vmatprep.subr.bf16.mxu0 %v386
    %490 = vmatpush1.bf16.msra.mxu0 %v385
    %491 = vmatprep.subr.bf16.mxu0 %v390
    %492 = vmatpush1.bf16.msra.mxu0 %v389
    %493 = vmatprep.subr.bf16.mxu0 %v394
    %494 = vmatpush1.bf16.msra.mxu0 %v393
    %495 = vmatprep.subr.bf16.mxu0 %v398
    %496 = vmatpush1.bf16.msra.mxu0 %v397
    %497 = vmatprep.mubr.bf16.mxu0 %v80
    %498 = vmatmul.mubr.bf16.gmra.mrb[0].mxu0 %v79
    %v499 = vpop.f32.mrb[0].mxu0
    %v500 = vadd.f32 0.0, %v499
    %v501 = vpop.f32.mrb[0].mxu0
    %v502 = vadd.f32 0.0, %v501
    %v503 = vpop.f32.mrb[0].mxu0
    %v504 = vadd.f32 0.0, %v503
    %v505 = vpop.f32.mrb[0].mxu0
    %v506 = vadd.f32 0.0, %v505
    %507 = vdwg.mxu0
    %508 = vmatprep.subr.bf16.mxu0 %v340
    %509 = vmatpush1.bf16.msra.mxu0 %v339
    %510 = vmatprep.subr.bf16.mxu0 %v344
    %511 = vmatpush1.bf16.msra.mxu0 %v343
    %512 = vmatprep.subr.bf16.mxu0 %v348
    %513 = vmatpush1.bf16.msra.mxu0 %v347
    %514 = vmatprep.subr.bf16.mxu0 %v352
    %515 = vmatpush1.bf16.msra.mxu0 %v351
    %516 = vmatprep.subr.bf16.mxu0 %v356
    %517 = vmatpush1.bf16.msra.mxu0 %v355
    %518 = vmatprep.subr.bf16.mxu0 %v360
    %519 = vmatpush1.bf16.msra.mxu0 %v359
    %520 = vmatprep.subr.bf16.mxu0 %v364
    %521 = vmatpush1.bf16.msra.mxu0 %v363
    %522 = vmatprep.subr.bf16.mxu0 %v368
    %523 = vmatpush1.bf16.msra.mxu0 %v367
    %524 = vmatprep.subr.bf16.mxu0 %v372
    %525 = vmatpush1.bf16.msra.mxu0 %v371
    %526 = vmatprep.subr.bf16.mxu0 %v376
    %527 = vmatpush1.bf16.msra.mxu0 %v375
    %528 = vmatprep.subr.bf16.mxu0 %v380
    %529 = vmatpush1.bf16.msra.mxu0 %v379
    %530 = vmatprep.subr.bf16.mxu0 %v384
    %531 = vmatpush1.bf16.msra.mxu0 %v383
    %532 = vmatprep.subr.bf16.mxu0 %v388
    %533 = vmatpush1.bf16.msra.mxu0 %v387
    %534 = vmatprep.subr.bf16.mxu0 %v392
    %535 = vmatpush1.bf16.msra.mxu0 %v391
    %536 = vmatprep.subr.bf16.mxu0 %v396
    %537 = vmatpush1.bf16.msra.mxu0 %v395
    %538 = vmatprep.subr.bf16.mxu0 %v400
    %539 = vmatpush1.bf16.msra.mxu0 %v399
    %540 = vmatprep.mubr.bf16.mxu0 %v80
    %541 = vmatmul.mubr.bf16.gmra.mrb[0].mxu0 %v79
    %v542 = vpop.f32.mrb[0].mxu0
    %v543 = vadd.f32 0.0, %v542
    %v544 = vpop.f32.mrb[0].mxu0
    %v545 = vadd.f32 0.0, %v544
    %v546 = vpop.f32.mrb[0].mxu0
    %v547 = vadd.f32 0.0, %v546
    %v548 = vpop.f32.mrb[0].mxu0
    %v549 = vadd.f32 0.0, %v548
    %550 = vdwg.mxu0
    %v552 = vlaneseq
    %v553 = vshrl.u32 %v552, 7
    %v554 = vsub.s32 0, %v553
    %v555 = vrot.slane %v74, %v554
    %v556 = vlaneseq
    %v557 = vshrl.u32 %v556, 7
    %v558 = vsub.s32 1, %v557
    %v559 = vrot.slane %v74, %v558
    %v560 = vlaneseq
    %v561 = vshrl.u32 %v560, 7
    %v562 = vsub.s32 2, %v561
    %v563 = vrot.slane %v74, %v562
    %v564 = vlaneseq
    %v565 = vshrl.u32 %v564, 7
    %v566 = vsub.s32 3, %v565
    %v567 = vrot.slane %v74, %v566
    %v572 = vadd.f32 %v555, %v500
    %v573 = vadd.f32 %v559, %v502
    %v574 = vadd.f32 %v563, %v543
    %v575 = vadd.f32 %v567, %v545
    %v576 = vadd.f32 %v555, %v504
    %v577 = vadd.f32 %v559, %v506
    %v578 = vadd.f32 %v563, %v547
    %v579 = vadd.f32 %v567, %v549
    %v580 = vld [vmem:[#allocation4] sm:$0xff]
    %v581 = vld [vmem:[#allocation4 + $0x8] sm:$0xff]
    %v582 = vpack.c.bf16 %v581, %v580
    %v583 = vld [vmem:[%s3] sm:$0xff]
    %v584 = vld [vmem:[%s3 + $0x8] sm:$0xff]
    %v587 = vunpack.c.l.b16 %v583
    %v588 = vunpack.c.h.b16 %v583
    %v589 = vunpack.c.l.b16 %v584
    %v590 = vunpack.c.h.b16 %v584
    %v591 = vpack.c.b16 %v587, %v587
    %v592 = vpack.c.b16 %v588, %v588
    %v593 = vpack.c.b16 %v589, %v589
    %v594 = vpack.c.b16 %v590, %v590
    %vm595 = vcmask 64512
    %v597 = vsel %vm595, %v582, 0
    %vm599 = vcmask 1043456
    %v601 = vsel %vm599, %v591, 0
    %v604 = vsel %vm599, %v592, 0
    %v607 = vsel %vm599, %v593, 0
    %v610 = vsel %vm599, %v594, 0
    %612 = vmatprep.subr.bf16.mxu0 %v604
    %613 = vmatpush1.bf16.msra.mxu0 %v601
    %614 = vmatprep.subr.bf16.mxu0 0
    %615 = vmatpush1.bf16.msra.mxu0 0
    %616 = vmatprep.subr.bf16.mxu0 0
    %617 = vmatpush1.bf16.msra.mxu0 0
    %618 = vmatprep.subr.bf16.mxu0 0
    %619 = vmatpush1.bf16.msra.mxu0 0
    %620 = vmatprep.subr.bf16.mxu0 0
    %621 = vmatpush1.bf16.msra.mxu0 0
    %622 = vmatprep.subr.bf16.mxu0 0
    %623 = vmatpush1.bf16.msra.mxu0 0
    %624 = vmatprep.subr.bf16.mxu0 0
    %625 = vmatpush1.bf16.msra.mxu0 0
    %626 = vmatprep.subr.bf16.mxu0 0
    %627 = vmatpush1.bf16.msra.mxu0 0
    %628 = vmatprep.subr.bf16.mxu0 0
    %629 = vmatpush1.bf16.msra.mxu0 0
    %630 = vmatprep.subr.bf16.mxu0 0
    %631 = vmatpush1.bf16.msra.mxu0 0
    %632 = vmatprep.subr.bf16.mxu0 0
    %633 = vmatpush1.bf16.msra.mxu0 0
    %634 = vmatprep.subr.bf16.mxu0 0
    %635 = vmatpush1.bf16.msra.mxu0 0
    %636 = vmatprep.subr.bf16.mxu0 0
    %637 = vmatpush1.bf16.msra.mxu0 0
    %638 = vmatprep.subr.bf16.mxu0 0
    %639 = vmatpush1.bf16.msra.mxu0 0
    %640 = vmatprep.subr.bf16.mxu0 0
    %641 = vmatpush1.bf16.msra.mxu0 0
    %642 = vmatprep.subr.bf16.mxu0 0
    %643 = vmatpush1.bf16.msra.mxu0 0
    %644 = vmatprep.mubr.bf16.mxu0 0
    %645 = vmatmul.mubr.bf16.gmra.mrb[0].mxu0 %v597
    %v646 = vpop.f32.mrb[0].mxu0
    %v647 = vadd.f32 0.0, %v646
    %v648 = vpop.f32.mrb[0].mxu0
    %v649 = vadd.f32 0.0, %v648
    %v650 = vpop.f32.mrb[0].mxu0
    %v651 = vadd.f32 0.0, %v650
    %v652 = vpop.f32.mrb[0].mxu0
    %v653 = vadd.f32 0.0, %v652
    %654 = vdwg.mxu0
    %655 = vmatprep.subr.bf16.mxu0 %v610
    %656 = vmatpush1.bf16.msra.mxu0 %v607
    %657 = vmatprep.subr.bf16.mxu0 0
    %658 = vmatpush1.bf16.msra.mxu0 0
    %659 = vmatprep.subr.bf16.mxu0 0
    %660 = vmatpush1.bf16.msra.mxu0 0
    %661 = vmatprep.subr.bf16.mxu0 0
    %662 = vmatpush1.bf16.msra.mxu0 0
    %663 = vmatprep.subr.bf16.mxu0 0
    %664 = vmatpush1.bf16.msra.mxu0 0
    %665 = vmatprep.subr.bf16.mxu0 0
    %666 = vmatpush1.bf16.msra.mxu0 0
    %667 = vmatprep.subr.bf16.mxu0 0
    %668 = vmatpush1.bf16.msra.mxu0 0
    %669 = vmatprep.subr.bf16.mxu0 0
    %670 = vmatpush1.bf16.msra.mxu0 0
    %671 = vmatprep.subr.bf16.mxu0 0
    %672 = vmatpush1.bf16.msra.mxu0 0
    %673 = vmatprep.subr.bf16.mxu0 0
    %674 = vmatpush1.bf16.msra.mxu0 0
    %675 = vmatprep.subr.bf16.mxu0 0
    %676 = vmatpush1.bf16.msra.mxu0 0
    %677 = vmatprep.subr.bf16.mxu0 0
    %678 = vmatpush1.bf16.msra.mxu0 0
    %679 = vmatprep.subr.bf16.mxu0 0
    %680 = vmatpush1.bf16.msra.mxu0 0
    %681 = vmatprep.subr.bf16.mxu0 0
    %682 = vmatpush1.bf16.msra.mxu0 0
    %683 = vmatprep.subr.bf16.mxu0 0
    %684 = vmatpush1.bf16.msra.mxu0 0
    %685 = vmatprep.subr.bf16.mxu0 0
    %686 = vmatpush1.bf16.msra.mxu0 0
    %687 = vmatprep.mubr.bf16.mxu0 0
    %688 = vmatmul.mubr.bf16.gmra.mrb[0].mxu0 %v597
    %v689 = vpop.f32.mrb[0].mxu0
    %v690 = vadd.f32 0.0, %v689
    %v691 = vpop.f32.mrb[0].mxu0
    %v692 = vadd.f32 0.0, %v691
    %v693 = vpop.f32.mrb[0].mxu0
    %v694 = vadd.f32 0.0, %v693
    %v695 = vpop.f32.mrb[0].mxu0
    %v696 = vadd.f32 0.0, %v695
    %697 = vdwg.mxu0
    %v698 = vadd.f32 %v572, %v647
    %v699 = vadd.f32 %v573, %v649
    %v700 = vadd.f32 %v574, %v690
    %v701 = vadd.f32 %v575, %v692
    %v702 = vadd.f32 %v576, %v651
    %v703 = vadd.f32 %v577, %v653
    %v704 = vadd.f32 %v578, %v694
    %v705 = vadd.f32 %v579, %v696
    %706 = vst [vmem:[%s5] sm:$0xff] %v698
    %707 = vst [vmem:[%s5 + $0x8] sm:$0xff] %v699
    %708 = vst [vmem:[%s5 + $0x10] sm:$0xff] %v700
    %709 = vst [vmem:[%s5 + $0x18] sm:$0xff] %v701
    %710 = vst [vmem:[%s5 + $0x20] sm:$0xff] %v702
    %711 = vst [vmem:[%s5 + $0x28] sm:$0xff] %v703
    %712 = vst [vmem:[%s5 + $0x30] sm:$0xff] %v704
    %713 = vst [vmem:[%s5 + $0x38] sm:$0xff] %v705
    // Predicated region
    $region38: #{rnn_perception_action_forward.3} parent=1 // pred_check
      _
    $region39: #{rnn_perception_action_forward.3} parent=1 // pred_check_branch
      %715 = sbr.rel (0) target = $region41
    $region40: #{rnn_perception_action_forward.3} parent=1 // pred_region
      _
    $region41: #{rnn_perception_action_forward.3} parent=1 // pred_fallthru
      _
    // Predicated region
    $region42: #{rnn_perception_action_forward.3} parent=1 // pred_check
      _
    $region43: #{rnn_perception_action_forward.3} parent=1 // pred_check_branch
      %717 = sbr.rel (0) target = $region45
    $region44: #{rnn_perception_action_forward.3} parent=1 // pred_region
      _
    $region45: #{rnn_perception_action_forward.3} parent=1 // pred_fallthru
      _
    %718 = vsyncpa [#allocation3], 1
    %719 = vsyncpa [#allocation5], 1
    %720 = vsyncpa [#allocation8], 1

// kernel: rnn_perception_action_forward.4
$region0: #{rnn_perception_action_forward.4}
  #allocation0 [shape = 'u32[]', space=smem, size = 0x4, offset = 0x4, fixed_abs, tag = 'smem constant byte address 0x4 - core index']
  #allocation1 [shape = 'u32[144,128]{1,0:T(1,128)}', space=vmem, size = 0x12000, scoped, tag = 'internal scratch']
  #allocation2 [shape = 'f32[2,128]{1,0:T(2,128)}', space=vmem, size = 0x400, scoped, tag = 'scratch operand']
  #allocation3 [shape = 'f32[2,128]{1,0:T(2,128)}', space=vmem, size = 0x400, scoped, tag = 'scratch operand']
  %s0 = inlined_call_operand.vmem [shape: f32[8,2,512], index: 0, kind: input, shape index: {}]
  %s1 = inlined_call_operand.vmem [shape: f32[128,512], index: 1, kind: input, shape index: {}]
  %s2 = inlined_call_operand.vmem [shape: f32[8,2,128], index: 2, kind: output, shape index: {0}]
  %s3 = inlined_call_operand.vmem [shape: f32[2,128], index: 3, kind: output, shape index: {1}]
  %s4 = inlined_call_operand.vmem [shape: f32[2,128], index: 4, kind: output, shape index: {2}]
  %5 = xla_tuple %s2, %s3, %s4
  %s6 = sld [smem:[#allocation0]]
  $region42: #{rnn_perception_action_forward.4} parent=0
    _
  %s8 = ssub.s32 1, %s6
  %s9 = scalar_select 0, %s8, %s6
  // Predicated region
  $region2: #{rnn_perception_action_forward.4} parent=0 // pred_check
    _
  $region3: #{rnn_perception_action_forward.4} parent=0 // pred_check_branch
    %11 = sbr.rel (0) target = $region5
  $region4: #{rnn_perception_action_forward.4} parent=0 // pred_region
    _
  $region5: #{rnn_perception_action_forward.4} parent=0 // pred_fallthru
    _
  // Predicated region
  $region6: #{rnn_perception_action_forward.4} parent=0 // pred_check
    _
  $region7: #{rnn_perception_action_forward.4} parent=0 // pred_check_branch
    %13 = sbr.rel (0) target = $region9
  $region8: #{rnn_perception_action_forward.4} parent=0 // pred_region
    _
  $region9: #{rnn_perception_action_forward.4} parent=0 // pred_fallthru
    _
  %p14 = scmp.eq.s32.totalorder 0, 0
  // Predicated region
  $region10: #{rnn_perception_action_forward.4} parent=0 // pred_check
    %p15 = pneg %p14
  $region11: #{rnn_perception_action_forward.4} parent=0 // pred_check_branch
    %17 = sbr.rel (%p15) target = $region13
  $region12: #{rnn_perception_action_forward.4} parent=0 // pred_region
    %18 = vst [vmem:[#allocation2] sm:$0x3] 0.0
    %19 = vst [vmem:[#allocation3] sm:$0x3] 0.0
  $region13: #{rnn_perception_action_forward.4} parent=0 // pred_fallthru
    _
  %v20 = vld [vmem:[#allocation2] sm:$0x3]
  %v21 = vld [vmem:[#allocation3] sm:$0x3]
  %v22 = vld [vmem:[%s0] sm:$0xff]
  %v23 = vld [vmem:[%s1] sm:$0xff]
  %v24 = vld [vmem:[%s1 + $0x8] sm:$0xff]
  %v25 = vld [vmem:[%s1 + $0x10] sm:$0xff]
  %v26 = vld [vmem:[%s1 + $0x18] sm:$0xff]
  %v27 = vld [vmem:[%s1 + $0x20] sm:$0xff]
  %v28 = vld [vmem:[%s1 + $0x28] sm:$0xff]
  %v29 = vld [vmem:[%s1 + $0x30] sm:$0xff]
  %v30 = vld [vmem:[%s1 + $0x38] sm:$0xff]
  %v31 = vld [vmem:[%s1 + $0x40] sm:$0xff]
  %v32 = vld [vmem:[%s1 + $0x48] sm:$0xff]
  %v33 = vld [vmem:[%s1 + $0x50] sm:$0xff]
  %v34 = vld [vmem:[%s1 + $0x58] sm:$0xff]
  %v35 = vld [vmem:[%s1 + $0x60] sm:$0xff]
  %v36 = vld [vmem:[%s1 + $0x68] sm:$0xff]
  %v37 = vld [vmem:[%s1 + $0x70] sm:$0xff]
  %v38 = vld [vmem:[%s1 + $0x78] sm:$0xff]
  %v39 = vld [vmem:[%s1 + $0x80] sm:$0xff]
  %v40 = vld [vmem:[%s1 + $0x88] sm:$0xff]
  %v41 = vld [vmem:[%s1 + $0x90] sm:$0xff]
  %v42 = vld [vmem:[%s1 + $0x98] sm:$0xff]
  %v43 = vld [vmem:[%s1 + $0xa0] sm:$0xff]
  %v44 = vld [vmem:[%s1 + $0xa8] sm:$0xff]
  %v45 = vld [vmem:[%s1 + $0xb0] sm:$0xff]
  %v46 = vld [vmem:[%s1 + $0xb8] sm:$0xff]
  %v47 = vld [vmem:[%s1 + $0xc0] sm:$0xff]
  %v48 = vld [vmem:[%s1 + $0xc8] sm:$0xff]
  %v49 = vld [vmem:[%s1 + $0xd0] sm:$0xff]
  %v50 = vld [vmem:[%s1 + $0xd8] sm:$0xff]
  %v51 = vld [vmem:[%s1 + $0xe0] sm:$0xff]
  %v52 = vld [vmem:[%s1 + $0xe8] sm:$0xff]
  %v53 = vld [vmem:[%s1 + $0xf0] sm:$0xff]
  %v54 = vld [vmem:[%s1 + $0xf8] sm:$0xff]
  %v55 = vld [vmem:[%s1 + $0x100] sm:$0xff]
  %v56 = vld [vmem:[%s1 + $0x108] sm:$0xff]
  %v57 = vld [vmem:[%s1 + $0x110] sm:$0xff]
  %v58 = vld [vmem:[%s1 + $0x118] sm:$0xff]
  %v59 = vld [vmem:[%s1 + $0x120] sm:$0xff]
  %v60 = vld [vmem:[%s1 + $0x128] sm:$0xff]
  %v61 = vld [vmem:[%s1 + $0x130] sm:$0xff]
  %v62 = vld [vmem:[%s1 + $0x138] sm:$0xff]
  %v63 = vld [vmem:[%s1 + $0x140] sm:$0xff]
  %v64 = vld [vmem:[%s1 + $0x148] sm:$0xff]
  %v65 = vld [vmem:[%s1 + $0x150] sm:$0xff]
  %v66 = vld [vmem:[%s1 + $0x158] sm:$0xff]
  %v67 = vld [vmem:[%s1 + $0x160] sm:$0xff]
  %v68 = vld [vmem:[%s1 + $0x168] sm:$0xff]
  %v69 = vld [vmem:[%s1 + $0x170] sm:$0xff]
  %v70 = vld [vmem:[%s1 + $0x178] sm:$0xff]
  %v71 = vld [vmem:[%s1 + $0x180] sm:$0xff]
  %v72 = vld [vmem:[%s1 + $0x188] sm:$0xff]
  %v73 = vld [vmem:[%s1 + $0x190] sm:$0xff]
  %v74 = vld [vmem:[%s1 + $0x198] sm:$0xff]
  %v75 = vld [vmem:[%s1 + $0x1a0] sm:$0xff]
  %v76 = vld [vmem:[%s1 + $0x1a8] sm:$0xff]
  %v77 = vld [vmem:[%s1 + $0x1b0] sm:$0xff]
  %v78 = vld [vmem:[%s1 + $0x1b8] sm:$0xff]
  %v79 = vld [vmem:[%s1 + $0x1c0] sm:$0xff]
  %v80 = vld [vmem:[%s1 + $0x1c8] sm:$0xff]
  %v81 = vld [vmem:[%s1 + $0x1d0] sm:$0xff]
  %v82 = vld [vmem:[%s1 + $0x1d8] sm:$0xff]
  %v83 = vld [vmem:[%s1 + $0x1e0] sm:$0xff]
  %v84 = vld [vmem:[%s1 + $0x1e8] sm:$0xff]
  %v85 = vld [vmem:[%s1 + $0x1f0] sm:$0xff]
  %v86 = vld [vmem:[%s1 + $0x1f8] sm:$0xff]
  %87 = vmatprep.subr.mxu0 %v24
  %88 = vmatpush1.msra.mxu0 %v23
  %89 = vmatprep.subr.mxu0 %v28
  %90 = vmatpush1.msra.mxu0 %v27
  %91 = vmatprep.subr.mxu0 %v32
  %92 = vmatpush1.msra.mxu0 %v31
  %93 = vmatprep.subr.mxu0 %v36
  %94 = vmatpush1.msra.mxu0 %v35
  %95 = vmatprep.subr.mxu0 %v40
  %96 = vmatpush1.msra.mxu0 %v39
  %97 = vmatprep.subr.mxu0 %v44
  %98 = vmatpush1.msra.mxu0 %v43
  %99 = vmatprep.subr.mxu0 %v48
  %100 = vmatpush1.msra.mxu0 %v47
  %101 = vmatprep.subr.mxu0 %v52
  %102 = vmatpush1.msra.mxu0 %v51
  %103 = vmatprep.subr.mxu0 %v56
  %104 = vmatpush1.msra.mxu0 %v55
  %105 = vmatprep.subr.mxu0 %v60
  %106 = vmatpush1.msra.mxu0 %v59
  %107 = vmatprep.subr.mxu0 %v64
  %108 = vmatpush1.msra.mxu0 %v63
  %109 = vmatprep.subr.mxu0 %v68
  %110 = vmatpush1.msra.mxu0 %v67
  %111 = vmatprep.subr.mxu0 %v72
  %112 = vmatpush1.msra.mxu0 %v71
  %113 = vmatprep.subr.mxu0 %v76
  %114 = vmatpush1.msra.mxu0 %v75
  %115 = vmatprep.subr.mxu0 %v80
  %116 = vmatpush1.msra.mxu0 %v79
  %117 = vmatprep.subr.mxu0 %v84
  %118 = vmatpush1.msra.mxu0 %v83
  %119 = vmatprep.subr.mxu0 0.0
  %120 = vmatpush1.msra.mxu0 0.0
  %121 = vmatprep.subr.mxu0 0.0
  %122 = vmatpush1.msra.mxu0 0.0
  %123 = vmatprep.subr.mxu0 0.0
  %124 = vmatpush1.msra.mxu0 0.0
  %125 = vmatprep.subr.mxu0 0.0
  %126 = vmatpush1.msra.mxu0 0.0
  %127 = vmatprep.subr.mxu0 0.0
  %128 = vmatpush1.msra.mxu0 0.0
  %129 = vmatprep.subr.mxu0 0.0
  %130 = vmatpush1.msra.mxu0 0.0
  %131 = vmatprep.subr.mxu0 0.0
  %132 = vmatpush1.msra.mxu0 0.0
  %133 = vmatprep.subr.mxu0 0.0
  %134 = vmatpush1.msra.mxu0 0.0
  %135 = vmatprep.subr.mxu0 0.0
  %136 = vmatpush1.msra.mxu0 0.0
  %137 = vmatprep.subr.mxu0 0.0
  %138 = vmatpush1.msra.mxu0 0.0
  %139 = vmatprep.subr.mxu0 0.0
  %140 = vmatpush1.msra.mxu0 0.0
  %141 = vmatprep.subr.mxu0 0.0
  %142 = vmatpush1.msra.mxu0 0.0
  %143 = vmatprep.subr.mxu0 0.0
  %144 = vmatpush1.msra.mxu0 0.0
  %145 = vmatprep.subr.mxu0 0.0
  %146 = vmatpush1.msra.mxu0 0.0
  %147 = vmatprep.subr.mxu0 0.0
  %148 = vmatpush1.msra.mxu0 0.0
  %149 = vmatprep.subr.mxu0 0.0
  %150 = vmatpush1.msra.mxu0 0.0
  %151 = vmatprep.mubr.f32.mxu0 0.0
  %152 = vmatmul.mubr.f32.gmra.mrb[0].mxu0 %v20
  %v153 = vpop.f32.mrb[0].mxu0
  %v154 = vadd.f32 0.0, %v153
  %v155 = vpop.f32.mrb[0].mxu0
  %v156 = vadd.f32 0.0, %v155
  %157 = vdwg.mxu0
  %158 = vmatprep.subr.mxu0 %v26
  %159 = vmatpush1.msra.mxu0 %v25
  %160 = vmatprep.subr.mxu0 %v30
  %161 = vmatpush1.msra.mxu0 %v29
  %162 = vmatprep.subr.mxu0 %v34
  %163 = vmatpush1.msra.mxu0 %v33
  %164 = vmatprep.subr.mxu0 %v38
  %165 = vmatpush1.msra.mxu0 %v37
  %166 = vmatprep.subr.mxu0 %v42
  %167 = vmatpush1.msra.mxu0 %v41
  %168 = vmatprep.subr.mxu0 %v46
  %169 = vmatpush1.msra.mxu0 %v45
  %170 = vmatprep.subr.mxu0 %v50
  %171 = vmatpush1.msra.mxu0 %v49
  %172 = vmatprep.subr.mxu0 %v54
  %173 = vmatpush1.msra.mxu0 %v53
  %174 = vmatprep.subr.mxu0 %v58
  %175 = vmatpush1.msra.mxu0 %v57
  %176 = vmatprep.subr.mxu0 %v62
  %177 = vmatpush1.msra.mxu0 %v61
  %178 = vmatprep.subr.mxu0 %v66
  %179 = vmatpush1.msra.mxu0 %v65
  %180 = vmatprep.subr.mxu0 %v70
  %181 = vmatpush1.msra.mxu0 %v69
  %182 = vmatprep.subr.mxu0 %v74
  %183 = vmatpush1.msra.mxu0 %v73
  %184 = vmatprep.subr.mxu0 %v78
  %185 = vmatpush1.msra.mxu0 %v77
  %186 = vmatprep.subr.mxu0 %v82
  %187 = vmatpush1.msra.mxu0 %v81
  %188 = vmatprep.subr.mxu0 %v86
  %189 = vmatpush1.msra.mxu0 %v85
  %190 = vmatprep.subr.mxu0 0.0
  %191 = vmatpush1.msra.mxu0 0.0
  %192 = vmatprep.subr.mxu0 0.0
  %193 = vmatpush1.msra.mxu0 0.0
  %194 = vmatprep.subr.mxu0 0.0
  %195 = vmatpush1.msra.mxu0 0.0
  %196 = vmatprep.subr.mxu0 0.0
  %197 = vmatpush1.msra.mxu0 0.0
  %198 = vmatprep.subr.mxu0 0.0
  %199 = vmatpush1.msra.mxu0 0.0
  %200 = vmatprep.subr.mxu0 0.0
  %201 = vmatpush1.msra.mxu0 0.0
  %202 = vmatprep.subr.mxu0 0.0
  %203 = vmatpush1.msra.mxu0 0.0
  %204 = vmatprep.subr.mxu0 0.0
  %205 = vmatpush1.msra.mxu0 0.0
  %206 = vmatprep.subr.mxu0 0.0
  %207 = vmatpush1.msra.mxu0 0.0
  %208 = vmatprep.subr.mxu0 0.0
  %209 = vmatpush1.msra.mxu0 0.0
  %210 = vmatprep.subr.mxu0 0.0
  %211 = vmatpush1.msra.mxu0 0.0
  %212 = vmatprep.subr.mxu0 0.0
  %213 = vmatpush1.msra.mxu0 0.0
  %214 = vmatprep.subr.mxu0 0.0
  %215 = vmatpush1.msra.mxu0 0.0
  %216 = vmatprep.subr.mxu0 0.0
  %217 = vmatpush1.msra.mxu0 0.0
  %218 = vmatprep.subr.mxu0 0.0
  %219 = vmatpush1.msra.mxu0 0.0
  %220 = vmatprep.subr.mxu0 0.0
  %221 = vmatpush1.msra.mxu0 0.0
  %222 = vmatprep.mubr.f32.mxu0 0.0
  %223 = vmatmul.mubr.f32.gmra.mrb[0].mxu0 %v20
  %v224 = vpop.f32.mrb[0].mxu0
  %v225 = vadd.f32 0.0, %v224
  %v226 = vpop.f32.mrb[0].mxu0
  %v227 = vadd.f32 0.0, %v226
  %228 = vdwg.mxu0
  %v233 = vcombine.low %v154, %v156
  %v234 = vcombine.low %v225, %v227
  %v236 = vunpack.c.l.s4 1983009808
  %v237 = vunpack.c.0.s8 %v236
  %v238 = vlaneseq
  %v239 = vshrl.u32 %v238, 7
  %v240 = vsub.s32 %v237, %v239
  %v241 = vrot.slane %v233, %v240
  %v243 = vunpack.c.l.s4 1983009808
  %v244 = vunpack.c.0.s8 %v243
  %v245 = vlaneseq
  %v246 = vshrl.u32 %v245, 7
  %v247 = vsub.s32 %v244, %v246
  %v248 = vrot.slane %v234, %v247
  %v249 = vcombine.low %v241, %v248
  %v251 = vadd.f32 %v22, %v249
  %v252 = vxor.u32 %v251, 2147483648
  %v253 = vmul.f32 %v252, 1.442695
  %v254 = vpow.pop %v253
  %v255 = vadd.f32 %v254, 1.0
  %v256 = vrcp.pop %v255
  %v257 = vmul.f32 1.0, %v256
  %v259 = vrot.slane %v251, 2
  %v261 = vxor.u32 %v259, 2147483648
  %v262 = vmul.f32 %v261, 1.442695
  %v263 = vpow.pop %v262
  %v264 = vadd.f32 %v263, 1.0
  %v265 = vrcp.pop %v264
  %v266 = vmul.f32 1.0, %v265
  %v267 = vrot.slane %v251, 4
  %v269 = vtanh.pop %v267
  %v270 = vrot.slane %v251, 6
  %v272 = vxor.u32 %v270, 2147483648
  %v273 = vmul.f32 %v272, 1.442695
  %v274 = vpow.pop %v273
  %v275 = vadd.f32 %v274, 1.0
  %v276 = vrcp.pop %v275
  %v277 = vmul.f32 1.0, %v276
  %v278 = vmul.f32 %v266, %v21
  %v279 = vmul.f32 %v257, %v269
  %v280 = vadd.f32 %v278, %v279
  %v281 = vtanh.pop %v280
  %v282 = vmul.f32 %v277, %v281
  %283 = vst [vmem:[%s2] sm:$0x3] %v282
  %s284 = scalar_lea.vmem %s0, 8
  %v285 = vld [vmem:[%s284] sm:$0xff]
  %v286 = vld [vmem:[%s1] sm:$0xff]
  %v287 = vld [vmem:[%s1 + $0x8] sm:$0xff]
  %v288 = vld [vmem:[%s1 + $0x10] sm:$0xff]
  %v289 = vld [vmem:[%s1 + $0x18] sm:$0xff]
  %v290 = vld [vmem:[%s1 + $0x20] sm:$0xff]
  %v291 = vld [vmem:[%s1 + $0x28] sm:$0xff]
  %v292 = vld [vmem:[%s1 + $0x30] sm:$0xff]
  %v293 = vld [vmem:[%s1 + $0x38] sm:$0xff]
  %v294 = vld [vmem:[%s1 + $0x40] sm:$0xff]
  %v295 = vld [vmem:[%s1 + $0x48] sm:$0xff]
  %v296 = vld [vmem:[%s1 + $0x50] sm:$0xff]
  %v297 = vld [vmem:[%s1 + $0x58] sm:$0xff]
  %v298 = vld [vmem:[%s1 + $0x60] sm:$0xff]
  %v299 = vld [vmem:[%s1 + $0x68] sm:$0xff]
  %v300 = vld [vmem:[%s1 + $0x70] sm:$0xff]
  %v301 = vld [vmem:[%s1 + $0x78] sm:$0xff]
  %v302 = vld [vmem:[%s1 + $0x80] sm:$0xff]
  %v303 = vld [vmem:[%s1 + $0x88] sm:$0xff]
  %v304 = vld [vmem:[%s1 + $0x90] sm:$0xff]
  %v305 = vld [vmem:[%s1 + $0x98] sm:$0xff]
  %v306 = vld [vmem:[%s1 + $0xa0] sm:$0xff]
  %v307 = vld [vmem:[%s1 + $0xa8] sm:$0xff]
  %v308 = vld [vmem:[%s1 + $0xb0] sm:$0xff]
  %v309 = vld [vmem:[%s1 + $0xb8] sm:$0xff]
  %v310 = vld [vmem:[%s1 + $0xc0] sm:$0xff]
  %v311 = vld [vmem:[%s1 + $0xc8] sm:$0xff]
  %v312 = vld [vmem:[%s1 + $0xd0] sm:$0xff]
  %v313 = vld [vmem:[%s1 + $0xd8] sm:$0xff]
  %v314 = vld [vmem:[%s1 + $0xe0] sm:$0xff]
  %v315 = vld [vmem:[%s1 + $0xe8] sm:$0xff]
  %v316 = vld [vmem:[%s1 + $0xf0] sm:$0xff]
  %v317 = vld [vmem:[%s1 + $0xf8] sm:$0xff]
  %v318 = vld [vmem:[%s1 + $0x100] sm:$0xff]
  %v319 = vld [vmem:[%s1 + $0x108] sm:$0xff]
  %v320 = vld [vmem:[%s1 + $0x110] sm:$0xff]
  %v321 = vld [vmem:[%s1 + $0x118] sm:$0xff]
  %v322 = vld [vmem:[%s1 + $0x120] sm:$0xff]
  %v323 = vld [vmem:[%s1 + $0x128] sm:$0xff]
  %v324 = vld [vmem:[%s1 + $0x130] sm:$0xff]
  %v325 = vld [vmem:[%s1 + $0x138] sm:$0xff]
  %v326 = vld [vmem:[%s1 + $0x140] sm:$0xff]
  %v327 = vld [vmem:[%s1 + $0x148] sm:$0xff]
  %v328 = vld [vmem:[%s1 + $0x150] sm:$0xff]
  %v329 = vld [vmem:[%s1 + $0x158] sm:$0xff]
  %v330 = vld [vmem:[%s1 + $0x160] sm:$0xff]
  %v331 = vld [vmem:[%s1 + $0x168] sm:$0xff]
  %v332 = vld [vmem:[%s1 + $0x170] sm:$0xff]
  %v333 = vld [vmem:[%s1 + $0x178] sm:$0xff]
  %v334 = vld [vmem:[%s1 + $0x180] sm:$0xff]
  %v335 = vld [vmem:[%s1 + $0x188] sm:$0xff]
  %v336 = vld [vmem:[%s1 + $0x190] sm:$0xff]
  %v337 = vld [vmem:[%s1 + $0x198] sm:$0xff]
  %v338 = vld [vmem:[%s1 + $0x1a0] sm:$0xff]
  %v339 = vld [vmem:[%s1 + $0x1a8] sm:$0xff]
  %v340 = vld [vmem:[%s1 + $0x1b0] sm:$0xff]
  %v341 = vld [vmem:[%s1 + $0x1b8] sm:$0xff]
  %v342 = vld [vmem:[%s1 + $0x1c0] sm:$0xff]
  %v343 = vld [vmem:[%s1 + $0x1c8] sm:$0xff]
  %v344 = vld [vmem:[%s1 + $0x1d0] sm:$0xff]
  %v345 = vld [vmem:[%s1 + $0x1d8] sm:$0xff]
  %v346 = vld [vmem:[%s1 + $0x1e0] sm:$0xff]
  %v347 = vld [vmem:[%s1 + $0x1e8] sm:$0xff]
  %v348 = vld [vmem:[%s1 + $0x1f0] sm:$0xff]
  %v349 = vld [vmem:[%s1 + $0x1f8] sm:$0xff]
  %350 = vmatprep.subr.mxu0 %v287
  %351 = vmatpush1.msra.mxu0 %v286
  %352 = vmatprep.subr.mxu0 %v291
  %353 = vmatpush1.msra.mxu0 %v290
  %354 = vmatprep.subr.mxu0 %v295
  %355 = vmatpush1.msra.mxu0 %v294
  %356 = vmatprep.subr.mxu0 %v299
  %357 = vmatpush1.msra.mxu0 %v298
  %358 = vmatprep.subr.mxu0 %v303
  %359 = vmatpush1.msra.mxu0 %v302
  %360 = vmatprep.subr.mxu0 %v307
  %361 = vmatpush1.msra.mxu0 %v306
  %362 = vmatprep.subr.mxu0 %v311
  %363 = vmatpush1.msra.mxu0 %v310
  %364 = vmatprep.subr.mxu0 %v315
  %365 = vmatpush1.msra.mxu0 %v314
  %366 = vmatprep.subr.mxu0 %v319
  %367 = vmatpush1.msra.mxu0 %v318
  %368 = vmatprep.subr.mxu0 %v323
  %369 = vmatpush1.msra.mxu0 %v322
  %370 = vmatprep.subr.mxu0 %v327
  %371 = vmatpush1.msra.mxu0 %v326
  %372 = vmatprep.subr.mxu0 %v331
  %373 = vmatpush1.msra.mxu0 %v330
  %374 = vmatprep.subr.mxu0 %v335
  %375 = vmatpush1.msra.mxu0 %v334
  %376 = vmatprep.subr.mxu0 %v339
  %377 = vmatpush1.msra.mxu0 %v338
  %378 = vmatprep.subr.mxu0 %v343
  %379 = vmatpush1.msra.mxu0 %v342
  %380 = vmatprep.subr.mxu0 %v347
  %381 = vmatpush1.msra.mxu0 %v346
  %382 = vmatprep.subr.mxu0 0.0
  %383 = vmatpush1.msra.mxu0 0.0
  %384 = vmatprep.subr.mxu0 0.0
  %385 = vmatpush1.msra.mxu0 0.0
  %386 = vmatprep.subr.mxu0 0.0
  %387 = vmatpush1.msra.mxu0 0.0
  %388 = vmatprep.subr.mxu0 0.0
  %389 = vmatpush1.msra.mxu0 0.0
  %390 = vmatprep.subr.mxu0 0.0
  %391 = vmatpush1.msra.mxu0 0.0
  %392 = vmatprep.subr.mxu0 0.0
  %393 = vmatpush1.msra.mxu0 0.0
  %394 = vmatprep.subr.mxu0 0.0
  %395 = vmatpush1.msra.mxu0 0.0
  %396 = vmatprep.subr.mxu0 0.0
  %397 = vmatpush1.msra.mxu0 0.0
  %398 = vmatprep.subr.mxu0 0.0
  %399 = vmatpush1.msra.mxu0 0.0
  %400 = vmatprep.subr.mxu0 0.0
  %401 = vmatpush1.msra.mxu0 0.0
  %402 = vmatprep.subr.mxu0 0.0
  %403 = vmatpush1.msra.mxu0 0.0
  %404 = vmatprep.subr.mxu0 0.0
  %405 = vmatpush1.msra.mxu0 0.0
  %406 = vmatprep.subr.mxu0 0.0
  %407 = vmatpush1.msra.mxu0 0.0
  %408 = vmatprep.subr.mxu0 0.0
  %409 = vmatpush1.msra.mxu0 0.0
  %410 = vmatprep.subr.mxu0 0.0
  %411 = vmatpush1.msra.mxu0 0.0
  %412 = vmatprep.subr.mxu0 0.0
  %413 = vmatpush1.msra.mxu0 0.0
  %414 = vmatprep.mubr.f32.mxu0 0.0
  %415 = vmatmul.mubr.f32.gmra.mrb[0].mxu0 %v282
  %v416 = vpop.f32.mrb[0].mxu0
  %v417 = vadd.f32 0.0, %v416
  %v418 = vpop.f32.mrb[0].mxu0
  %v419 = vadd.f32 0.0, %v418
  %420 = vdwg.mxu0
  %421 = vmatprep.subr.mxu0 %v289
  %422 = vmatpush1.msra.mxu0 %v288
  %423 = vmatprep.subr.mxu0 %v293
  %424 = vmatpush1.msra.mxu0 %v292
  %425 = vmatprep.subr.mxu0 %v297
  %426 = vmatpush1.msra.mxu0 %v296
  %427 = vmatprep.subr.mxu0 %v301
  %428 = vmatpush1.msra.mxu0 %v300
  %429 = vmatprep.subr.mxu0 %v305
  %430 = vmatpush1.msra.mxu0 %v304
  %431 = vmatprep.subr.mxu0 %v309
  %432 = vmatpush1.msra.mxu0 %v308
  %433 = vmatprep.subr.mxu0 %v313
  %434 = vmatpush1.msra.mxu0 %v312
  %435 = vmatprep.subr.mxu0 %v317
  %436 = vmatpush1.msra.mxu0 %v316
  %437 = vmatprep.subr.mxu0 %v321
  %438 = vmatpush1.msra.mxu0 %v320
  %439 = vmatprep.subr.mxu0 %v325
  %440 = vmatpush1.msra.mxu0 %v324
  %441 = vmatprep.subr.mxu0 %v329
  %442 = vmatpush1.msra.mxu0 %v328
  %443 = vmatprep.subr.mxu0 %v333
  %444 = vmatpush1.msra.mxu0 %v332
  %445 = vmatprep.subr.mxu0 %v337
  %446 = vmatpush1.msra.mxu0 %v336
  %447 = vmatprep.subr.mxu0 %v341
  %448 = vmatpush1.msra.mxu0 %v340
  %449 = vmatprep.subr.mxu0 %v345
  %450 = vmatpush1.msra.mxu0 %v344
  %451 = vmatprep.subr.mxu0 %v349
  %452 = vmatpush1.msra.mxu0 %v348
  %453 = vmatprep.subr.mxu0 0.0
  %454 = vmatpush1.msra.mxu0 0.0
  %455 = vmatprep.subr.mxu0 0.0
  %456 = vmatpush1.msra.mxu0 0.0
  %457 = vmatprep.subr.mxu0 0.0
  %458 = vmatpush1.msra.mxu0 0.0
  %459 = vmatprep.subr.mxu0 0.0
  %460 = vmatpush1.msra.mxu0 0.0
  %461 = vmatprep.subr.mxu0 0.0
  %462 = vmatpush1.msra.mxu0 0.0
  %463 = vmatprep.subr.mxu0 0.0
  %464 = vmatpush1.msra.mxu0 0.0
  %465 = vmatprep.subr.mxu0 0.0
  %466 = vmatpush1.msra.mxu0 0.0
  %467 = vmatprep.subr.mxu0 0.0
  %468 = vmatpush1.msra.mxu0 0.0
  %469 = vmatprep.subr.mxu0 0.0
  %470 = vmatpush1.msra.mxu0 0.0
  %471 = vmatprep.subr.mxu0 0.0
  %472 = vmatpush1.msra.mxu0 0.0
  %473 = vmatprep.subr.mxu0 0.0
  %474 = vmatpush1.msra.mxu0 0.0
  %475 = vmatprep.subr.mxu0 0.0
  %476 = vmatpush1.msra.mxu0 0.0
  %477 = vmatprep.subr.mxu0 0.0
  %478 = vmatpush1.msra.mxu0 0.0
  %479 = vmatprep.subr.mxu0 0.0
  %480 = vmatpush1.msra.mxu0 0.0
  %481 = vmatprep.subr.mxu0 0.0
  %482 = vmatpush1.msra.mxu0 0.0
  %483 = vmatprep.subr.mxu0 0.0
  %484 = vmatpush1.msra.mxu0 0.0
  %485 = vmatprep.mubr.f32.mxu0 0.0
  %486 = vmatmul.mubr.f32.gmra.mrb[0].mxu0 %v282
  %v487 = vpop.f32.mrb[0].mxu0
  %v488 = vadd.f32 0.0, %v487
  %v489 = vpop.f32.mrb[0].mxu0
  %v490 = vadd.f32 0.0, %v489
  %491 = vdwg.mxu0
  %v496 = vcombine.low %v417, %v419
  %v497 = vcombine.low %v488, %v490
  %v499 = vunpack.c.l.s4 1983009808
  %v500 = vunpack.c.0.s8 %v499
  %v501 = vlaneseq
  %v502 = vshrl.u32 %v501, 7
  %v503 = vsub.s32 %v500, %v502
  %v504 = vrot.slane %v496, %v503
  %v506 = vunpack.c.l.s4 1983009808
  %v507 = vunpack.c.0.s8 %v506
  %v508 = vlaneseq
  %v509 = vshrl.u32 %v508, 7
  %v510 = vsub.s32 %v507, %v509
  %v511 = vrot.slane %v497, %v510
  %v512 = vcombine.low %v504, %v511
  %v514 = vadd.f32 %v285, %v512
  %v515 = vxor.u32 %v514, 2147483648
  %v516 = vmul.f32 %v515, 1.442695
  %v517 = vpow.pop %v516
  %v518 = vadd.f32 %v517, 1.0
  %v519 = vrcp.pop %v518
  %v520 = vmul.f32 1.0, %v519
  %v522 = vrot.slane %v514, 2
  %v524 = vxor.u32 %v522, 2147483648
  %v525 = vmul.f32 %v524, 1.442695
  %v526 = vpow.pop %v525
  %v527 = vadd.f32 %v526, 1.0
  %v528 = vrcp.pop %v527
  %v529 = vmul.f32 1.0, %v528
  %v530 = vrot.slane %v514, 4
  %v532 = vtanh.pop %v530
  %v533 = vrot.slane %v514, 6
  %v535 = vxor.u32 %v533, 2147483648
  %v536 = vmul.f32 %v535, 1.442695
  %v537 = vpow.pop %v536
  %v538 = vadd.f32 %v537, 1.0
  %v539 = vrcp.pop %v538
  %v540 = vmul.f32 1.0, %v539
  %v541 = vmul.f32 %v529, %v280
  %v542 = vmul.f32 %v520, %v532
  %v543 = vadd.f32 %v541, %v542
  %v544 = vtanh.pop %v543
  %v545 = vmul.f32 %v540, %v544
  %s546 = scalar_lea.vmem %s2, 2
  %547 = vst [vmem:[%s546] sm:$0x3] %v545
  %s548 = scalar_lea.vmem %s0, 16
  %v549 = vld [vmem:[%s548] sm:$0xff]
  %v550 = vld [vmem:[%s1] sm:$0xff]
  %v551 = vld [vmem:[%s1 + $0x8] sm:$0xff]
  %v552 = vld [vmem:[%s1 + $0x10] sm:$0xff]
  %v553 = vld [vmem:[%s1 + $0x18] sm:$0xff]
  %v554 = vld [vmem:[%s1 + $0x20] sm:$0xff]
  %v555 = vld [vmem:[%s1 + $0x28] sm:$0xff]
  %v556 = vld [vmem:[%s1 + $0x30] sm:$0xff]
  %v557 = vld [vmem:[%s1 + $0x38] sm:$0xff]
  %v558 = vld [vmem:[%s1 + $0x40] sm:$0xff]
  %v559 = vld [vmem:[%s1 + $0x48] sm:$0xff]
  %v560 = vld [vmem:[%s1 + $0x50] sm:$0xff]
  %v561 = vld [vmem:[%s1 + $0x58] sm:$0xff]
  %v562 = vld [vmem:[%s1 + $0x60] sm:$0xff]
  %v563 = vld [vmem:[%s1 + $0x68] sm:$0xff]
  %v564 = vld [vmem:[%s1 + $0x70] sm:$0xff]
  %v565 = vld [vmem:[%s1 + $0x78] sm:$0xff]
  %v566 = vld [vmem:[%s1 + $0x80] sm:$0xff]
  %v567 = vld [vmem:[%s1 + $0x88] sm:$0xff]
  %v568 = vld [vmem:[%s1 + $0x90] sm:$0xff]
  %v569 = vld [vmem:[%s1 + $0x98] sm:$0xff]
  %v570 = vld [vmem:[%s1 + $0xa0] sm:$0xff]
  %v571 = vld [vmem:[%s1 + $0xa8] sm:$0xff]
  %v572 = vld [vmem:[%s1 + $0xb0] sm:$0xff]
  %v573 = vld [vmem:[%s1 + $0xb8] sm:$0xff]
  %v574 = vld [vmem:[%s1 + $0xc0] sm:$0xff]
  %v575 = vld [vmem:[%s1 + $0xc8] sm:$0xff]
  %v576 = vld [vmem:[%s1 + $0xd0] sm:$0xff]
  %v577 = vld [vmem:[%s1 + $0xd8] sm:$0xff]
  %v578 = vld [vmem:[%s1 + $0xe0] sm:$0xff]
  %v579 = vld [vmem:[%s1 + $0xe8] sm:$0xff]
  %v580 = vld [vmem:[%s1 + $0xf0] sm:$0xff]
  %v581 = vld [vmem:[%s1 + $0xf8] sm:$0xff]
  %v582 = vld [vmem:[%s1 + $0x100] sm:$0xff]
  %v583 = vld [vmem:[%s1 + $0x108] sm:$0xff]
  %v584 = vld [vmem:[%s1 + $0x110] sm:$0xff]
  %v585 = vld [vmem:[%s1 + $0x118] sm:$0xff]
  %v586 = vld [vmem:[%s1 + $0x120] sm:$0xff]
  %v587 = vld [vmem:[%s1 + $0x128] sm:$0xff]
  %v588 = vld [vmem:[%s1 + $0x130] sm:$0xff]
  %v589 = vld [vmem:[%s1 + $0x138] sm:$0xff]
  %v590 = vld [vmem:[%s1 + $0x140] sm:$0xff]
  %v591 = vld [vmem:[%s1 + $0x148] sm:$0xff]
  %v592 = vld [vmem:[%s1 + $0x150] sm:$0xff]
  %v593 = vld [vmem:[%s1 + $0x158] sm:$0xff]
  %v594 = vld [vmem:[%s1 + $0x160] sm:$0xff]
  %v595 = vld [vmem:[%s1 + $0x168] sm:$0xff]
  %v596 = vld [vmem:[%s1 + $0x170] sm:$0xff]
  %v597 = vld [vmem:[%s1 + $0x178] sm:$0xff]
  %v598 = vld [vmem:[%s1 + $0x180] sm:$0xff]
  %v599 = vld [vmem:[%s1 + $0x188] sm:$0xff]
  %v600 = vld [vmem:[%s1 + $0x190] sm:$0xff]
  %v601 = vld [vmem:[%s1 + $0x198] sm:$0xff]
  %v602 = vld [vmem:[%s1 + $0x1a0] sm:$0xff]
  %v603 = vld [vmem:[%s1 + $0x1a8] sm:$0xff]
  %v604 = vld [vmem:[%s1 + $0x1b0] sm:$0xff]
  %v605 = vld [vmem:[%s1 + $0x1b8] sm:$0xff]
  %v606 = vld [vmem:[%s1 + $0x1c0] sm:$0xff]
  %v607 = vld [vmem:[%s1 + $0x1c8] sm:$0xff]
  %v608 = vld [vmem:[%s1 + $0x1d0] sm:$0xff]
  %v609 = vld [vmem:[%s1 + $0x1d8] sm:$0xff]
  %v610 = vld [vmem:[%s1 + $0x1e0] sm:$0xff]
  %v611 = vld [vmem:[%s1 + $0x1e8] sm:$0xff]
  %v612 = vld [vmem:[%s1 + $0x1f0] sm:$0xff]
  %v613 = vld [vmem:[%s1 + $0x1f8] sm:$0xff]
  %614 = vmatprep.subr.mxu0 %v551
  %615 = vmatpush1.msra.mxu0 %v550
  %616 = vmatprep.subr.mxu0 %v555
  %617 = vmatpush1.msra.mxu0 %v554
  %618 = vmatprep.subr.mxu0 %v559
  %619 = vmatpush1.msra.mxu0 %v558
  %620 = vmatprep.subr.mxu0 %v563
  %621 = vmatpush1.msra.mxu0 %v562
  %622 = vmatprep.subr.mxu0 %v567
  %623 = vmatpush1.msra.mxu0 %v566
  %624 = vmatprep.subr.mxu0 %v571
  %625 = vmatpush1.msra.mxu0 %v570
  %626 = vmatprep.subr.mxu0 %v575
  %627 = vmatpush1.msra.mxu0 %v574
  %628 = vmatprep.subr.mxu0 %v579
  %629 = vmatpush1.msra.mxu0 %v578
  %630 = vmatprep.subr.mxu0 %v583
  %631 = vmatpush1.msra.mxu0 %v582
  %632 = vmatprep.subr.mxu0 %v587
  %633 = vmatpush1.msra.mxu0 %v586
  %634 = vmatprep.subr.mxu0 %v591
  %635 = vmatpush1.msra.mxu0 %v590
  %636 = vmatprep.subr.mxu0 %v595
  %637 = vmatpush1.msra.mxu0 %v594
  %638 = vmatprep.subr.mxu0 %v599
  %639 = vmatpush1.msra.mxu0 %v598
  %640 = vmatprep.subr.mxu0 %v603
  %641 = vmatpush1.msra.mxu0 %v602
  %642 = vmatprep.subr.mxu0 %v607
  %643 = vmatpush1.msra.mxu0 %v606
  %644 = vmatprep.subr.mxu0 %v611
  %645 = vmatpush1.msra.mxu0 %v610
  %646 = vmatprep.subr.mxu0 0.0
  %647 = vmatpush1.msra.mxu0 0.0
  %648 = vmatprep.subr.mxu0 0.0
  %649 = vmatpush1.msra.mxu0 0.0
  %650 = vmatprep.subr.mxu0 0.0
  %651 = vmatpush1.msra.mxu0 0.0
  %652 = vmatprep.subr.mxu0 0.0
  %653 = vmatpush1.msra.mxu0 0.0
  %654 = vmatprep.subr.mxu0 0.0
  %655 = vmatpush1.msra.mxu0 0.0
  %656 = vmatprep.subr.mxu0 0.0
  %657 = vmatpush1.msra.mxu0 0.0
  %658 = vmatprep.subr.mxu0 0.0
  %659 = vmatpush1.msra.mxu0 0.0
  %660 = vmatprep.subr.mxu0 0.0
  %661 = vmatpush1.msra.mxu0 0.0
  %662 = vmatprep.subr.mxu0 0.0
  %663 = vmatpush1.msra.mxu0 0.0
  %664 = vmatprep.subr.mxu0 0.0
  %665 = vmatpush1.msra.mxu0 0.0
  %666 = vmatprep.subr.mxu0 0.0
  %667 = vmatpush1.msra.mxu0 0.0
  %668 = vmatprep.subr.mxu0 0.0
  %669 = vmatpush1.msra.mxu0 0.0
  %670 = vmatprep.subr.mxu0 0.0
  %671 = vmatpush1.msra.mxu0 0.0
  %672 = vmatprep.subr.mxu0 0.0
  %673 = vmatpush1.msra.mxu0 0.0
  %674 = vmatprep.subr.mxu0 0.0
  %675 = vmatpush1.msra.mxu0 0.0
  %676 = vmatprep.subr.mxu0 0.0
  %677 = vmatpush1.msra.mxu0 0.0
  %678 = vmatprep.mubr.f32.mxu0 0.0
  %679 = vmatmul.mubr.f32.gmra.mrb[0].mxu0 %v545
  %v680 = vpop.f32.mrb[0].mxu0
  %v681 = vadd.f32 0.0, %v680
  %v682 = vpop.f32.mrb[0].mxu0
  %v683 = vadd.f32 0.0, %v682
  %684 = vdwg.mxu0
  %685 = vmatprep.subr.mxu0 %v553
  %686 = vmatpush1.msra.mxu0 %v552
  %687 = vmatprep.subr.mxu0 %v557
  %688 = vmatpush1.msra.mxu0 %v556
  %689 = vmatprep.subr.mxu0 %v561
  %690 = vmatpush1.msra.mxu0 %v560
  %691 = vmatprep.subr.mxu0 %v565
  %692 = vmatpush1.msra.mxu0 %v564
  %693 = vmatprep.subr.mxu0 %v569
  %694 = vmatpush1.msra.mxu0 %v568
  %695 = vmatprep.subr.mxu0 %v573
  %696 = vmatpush1.msra.mxu0 %v572
  %697 = vmatprep.subr.mxu0 %v577
  %698 = vmatpush1.msra.mxu0 %v576
  %699 = vmatprep.subr.mxu0 %v581
  %700 = vmatpush1.msra.mxu0 %v580
  %701 = vmatprep.subr.mxu0 %v585
  %702 = vmatpush1.msra.mxu0 %v584
  %703 = vmatprep.subr.mxu0 %v589
  %704 = vmatpush1.msra.mxu0 %v588
  %705 = vmatprep.subr.mxu0 %v593
  %706 = vmatpush1.msra.mxu0 %v592
  %707 = vmatprep.subr.mxu0 %v597
  %708 = vmatpush1.msra.mxu0 %v596
  %709 = vmatprep.subr.mxu0 %v601
  %710 = vmatpush1.msra.mxu0 %v600
  %711 = vmatprep.subr.mxu0 %v605
  %712 = vmatpush1.msra.mxu0 %v604
  %713 = vmatprep.subr.mxu0 %v609
  %714 = vmatpush1.msra.mxu0 %v608
  %715 = vmatprep.subr.mxu0 %v613
  %716 = vmatpush1.msra.mxu0 %v612
  %717 = vmatprep.subr.mxu0 0.0
  %718 = vmatpush1.msra.mxu0 0.0
  %719 = vmatprep.subr.mxu0 0.0
  %720 = vmatpush1.msra.mxu0 0.0
  %721 = vmatprep.subr.mxu0 0.0
  %722 = vmatpush1.msra.mxu0 0.0
  %723 = vmatprep.subr.mxu0 0.0
  %724 = vmatpush1.msra.mxu0 0.0
  %725 = vmatprep.subr.mxu0 0.0
  %726 = vmatpush1.msra.mxu0 0.0
  %727 = vmatprep.subr.mxu0 0.0
  %728 = vmatpush1.msra.mxu0 0.0
  %729 = vmatprep.subr.mxu0 0.0
  %730 = vmatpush1.msra.mxu0 0.0
  %731 = vmatprep.subr.mxu0 0.0
  %732 = vmatpush1.msra.mxu0 0.0
  %733 = vmatprep.subr.mxu0 0.0
  %734 = vmatpush1.msra.mxu0 0.0
  %735 = vmatprep.subr.mxu0 0.0
  %736 = vmatpush1.msra.mxu0 0.0
  %737 = vmatprep.subr.mxu0 0.0
  %738 = vmatpush1.msra.mxu0 0.0
  %739 = vmatprep.subr.mxu0 0.0
  %740 = vmatpush1.msra.mxu0 0.0
  %741 = vmatprep.subr.mxu0 0.0
  %742 = vmatpush1.msra.mxu0 0.0
  %743 = vmatprep.subr.mxu0 0.0
  %744 = vmatpush1.msra.mxu0 0.0
  %745 = vmatprep.subr.mxu0 0.0
  %746 = vmatpush1.msra.mxu0 0.0
  %747 = vmatprep.subr.mxu0 0.0
  %748 = vmatpush1.msra.mxu0 0.0
  %749 = vmatprep.mubr.f32.mxu0 0.0
  %750 = vmatmul.mubr.f32.gmra.mrb[0].mxu0 %v545
  %v751 = vpop.f32.mrb[0].mxu0
  %v752 = vadd.f32 0.0, %v751
  %v753 = vpop.f32.mrb[0].mxu0
  %v754 = vadd.f32 0.0, %v753
  %755 = vdwg.mxu0
  %v760 = vcombine.low %v681, %v683
  %v761 = vcombine.low %v752, %v754
  %v763 = vunpack.c.l.s4 1983009808
  %v764 = vunpack.c.0.s8 %v763
  %v765 = vlaneseq
  %v766 = vshrl.u32 %v765, 7
  %v767 = vsub.s32 %v764, %v766
  %v768 = vrot.slane %v760, %v767
  %v770 = vunpack.c.l.s4 1983009808
  %v771 = vunpack.c.0.s8 %v770
  %v772 = vlaneseq
  %v773 = vshrl.u32 %v772, 7
  %v774 = vsub.s32 %v771, %v773
  %v775 = vrot.slane %v761, %v774
  %v776 = vcombine.low %v768, %v775
  %v778 = vadd.f32 %v549, %v776
  %v779 = vxor.u32 %v778, 2147483648
  %v780 = vmul.f32 %v779, 1.442695
  %v781 = vpow.pop %v780
  %v782 = vadd.f32 %v781, 1.0
  %v783 = vrcp.pop %v782
  %v784 = vmul.f32 1.0, %v783
  %v786 = vrot.slane %v778, 2
  %v788 = vxor.u32 %v786, 2147483648
  %v789 = vmul.f32 %v788, 1.442695
  %v790 = vpow.pop %v789
  %v791 = vadd.f32 %v790, 1.0
  %v792 = vrcp.pop %v791
  %v793 = vmul.f32 1.0, %v792
  %v794 = vrot.slane %v778, 4
  %v796 = vtanh.pop %v794
  %v797 = vrot.slane %v778, 6
  %v799 = vxor.u32 %v797, 2147483648
  %v800 = vmul.f32 %v799, 1.442695
  %v801 = vpow.pop %v800
  %v802 = vadd.f32 %v801, 1.0
  %v803 = vrcp.pop %v802
  %v804 = vmul.f32 1.0, %v803
  %v805 = vmul.f32 %v793, %v543
  %v806 = vmul.f32 %v784, %v796
  %v807 = vadd.f32 %v805, %v806
  %v808 = vtanh.pop %v807
  %v809 = vmul.f32 %v804, %v808
  %s810 = scalar_lea.vmem %s2, 4
  %811 = vst [vmem:[%s810] sm:$0x3] %v809
  %s812 = scalar_lea.vmem %s0, 24
  %v813 = vld [vmem:[%s812] sm:$0xff]
  %v814 = vld [vmem:[%s1] sm:$0xff]
  %v815 = vld [vmem:[%s1 + $0x8] sm:$0xff]
  %v816 = vld [vmem:[%s1 + $0x10] sm:$0xff]
  %v817 = vld [vmem:[%s1 + $0x18] sm:$0xff]
  %v818 = vld [vmem:[%s1 + $0x20] sm:$0xff]
  %v819 = vld [vmem:[%s1 + $0x28] sm:$0xff]
  %v820 = vld [vmem:[%s1 + $0x30] sm:$0xff]
  %v821 = vld [vmem:[%s1 + $0x38] sm:$0xff]
  %v822 = vld [vmem:[%s1 + $0x40] sm:$0xff]
  %v823 = vld [vmem:[%s1 + $0x48] sm:$0xff]
  %v824 = vld [vmem:[%s1 + $0x50] sm:$0xff]
  %v825 = vld [vmem:[%s1 + $0x58] sm:$0xff]
  %v826 = vld [vmem:[%s1 + $0x60] sm:$0xff]
  %v827 = vld [vmem:[%s1 + $0x68] sm:$0xff]
  %v828 = vld [vmem:[%s1 + $0x70] sm:$0xff]
  %v829 = vld [vmem:[%s1 + $0x78] sm:$0xff]
  %v830 = vld [vmem:[%s1 + $0x80] sm:$0xff]
  %v831 = vld [vmem:[%s1 + $0x88] sm:$0xff]
  %v832 = vld [vmem:[%s1 + $0x90] sm:$0xff]
  %v833 = vld [vmem:[%s1 + $0x98] sm:$0xff]
  %v834 = vld [vmem:[%s1 + $0xa0] sm:$0xff]
  %v835 = vld [vmem:[%s1 + $0xa8] sm:$0xff]
  %v836 = vld [vmem:[%s1 + $0xb0] sm:$0xff]
  %v837 = vld [vmem:[%s1 + $0xb8] sm:$0xff]
  %v838 = vld [vmem:[%s1 + $0xc0] sm:$0xff]
  %v839 = vld [vmem:[%s1 + $0xc8] sm:$0xff]
  %v840 = vld [vmem:[%s1 + $0xd0] sm:$0xff]
  %v841 = vld [vmem:[%s1 + $0xd8] sm:$0xff]
  %v842 = vld [vmem:[%s1 + $0xe0] sm:$0xff]
  %v843 = vld [vmem:[%s1 + $0xe8] sm:$0xff]
  %v844 = vld [vmem:[%s1 + $0xf0] sm:$0xff]
  %v845 = vld [vmem:[%s1 + $0xf8] sm:$0xff]
  %v846 = vld [vmem:[%s1 + $0x100] sm:$0xff]
  %v847 = vld [vmem:[%s1 + $0x108] sm:$0xff]
  %v848 = vld [vmem:[%s1 + $0x110] sm:$0xff]
  %v849 = vld [vmem:[%s1 + $0x118] sm:$0xff]
  %v850 = vld [vmem:[%s1 + $0x120] sm:$0xff]
  %v851 = vld [vmem:[%s1 + $0x128] sm:$0xff]
  %v852 = vld [vmem:[%s1 + $0x130] sm:$0xff]
  %v853 = vld [vmem:[%s1 + $0x138] sm:$0xff]
  %v854 = vld [vmem:[%s1 + $0x140] sm:$0xff]
  %v855 = vld [vmem:[%s1 + $0x148] sm:$0xff]
  %v856 = vld [vmem:[%s1 + $0x150] sm:$0xff]
  %v857 = vld [vmem:[%s1 + $0x158] sm:$0xff]
  %v858 = vld [vmem:[%s1 + $0x160] sm:$0xff]
  %v859 = vld [vmem:[%s1 + $0x168] sm:$0xff]
  %v860 = vld [vmem:[%s1 + $0x170] sm:$0xff]
  %v861 = vld [vmem:[%s1 + $0x178] sm:$0xff]
  %v862 = vld [vmem:[%s1 + $0x180] sm:$0xff]
  %v863 = vld [vmem:[%s1 + $0x188] sm:$0xff]
  %v864 = vld [vmem:[%s1 + $0x190] sm:$0xff]
  %v865 = vld [vmem:[%s1 + $0x198] sm:$0xff]
  %v866 = vld [vmem:[%s1 + $0x1a0] sm:$0xff]
  %v867 = vld [vmem:[%s1 + $0x1a8] sm:$0xff]
  %v868 = vld [vmem:[%s1 + $0x1b0] sm:$0xff]
  %v869 = vld [vmem:[%s1 + $0x1b8] sm:$0xff]
  %v870 = vld [vmem:[%s1 + $0x1c0] sm:$0xff]
  %v871 = vld [vmem:[%s1 + $0x1c8] sm:$0xff]
  %v872 = vld [vmem:[%s1 + $0x1d0] sm:$0xff]
  %v873 = vld [vmem:[%s1 + $0x1d8] sm:$0xff]
  %v874 = vld [vmem:[%s1 + $0x1e0] sm:$0xff]
  %v875 = vld [vmem:[%s1 + $0x1e8] sm:$0xff]
  %v876 = vld [vmem:[%s1 + $0x1f0] sm:$0xff]
  %v877 = vld [vmem:[%s1 + $0x1f8] sm:$0xff]
  %878 = vmatprep.subr.mxu0 %v815
  %879 = vmatpush1.msra.mxu0 %v814
  %880 = vmatprep.subr.mxu0 %v819
  %881 = vmatpush1.msra.mxu0 %v818
  %882 = vmatprep.subr.mxu0 %v823
  %883 = vmatpush1.msra.mxu0 %v822
  %884 = vmatprep.subr.mxu0 %v827
  %885 = vmatpush1.msra.mxu0 %v826
  %886 = vmatprep.subr.mxu0 %v831
  %887 = vmatpush1.msra.mxu0 %v830
  %888 = vmatprep.subr.mxu0 %v835
  %889 = vmatpush1.msra.mxu0 %v834
  %890 = vmatprep.subr.mxu0 %v839
  %891 = vmatpush1.msra.mxu0 %v838
  %892 = vmatprep.subr.mxu0 %v843
  %893 = vmatpush1.msra.mxu0 %v842
  %894 = vmatprep.subr.mxu0 %v847
  %895 = vmatpush1.msra.mxu0 %v846
  %896 = vmatprep.subr.mxu0 %v851
  %897 = vmatpush1.msra.mxu0 %v850
  %898 = vmatprep.subr.mxu0 %v855
  %899 = vmatpush1.msra.mxu0 %v854
  %900 = vmatprep.subr.mxu0 %v859
  %901 = vmatpush1.msra.mxu0 %v858
  %902 = vmatprep.subr.mxu0 %v863
  %903 = vmatpush1.msra.mxu0 %v862
  %904 = vmatprep.subr.mxu0 %v867
  %905 = vmatpush1.msra.mxu0 %v866
  %906 = vmatprep.subr.mxu0 %v871
  %907 = vmatpush1.msra.mxu0 %v870
  %908 = vmatprep.subr.mxu0 %v875
  %909 = vmatpush1.msra.mxu0 %v874
  %910 = vmatprep.subr.mxu0 0.0
  %911 = vmatpush1.msra.mxu0 0.0
  %912 = vmatprep.subr.mxu0 0.0
  %913 = vmatpush1.msra.mxu0 0.0
  %914 = vmatprep.subr.mxu0 0.0
  %915 = vmatpush1.msra.mxu0 0.0
  %916 = vmatprep.subr.mxu0 0.0
  %917 = vmatpush1.msra.mxu0 0.0
  %918 = vmatprep.subr.mxu0 0.0
  %919 = vmatpush1.msra.mxu0 0.0
  %920 = vmatprep.subr.mxu0 0.0
  %921 = vmatpush1.msra.mxu0 0.0
  %922 = vmatprep.subr.mxu0 0.0
  %923 = vmatpush1.msra.mxu0 0.0
  %924 = vmatprep.subr.mxu0 0.0
  %925 = vmatpush1.msra.mxu0 0.0
  %926 = vmatprep.subr.mxu0 0.0
  %927 = vmatpush1.msra.mxu0 0.0
  %928 = vmatprep.subr.mxu0 0.0
  %929 = vmatpush1.msra.mxu0 0.0
  %930 = vmatprep.subr.mxu0 0.0
  %931 = vmatpush1.msra.mxu0 0.0
  %932 = vmatprep.subr.mxu0 0.0
  %933 = vmatpush1.msra.mxu0 0.0
  %934 = vmatprep.subr.mxu0 0.0
  %935 = vmatpush1.msra.mxu0 0.0
  %936 = vmatprep.subr.mxu0 0.0
  %937 = vmatpush1.msra.mxu0 0.0
  %938 = vmatprep.subr.mxu0 0.0
  %939 = vmatpush1.msra.mxu0 0.0
  %940 = vmatprep.subr.mxu0 0.0
  %941 = vmatpush1.msra.mxu0 0.0
  %942 = vmatprep.mubr.f32.mxu0 0.0
  %943 = vmatmul.mubr.f32.gmra.mrb[0].mxu0 %v809
  %v944 = vpop.f32.mrb[0].mxu0
  %v945 = vadd.f32 0.0, %v944
  %v946 = vpop.f32.mrb[0].mxu0
  %v947 = vadd.f32 0.0, %v946
  %948 = vdwg.mxu0
  %949 = vmatprep.subr.mxu0 %v817
  %950 = vmatpush1.msra.mxu0 %v816
  %951 = vmatprep.subr.mxu0 %v821
  %952 = vmatpush1.msra.mxu0 %v820
  %953 = vmatprep.subr.mxu0 %v825
  %954 = vmatpush1.msra.mxu0 %v824
  %955 = vmatprep.subr.mxu0 %v829
  %956 = vmatpush1.msra.mxu0 %v828
  %957 = vmatprep.subr.mxu0 %v833
  %958 = vmatpush1.msra.mxu0 %v832
  %959 = vmatprep.subr.mxu0 %v837
  %960 = vmatpush1.msra.mxu0 %v836
  %961 = vmatprep.subr.mxu0 %v841
  %962 = vmatpush1.msra.mxu0 %v840
  %963 = vmatprep.subr.mxu0 %v845
  %964 = vmatpush1.msra.mxu0 %v844
  %965 = vmatprep.subr.mxu0 %v849
  %966 = vmatpush1.msra.mxu0 %v848
  %967 = vmatprep.subr.mxu0 %v853
  %968 = vmatpush1.msra.mxu0 %v852
  %969 = vmatprep.subr.mxu0 %v857
  %970 = vmatpush1.msra.mxu0 %v856
  %971 = vmatprep.subr.mxu0 %v861
  %972 = vmatpush1.msra.mxu0 %v860
  %973 = vmatprep.subr.mxu0 %v865
  %974 = vmatpush1.msra.mxu0 %v864
  %975 = vmatprep.subr.mxu0 %v869
  %976 = vmatpush1.msra.mxu0 %v868
  %977 = vmatprep.subr.mxu0 %v873
  %978 = vmatpush1.msra.mxu0 %v872
  %979 = vmatprep.subr.mxu0 %v877
  %980 = vmatpush1.msra.mxu0 %v876
  %981 = vmatprep.subr.mxu0 0.0
  %982 = vmatpush1.msra.mxu0 0.0
  %983 = vmatprep.subr.mxu0 0.0
  %984 = vmatpush1.msra.mxu0 0.0
  %985 = vmatprep.subr.mxu0 0.0
  %986 = vmatpush1.msra.mxu0 0.0
  %987 = vmatprep.subr.mxu0 0.0
  %988 = vmatpush1.msra.mxu0 0.0
  %989 = vmatprep.subr.mxu0 0.0
  %990 = vmatpush1.msra.mxu0 0.0
  %991 = vmatprep.subr.mxu0 0.0
  %992 = vmatpush1.msra.mxu0 0.0
  %993 = vmatprep.subr.mxu0 0.0
  %994 = vmatpush1.msra.mxu0 0.0
  %995 = vmatprep.subr.mxu0 0.0
  %996 = vmatpush1.msra.mxu0 0.0
  %997 = vmatprep.subr.mxu0 0.0
  %998 = vmatpush1.msra.mxu0 0.0
  %999 = vmatprep.subr.mxu0 0.0
  %1000 = vmatpush1.msra.mxu0 0.0
  %1001 = vmatprep.subr.mxu0 0.0
  %1002 = vmatpush1.msra.mxu0 0.0
  %1003 = vmatprep.subr.mxu0 0.0
  %1004 = vmatpush1.msra.mxu0 0.0
  %1005 = vmatprep.subr.mxu0 0.0
  %1006 = vmatpush1.msra.mxu0 0.0
  %1007 = vmatprep.subr.mxu0 0.0
  %1008 = vmatpush1.msra.mxu0 0.0
  %1009 = vmatprep.subr.mxu0 0.0
  %1010 = vmatpush1.msra.mxu0 0.0
  %1011 = vmatprep.subr.mxu0 0.0
  %1012 = vmatpush1.msra.mxu0 0.0
  %1013 = vmatprep.mubr.f32.mxu0 0.0
  %1014 = vmatmul.mubr.f32.gmra.mrb[0].mxu0 %v809
  %v1015 = vpop.f32.mrb[0].mxu0
  %v1016 = vadd.f32 0.0, %v1015
  %v1017 = vpop.f32.mrb[0].mxu0
  %v1018 = vadd.f32 0.0, %v1017
  %1019 = vdwg.mxu0
  %v1024 = vcombine.low %v945, %v947
  %v1025 = vcombine.low %v1016, %v1018
  %v1027 = vunpack.c.l.s4 1983009808
  %v1028 = vunpack.c.0.s8 %v1027
  %v1029 = vlaneseq
  %v1030 = vshrl.u32 %v1029, 7
  %v1031 = vsub.s32 %v1028, %v1030
  %v1032 = vrot.slane %v1024, %v1031
  %v1034 = vunpack.c.l.s4 1983009808
  %v1035 = vunpack.c.0.s8 %v1034
  %v1036 = vlaneseq
  %v1037 = vshrl.u32 %v1036, 7
  %v1038 = vsub.s32 %v1035, %v1037
  %v1039 = vrot.slane %v1025, %v1038
  %v1040 = vcombine.low %v1032, %v1039
  %v1042 = vadd.f32 %v813, %v1040
  %v1043 = vxor.u32 %v1042, 2147483648
  %v1044 = vmul.f32 %v1043, 1.442695
  %v1045 = vpow.pop %v1044
  %v1046 = vadd.f32 %v1045, 1.0
  %v1047 = vrcp.pop %v1046
  %v1048 = vmul.f32 1.0, %v1047
  %v1050 = vrot.slane %v1042, 2
  %v1052 = vxor.u32 %v1050, 2147483648
  %v1053 = vmul.f32 %v1052, 1.442695
  %v1054 = vpow.pop %v1053
  %v1055 = vadd.f32 %v1054, 1.0
  %v1056 = vrcp.pop %v1055
  %v1057 = vmul.f32 1.0, %v1056
  %v1058 = vrot.slane %v1042, 4
  %v1060 = vtanh.pop %v1058
  %v1061 = vrot.slane %v1042, 6
  %v1063 = vxor.u32 %v1061, 2147483648
  %v1064 = vmul.f32 %v1063, 1.442695
  %v1065 = vpow.pop %v1064
  %v1066 = vadd.f32 %v1065, 1.0
  %v1067 = vrcp.pop %v1066
  %v1068 = vmul.f32 1.0, %v1067
  %v1069 = vmul.f32 %v1057, %v807
  %v1070 = vmul.f32 %v1048, %v1060
  %v1071 = vadd.f32 %v1069, %v1070
  %v1072 = vtanh.pop %v1071
  %v1073 = vmul.f32 %v1068, %v1072
  %s1074 = scalar_lea.vmem %s2, 6
  %1075 = vst [vmem:[%s1074] sm:$0x3] %v1073
  %s1076 = scalar_lea.vmem %s0, 32
  %v1077 = vld [vmem:[%s1076] sm:$0xff]
  %v1078 = vld [vmem:[%s1] sm:$0xff]
  %v1079 = vld [vmem:[%s1 + $0x8] sm:$0xff]
  %v1080 = vld [vmem:[%s1 + $0x10] sm:$0xff]
  %v1081 = vld [vmem:[%s1 + $0x18] sm:$0xff]
  %v1082 = vld [vmem:[%s1 + $0x20] sm:$0xff]
  %v1083 = vld [vmem:[%s1 + $0x28] sm:$0xff]
  %v1084 = vld [vmem:[%s1 + $0x30] sm:$0xff]
  %v1085 = vld [vmem:[%s1 + $0x38] sm:$0xff]
  %v1086 = vld [vmem:[%s1 + $0x40] sm:$0xff]
  %v1087 = vld [vmem:[%s1 + $0x48] sm:$0xff]
  %v1088 = vld [vmem:[%s1 + $0x50] sm:$0xff]
  %v1089 = vld [vmem:[%s1 + $0x58] sm:$0xff]
  %v1090 = vld [vmem:[%s1 + $0x60] sm:$0xff]
  %v1091 = vld [vmem:[%s1 + $0x68] sm:$0xff]
  %v1092 = vld [vmem:[%s1 + $0x70] sm:$0xff]
  %v1093 = vld [vmem:[%s1 + $0x78] sm:$0xff]
  %v1094 = vld [vmem:[%s1 + $0x80] sm:$0xff]
  %v1095 = vld [vmem:[%s1 + $0x88] sm:$0xff]
  %v1096 = vld [vmem:[%s1 + $0x90] sm:$0xff]
  %v1097 = vld [vmem:[%s1 + $0x98] sm:$0xff]
  %v1098 = vld [vmem:[%s1 + $0xa0] sm:$0xff]
  %v1099 = vld [vmem:[%s1 + $0xa8] sm:$0xff]
  %v1100 = vld [vmem:[%s1 + $0xb0] sm:$0xff]
  %v1101 = vld [vmem:[%s1 + $0xb8] sm:$0xff]
  %v1102 = vld [vmem:[%s1 + $0xc0] sm:$0xff]
  %v1103 = vld [vmem:[%s1 + $0xc8] sm:$0xff]
  %v1104 = vld [vmem:[%s1 + $0xd0] sm:$0xff]
  %v1105 = vld [vmem:[%s1 + $0xd8] sm:$0xff]
  %v1106 = vld [vmem:[%s1 + $0xe0] sm:$0xff]
  %v1107 = vld [vmem:[%s1 + $0xe8] sm:$0xff]
  %v1108 = vld [vmem:[%s1 + $0xf0] sm:$0xff]
  %v1109 = vld [vmem:[%s1 + $0xf8] sm:$0xff]
  %v1110 = vld [vmem:[%s1 + $0x100] sm:$0xff]
  %v1111 = vld [vmem:[%s1 + $0x108] sm:$0xff]
  %v1112 = vld [vmem:[%s1 + $0x110] sm:$0xff]
  %v1113 = vld [vmem:[%s1 + $0x118] sm:$0xff]
  %v1114 = vld [vmem:[%s1 + $0x120] sm:$0xff]
  %v1115 = vld [vmem:[%s1 + $0x128] sm:$0xff]
  %v1116 = vld [vmem:[%s1 + $0x130] sm:$0xff]
  %v1117 = vld [vmem:[%s1 + $0x138] sm:$0xff]
  %v1118 = vld [vmem:[%s1 + $0x140] sm:$0xff]
  %v1119 = vld [vmem:[%s1 + $0x148] sm:$0xff]
  %v1120 = vld [vmem:[%s1 + $0x150] sm:$0xff]
  %v1121 = vld [vmem:[%s1 + $0x158] sm:$0xff]
  %v1122 = vld [vmem:[%s1 + $0x160] sm:$0xff]
  %v1123 = vld [vmem:[%s1 + $0x168] sm:$0xff]
  %v1124 = vld [vmem:[%s1 + $0x170] sm:$0xff]
  %v1125 = vld [vmem:[%s1 + $0x178] sm:$0xff]
  %v1126 = vld [vmem:[%s1 + $0x180] sm:$0xff]
  %v1127 = vld [vmem:[%s1 + $0x188] sm:$0xff]
  %v1128 = vld [vmem:[%s1 + $0x190] sm:$0xff]
  %v1129 = vld [vmem:[%s1 + $0x198] sm:$0xff]
  %v1130 = vld [vmem:[%s1 + $0x1a0] sm:$0xff]
  %v1131 = vld [vmem:[%s1 + $0x1a8] sm:$0xff]
  %v1132 = vld [vmem:[%s1 + $0x1b0] sm:$0xff]
  %v1133 = vld [vmem:[%s1 + $0x1b8] sm:$0xff]
  %v1134 = vld [vmem:[%s1 + $0x1c0] sm:$0xff]
  %v1135 = vld [vmem:[%s1 + $0x1c8] sm:$0xff]
  %v1136 = vld [vmem:[%s1 + $0x1d0] sm:$0xff]
  %v1137 = vld [vmem:[%s1 + $0x1d8] sm:$0xff]
  %v1138 = vld [vmem:[%s1 + $0x1e0] sm:$0xff]
  %v1139 = vld [vmem:[%s1 + $0x1e8] sm:$0xff]
  %v1140 = vld [vmem:[%s1 + $0x1f0] sm:$0xff]
  %v1141 = vld [vmem:[%s1 + $0x1f8] sm:$0xff]
  %1142 = vmatprep.subr.mxu0 %v1079
  %1143 = vmatpush1.msra.mxu0 %v1078
  %1144 = vmatprep.subr.mxu0 %v1083
  %1145 = vmatpush1.msra.mxu0 %v1082
  %1146 = vmatprep.subr.mxu0 %v1087
  %1147 = vmatpush1.msra.mxu0 %v1086
  %1148 = vmatprep.subr.mxu0 %v1091
  %1149 = vmatpush1.msra.mxu0 %v1090
  %1150 = vmatprep.subr.mxu0 %v1095
  %1151 = vmatpush1.msra.mxu0 %v1094
  %1152 = vmatprep.subr.mxu0 %v1099
  %1153 = vmatpush1.msra.mxu0 %v1098
  %1154 = vmatprep.subr.mxu0 %v1103
  %1155 = vmatpush1.msra.mxu0 %v1102
  %1156 = vmatprep.subr.mxu0 %v1107
  %1157 = vmatpush1.msra.mxu0 %v1106
  %1158 = vmatprep.subr.mxu0 %v1111
  %1159 = vmatpush1.msra.mxu0 %v1110
  %1160 = vmatprep.subr.mxu0 %v1115
  %1161 = vmatpush1.msra.mxu0 %v1114
  %1162 = vmatprep.subr.mxu0 %v1119
  %1163 = vmatpush1.msra.mxu0 %v1118
  %1164 = vmatprep.subr.mxu0 %v1123
  %1165 = vmatpush1.msra.mxu0 %v1122
  %1166 = vmatprep.subr.mxu0 %v1127
  %1167 = vmatpush1.msra.mxu0 %v1126
  %1168 = vmatprep.subr.mxu0 %v1131
  %1169 = vmatpush1.msra.mxu0 %v1130
  %1170 = vmatprep.subr.mxu0 %v1135
  %1171 = vmatpush1.msra.mxu0 %v1134
  %1172 = vmatprep.subr.mxu0 %v1139
  %1173 = vmatpush1.msra.mxu0 %v1138
  %1174 = vmatprep.subr.mxu0 0.0
  %1175 = vmatpush1.msra.mxu0 0.0
  %1176 = vmatprep.subr.mxu0 0.0
  %1177 = vmatpush1.msra.mxu0 0.0
  %1178 = vmatprep.subr.mxu0 0.0
  %1179 = vmatpush1.msra.mxu0 0.0
  %1180 = vmatprep.subr.mxu0 0.0
  %1181 = vmatpush1.msra.mxu0 0.0
  %1182 = vmatprep.subr.mxu0 0.0
  %1183 = vmatpush1.msra.mxu0 0.0
  %1184 = vmatprep.subr.mxu0 0.0
  %1185 = vmatpush1.msra.mxu0 0.0
  %1186 = vmatprep.subr.mxu0 0.0
  %1187 = vmatpush1.msra.mxu0 0.0
  %1188 = vmatprep.subr.mxu0 0.0
  %1189 = vmatpush1.msra.mxu0 0.0
  %1190 = vmatprep.subr.mxu0 0.0
  %1191 = vmatpush1.msra.mxu0 0.0
  %1192 = vmatprep.subr.mxu0 0.0
  %1193 = vmatpush1.msra.mxu0 0.0
  %1194 = vmatprep.subr.mxu0 0.0
  %1195 = vmatpush1.msra.mxu0 0.0
  %1196 = vmatprep.subr.mxu0 0.0
  %1197 = vmatpush1.msra.mxu0 0.0
  %1198 = vmatprep.subr.mxu0 0.0
  %1199 = vmatpush1.msra.mxu0 0.0
  %1200 = vmatprep.subr.mxu0 0.0
  %1201 = vmatpush1.msra.mxu0 0.0
  %1202 = vmatprep.subr.mxu0 0.0
  %1203 = vmatpush1.msra.mxu0 0.0
  %1204 = vmatprep.subr.mxu0 0.0
  %1205 = vmatpush1.msra.mxu0 0.0
  %1206 = vmatprep.mubr.f32.mxu0 0.0
  %1207 = vmatmul.mubr.f32.gmra.mrb[0].mxu0 %v1073
  %v1208 = vpop.f32.mrb[0].mxu0
  %v1209 = vadd.f32 0.0, %v1208
  %v1210 = vpop.f32.mrb[0].mxu0
  %v1211 = vadd.f32 0.0, %v1210
  %1212 = vdwg.mxu0
  %1213 = vmatprep.subr.mxu0 %v1081
  %1214 = vmatpush1.msra.mxu0 %v1080
  %1215 = vmatprep.subr.mxu0 %v1085
  %1216 = vmatpush1.msra.mxu0 %v1084
  %1217 = vmatprep.subr.mxu0 %v1089
  %1218 = vmatpush1.msra.mxu0 %v1088
  %1219 = vmatprep.subr.mxu0 %v1093
  %1220 = vmatpush1.msra.mxu0 %v1092
  %1221 = vmatprep.subr.mxu0 %v1097
  %1222 = vmatpush1.msra.mxu0 %v1096
  %1223 = vmatprep.subr.mxu0 %v1101
  %1224 = vmatpush1.msra.mxu0 %v1100
  %1225 = vmatprep.subr.mxu0 %v1105
  %1226 = vmatpush1.msra.mxu0 %v1104
  %1227 = vmatprep.subr.mxu0 %v1109
  %1228 = vmatpush1.msra.mxu0 %v1108
  %1229 = vmatprep.subr.mxu0 %v1113
  %1230 = vmatpush1.msra.mxu0 %v1112
  %1231 = vmatprep.subr.mxu0 %v1117
  %1232 = vmatpush1.msra.mxu0 %v1116
  %1233 = vmatprep.subr.mxu0 %v1121
  %1234 = vmatpush1.msra.mxu0 %v1120
  %1235 = vmatprep.subr.mxu0 %v1125
  %1236 = vmatpush1.msra.mxu0 %v1124
  %1237 = vmatprep.subr.mxu0 %v1129
  %1238 = vmatpush1.msra.mxu0 %v1128
  %1239 = vmatprep.subr.mxu0 %v1133
  %1240 = vmatpush1.msra.mxu0 %v1132
  %1241 = vmatprep.subr.mxu0 %v1137
  %1242 = vmatpush1.msra.mxu0 %v1136
  %1243 = vmatprep.subr.mxu0 %v1141
  %1244 = vmatpush1.msra.mxu0 %v1140
  %1245 = vmatprep.subr.mxu0 0.0
  %1246 = vmatpush1.msra.mxu0 0.0
  %1247 = vmatprep.subr.mxu0 0.0
  %1248 = vmatpush1.msra.mxu0 0.0
  %1249 = vmatprep.subr.mxu0 0.0
  %1250 = vmatpush1.msra.mxu0 0.0
  %1251 = vmatprep.subr.mxu0 0.0
  %1252 = vmatpush1.msra.mxu0 0.0
  %1253 = vmatprep.subr.mxu0 0.0
  %1254 = vmatpush1.msra.mxu0 0.0
  %1255 = vmatprep.subr.mxu0 0.0
  %1256 = vmatpush1.msra.mxu0 0.0
  %1257 = vmatprep.subr.mxu0 0.0
  %1258 = vmatpush1.msra.mxu0 0.0
  %1259 = vmatprep.subr.mxu0 0.0
  %1260 = vmatpush1.msra.mxu0 0.0
  %1261 = vmatprep.subr.mxu0 0.0
  %1262 = vmatpush1.msra.mxu0 0.0
  %1263 = vmatprep.subr.mxu0 0.0
  %1264 = vmatpush1.msra.mxu0 0.0
  %1265 = vmatprep.subr.mxu0 0.0
  %1266 = vmatpush1.msra.mxu0 0.0
  %1267 = vmatprep.subr.mxu0 0.0
  %1268 = vmatpush1.msra.mxu0 0.0
  %1269 = vmatprep.subr.mxu0 0.0
  %1270 = vmatpush1.msra.mxu0 0.0
  %1271 = vmatprep.subr.mxu0 0.0
  %1272 = vmatpush1.msra.mxu0 0.0
  %1273 = vmatprep.subr.mxu0 0.0
  %1274 = vmatpush1.msra.mxu0 0.0
  %1275 = vmatprep.subr.mxu0 0.0
  %1276 = vmatpush1.msra.mxu0 0.0
  %1277 = vmatprep.mubr.f32.mxu0 0.0
  %1278 = vmatmul.mubr.f32.gmra.mrb[0].mxu0 %v1073
  %v1279 = vpop.f32.mrb[0].mxu0
  %v1280 = vadd.f32 0.0, %v1279
  %v1281 = vpop.f32.mrb[0].mxu0
  %v1282 = vadd.f32 0.0, %v1281
  %1283 = vdwg.mxu0
  %v1288 = vcombine.low %v1209, %v1211
  %v1289 = vcombine.low %v1280, %v1282
  %v1291 = vunpack.c.l.s4 1983009808
  %v1292 = vunpack.c.0.s8 %v1291
  %v1293 = vlaneseq
  %v1294 = vshrl.u32 %v1293, 7
  %v1295 = vsub.s32 %v1292, %v1294
  %v1296 = vrot.slane %v1288, %v1295
  %v1298 = vunpack.c.l.s4 1983009808
  %v1299 = vunpack.c.0.s8 %v1298
  %v1300 = vlaneseq
  %v1301 = vshrl.u32 %v1300, 7
  %v1302 = vsub.s32 %v1299, %v1301
  %v1303 = vrot.slane %v1289, %v1302
  %v1304 = vcombine.low %v1296, %v1303
  %v1306 = vadd.f32 %v1077, %v1304
  %v1307 = vxor.u32 %v1306, 2147483648
  %v1308 = vmul.f32 %v1307, 1.442695
  %v1309 = vpow.pop %v1308
  %v1310 = vadd.f32 %v1309, 1.0
  %v1311 = vrcp.pop %v1310
  %v1312 = vmul.f32 1.0, %v1311
  %v1314 = vrot.slane %v1306, 2
  %v1316 = vxor.u32 %v1314, 2147483648
  %v1317 = vmul.f32 %v1316, 1.442695
  %v1318 = vpow.pop %v1317
  %v1319 = vadd.f32 %v1318, 1.0
  %v1320 = vrcp.pop %v1319
  %v1321 = vmul.f32 1.0, %v1320
  %v1322 = vrot.slane %v1306, 4
  %v1324 = vtanh.pop %v1322
  %v1325 = vrot.slane %v1306, 6
  %v1327 = vxor.u32 %v1325, 2147483648
  %v1328 = vmul.f32 %v1327, 1.442695
  %v1329 = vpow.pop %v1328
  %v1330 = vadd.f32 %v1329, 1.0
  %v1331 = vrcp.pop %v1330
  %v1332 = vmul.f32 1.0, %v1331
  %v1333 = vmul.f32 %v1321, %v1071
  %v1334 = vmul.f32 %v1312, %v1324
  %v1335 = vadd.f32 %v1333, %v1334
  %v1336 = vtanh.pop %v1335
  %v1337 = vmul.f32 %v1332, %v1336
  %s1338 = scalar_lea.vmem %s2, 8
  %1339 = vst [vmem:[%s1338] sm:$0x3] %v1337
  %s1340 = scalar_lea.vmem %s0, 40
  %v1341 = vld [vmem:[%s1340] sm:$0xff]
  %v1342 = vld [vmem:[%s1] sm:$0xff]
  %v1343 = vld [vmem:[%s1 + $0x8] sm:$0xff]
  %v1344 = vld [vmem:[%s1 + $0x10] sm:$0xff]
  %v1345 = vld [vmem:[%s1 + $0x18] sm:$0xff]
  %v1346 = vld [vmem:[%s1 + $0x20] sm:$0xff]
  %v1347 = vld [vmem:[%s1 + $0x28] sm:$0xff]
  %v1348 = vld [vmem:[%s1 + $0x30] sm:$0xff]
  %v1349 = vld [vmem:[%s1 + $0x38] sm:$0xff]
  %v1350 = vld [vmem:[%s1 + $0x40] sm:$0xff]
  %v1351 = vld [vmem:[%s1 + $0x48] sm:$0xff]
  %v1352 = vld [vmem:[%s1 + $0x50] sm:$0xff]
  %v1353 = vld [vmem:[%s1 + $0x58] sm:$0xff]
  %v1354 = vld [vmem:[%s1 + $0x60] sm:$0xff]
  %v1355 = vld [vmem:[%s1 + $0x68] sm:$0xff]
  %v1356 = vld [vmem:[%s1 + $0x70] sm:$0xff]
  %v1357 = vld [vmem:[%s1 + $0x78] sm:$0xff]
  %v1358 = vld [vmem:[%s1 + $0x80] sm:$0xff]
  %v1359 = vld [vmem:[%s1 + $0x88] sm:$0xff]
  %v1360 = vld [vmem:[%s1 + $0x90] sm:$0xff]
  %v1361 = vld [vmem:[%s1 + $0x98] sm:$0xff]
  %v1362 = vld [vmem:[%s1 + $0xa0] sm:$0xff]
  %v1363 = vld [vmem:[%s1 + $0xa8] sm:$0xff]
  %v1364 = vld [vmem:[%s1 + $0xb0] sm:$0xff]
  %v1365 = vld [vmem:[%s1 + $0xb8] sm:$0xff]
  %v1366 = vld [vmem:[%s1 + $0xc0] sm:$0xff]
  %v1367 = vld [vmem:[%s1 + $0xc8] sm:$0xff]
  %v1368 = vld [vmem:[%s1 + $0xd0] sm:$0xff]
  %v1369 = vld [vmem:[%s1 + $0xd8] sm:$0xff]
  %v1370 = vld [vmem:[%s1 + $0xe0] sm:$0xff]
  %v1371 = vld [vmem:[%s1 + $0xe8] sm:$0xff]
  %v1372 = vld [vmem:[%s1 + $0xf0] sm:$0xff]
  %v1373 = vld [vmem:[%s1 + $0xf8] sm:$0xff]
  %v1374 = vld [vmem:[%s1 + $0x100] sm:$0xff]
  %v1375 = vld [vmem:[%s1 + $0x108] sm:$0xff]
  %v1376 = vld [vmem:[%s1 + $0x110] sm:$0xff]
  %v1377 = vld [vmem:[%s1 + $0x118] sm:$0xff]
  %v1378 = vld [vmem:[%s1 + $0x120] sm:$0xff]
  %v1379 = vld [vmem:[%s1 + $0x128] sm:$0xff]
  %v1380 = vld [vmem:[%s1 + $0x130] sm:$0xff]
  %v1381 = vld [vmem:[%s1 + $0x138] sm:$0xff]
  %v1382 = vld [vmem:[%s1 + $0x140] sm:$0xff]
  %v1383 = vld [vmem:[%s1 + $0x148] sm:$0xff]
  %v1384 = vld [vmem:[%s1 + $0x150] sm:$0xff]
  %v1385 = vld [vmem:[%s1 + $0x158] sm:$0xff]
  %v1386 = vld [vmem:[%s1 + $0x160] sm:$0xff]
  %v1387 = vld [vmem:[%s1 + $0x168] sm:$0xff]
  %v1388 = vld [vmem:[%s1 + $0x170] sm:$0xff]
  %v1389 = vld [vmem:[%s1 + $0x178] sm:$0xff]
  %v1390 = vld [vmem:[%s1 + $0x180] sm:$0xff]
  %v1391 = vld [vmem:[%s1 + $0x188] sm:$0xff]
  %v1392 = vld [vmem:[%s1 + $0x190] sm:$0xff]
  %v1393 = vld [vmem:[%s1 + $0x198] sm:$0xff]
  %v1394 = vld [vmem:[%s1 + $0x1a0] sm:$0xff]
  %v1395 = vld [vmem:[%s1 + $0x1a8] sm:$0xff]
  %v1396 = vld [vmem:[%s1 + $0x1b0] sm:$0xff]
  %v1397 = vld [vmem:[%s1 + $0x1b8] sm:$0xff]
  %v1398 = vld [vmem:[%s1 + $0x1c0] sm:$0xff]
  %v1399 = vld [vmem:[%s1 + $0x1c8] sm:$0xff]
  %v1400 = vld [vmem:[%s1 + $0x1d0] sm:$0xff]
  %v1401 = vld [vmem:[%s1 + $0x1d8] sm:$0xff]
  %v1402 = vld [vmem:[%s1 + $0x1e0] sm:$0xff]
  %v1403 = vld [vmem:[%s1 + $0x1e8] sm:$0xff]
  %v1404 = vld [vmem:[%s1 + $0x1f0] sm:$0xff]
  %v1405 = vld [vmem:[%s1 + $0x1f8] sm:$0xff]
  %1406 = vmatprep.subr.mxu0 %v1343
  %1407 = vmatpush1.msra.mxu0 %v1342
  %1408 = vmatprep.subr.mxu0 %v1347
  %1409 = vmatpush1.msra.mxu0 %v1346
  %1410 = vmatprep.subr.mxu0 %v1351
  %1411 = vmatpush1.msra.mxu0 %v1350
  %1412 = vmatprep.subr.mxu0 %v1355
  %1413 = vmatpush1.msra.mxu0 %v1354
  %1414 = vmatprep.subr.mxu0 %v1359
  %1415 = vmatpush1.msra.mxu0 %v1358
  %1416 = vmatprep.subr.mxu0 %v1363
  %1417 = vmatpush1.msra.mxu0 %v1362
  %1418 = vmatprep.subr.mxu0 %v1367
  %1419 = vmatpush1.msra.mxu0 %v1366
  %1420 = vmatprep.subr.mxu0 %v1371
  %1421 = vmatpush1.msra.mxu0 %v1370
  %1422 = vmatprep.subr.mxu0 %v1375
  %1423 = vmatpush1.msra.mxu0 %v1374
  %1424 = vmatprep.subr.mxu0 %v1379
  %1425 = vmatpush1.msra.mxu0 %v1378
  %1426 = vmatprep.subr.mxu0 %v1383
  %1427 = vmatpush1.msra.mxu0 %v1382
  %1428 = vmatprep.subr.mxu0 %v1387
  %1429 = vmatpush1.msra.mxu0 %v1386
  %1430 = vmatprep.subr.mxu0 %v1391
  %1431 = vmatpush1.msra.mxu0 %v1390
  %1432 = vmatprep.subr.mxu0 %v1395
  %1433 = vmatpush1.msra.mxu0 %v1394
  %1434 = vmatprep.subr.mxu0 %v1399
  %1435 = vmatpush1.msra.mxu0 %v1398
  %1436 = vmatprep.subr.mxu0 %v1403
  %1437 = vmatpush1.msra.mxu0 %v1402
  %1438 = vmatprep.subr.mxu0 0.0
  %1439 = vmatpush1.msra.mxu0 0.0
  %1440 = vmatprep.subr.mxu0 0.0
  %1441 = vmatpush1.msra.mxu0 0.0
  %1442 = vmatprep.subr.mxu0 0.0
  %1443 = vmatpush1.msra.mxu0 0.0
  %1444 = vmatprep.subr.mxu0 0.0
  %1445 = vmatpush1.msra.mxu0 0.0
  %1446 = vmatprep.subr.mxu0 0.0
  %1447 = vmatpush1.msra.mxu0 0.0
  %1448 = vmatprep.subr.mxu0 0.0
  %1449 = vmatpush1.msra.mxu0 0.0
  %1450 = vmatprep.subr.mxu0 0.0
  %1451 = vmatpush1.msra.mxu0 0.0
  %1452 = vmatprep.subr.mxu0 0.0
  %1453 = vmatpush1.msra.mxu0 0.0
  %1454 = vmatprep.subr.mxu0 0.0
  %1455 = vmatpush1.msra.mxu0 0.0
  %1456 = vmatprep.subr.mxu0 0.0
  %1457 = vmatpush1.msra.mxu0 0.0
  %1458 = vmatprep.subr.mxu0 0.0
  %1459 = vmatpush1.msra.mxu0 0.0
  %1460 = vmatprep.subr.mxu0 0.0
  %1461 = vmatpush1.msra.mxu0 0.0
  %1462 = vmatprep.subr.mxu0 0.0
  %1463 = vmatpush1.msra.mxu0 0.0
  %1464 = vmatprep.subr.mxu0 0.0
  %1465 = vmatpush1.msra.mxu0 0.0
  %1466 = vmatprep.subr.mxu0 0.0
  %1467 = vmatpush1.msra.mxu0 0.0
  %1468 = vmatprep.subr.mxu0 0.0
  %1469 = vmatpush1.msra.mxu0 0.0
  %1470 = vmatprep.mubr.f32.mxu0 0.0
  %1471 = vmatmul.mubr.f32.gmra.mrb[0].mxu0 %v1337
  %v1472 = vpop.f32.mrb[0].mxu0
  %v1473 = vadd.f32 0.0, %v1472
  %v1474 = vpop.f32.mrb[0].mxu0
  %v1475 = vadd.f32 0.0, %v1474
  %1476 = vdwg.mxu0
  %1477 = vmatprep.subr.mxu0 %v1345
  %1478 = vmatpush1.msra.mxu0 %v1344
  %1479 = vmatprep.subr.mxu0 %v1349
  %1480 = vmatpush1.msra.mxu0 %v1348
  %1481 = vmatprep.subr.mxu0 %v1353
  %1482 = vmatpush1.msra.mxu0 %v1352
  %1483 = vmatprep.subr.mxu0 %v1357
  %1484 = vmatpush1.msra.mxu0 %v1356
  %1485 = vmatprep.subr.mxu0 %v1361
  %1486 = vmatpush1.msra.mxu0 %v1360
  %1487 = vmatprep.subr.mxu0 %v1365
  %1488 = vmatpush1.msra.mxu0 %v1364
  %1489 = vmatprep.subr.mxu0 %v1369
  %1490 = vmatpush1.msra.mxu0 %v1368
  %1491 = vmatprep.subr.mxu0 %v1373
  %1492 = vmatpush1.msra.mxu0 %v1372
  %1493 = vmatprep.subr.mxu0 %v1377
  %1494 = vmatpush1.msra.mxu0 %v1376
  %1495 = vmatprep.subr.mxu0 %v1381
  %1496 = vmatpush1.msra.mxu0 %v1380
  %1497 = vmatprep.subr.mxu0 %v1385
  %1498 = vmatpush1.msra.mxu0 %v1384
  %1499 = vmatprep.subr.mxu0 %v1389
  %1500 = vmatpush1.msra.mxu0 %v1388
  %1501 = vmatprep.subr.mxu0 %v1393
  %1502 = vmatpush1.msra.mxu0 %v1392
  %1503 = vmatprep.subr.mxu0 %v1397
  %1504 = vmatpush1.msra.mxu0 %v1396
  %1505 = vmatprep.subr.mxu0 %v1401
  %1506 = vmatpush1.msra.mxu0 %v1400
  %1507 = vmatprep.subr.mxu0 %v1405
  %1508 = vmatpush1.msra.mxu0 %v1404
  %1509 = vmatprep.subr.mxu0 0.0
  %1510 = vmatpush1.msra.mxu0 0.0
  %1511 = vmatprep.subr.mxu0 0.0
  %1512 = vmatpush1.msra.mxu0 0.0
  %1513 = vmatprep.subr.mxu0 0.0
  %1514 = vmatpush1.msra.mxu0 0.0
  %1515 = vmatprep.subr.mxu0 0.0
  %1516 = vmatpush1.msra.mxu0 0.0
  %1517 = vmatprep.subr.mxu0 0.0
  %1518 = vmatpush1.msra.mxu0 0.0
  %1519 = vmatprep.subr.mxu0 0.0
  %1520 = vmatpush1.msra.mxu0 0.0
  %1521 = vmatprep.subr.mxu0 0.0
  %1522 = vmatpush1.msra.mxu0 0.0
  %1523 = vmatprep.subr.mxu0 0.0
  %1524 = vmatpush1.msra.mxu0 0.0
  %1525 = vmatprep.subr.mxu0 0.0
  %1526 = vmatpush1.msra.mxu0 0.0
  %1527 = vmatprep.subr.mxu0 0.0
  %1528 = vmatpush1.msra.mxu0 0.0
  %1529 = vmatprep.subr.mxu0 0.0
  %1530 = vmatpush1.msra.mxu0 0.0
  %1531 = vmatprep.subr.mxu0 0.0
  %1532 = vmatpush1.msra.mxu0 0.0
  %1533 = vmatprep.subr.mxu0 0.0
  %1534 = vmatpush1.msra.mxu0 0.0
  %1535 = vmatprep.subr.mxu0 0.0
  %1536 = vmatpush1.msra.mxu0 0.0
  %1537 = vmatprep.subr.mxu0 0.0
  %1538 = vmatpush1.msra.mxu0 0.0
  %1539 = vmatprep.subr.mxu0 0.0
  %1540 = vmatpush1.msra.mxu0 0.0
  %1541 = vmatprep.mubr.f32.mxu0 0.0
  %1542 = vmatmul.mubr.f32.gmra.mrb[0].mxu0 %v1337
  %v1543 = vpop.f32.mrb[0].mxu0
  %v1544 = vadd.f32 0.0, %v1543
  %v1545 = vpop.f32.mrb[0].mxu0
  %v1546 = vadd.f32 0.0, %v1545
  %1547 = vdwg.mxu0
  %v1552 = vcombine.low %v1473, %v1475
  %v1553 = vcombine.low %v1544, %v1546
  %v1555 = vunpack.c.l.s4 1983009808
  %v1556 = vunpack.c.0.s8 %v1555
  %v1557 = vlaneseq
  %v1558 = vshrl.u32 %v1557, 7
  %v1559 = vsub.s32 %v1556, %v1558
  %v1560 = vrot.slane %v1552, %v1559
  %v1562 = vunpack.c.l.s4 1983009808
  %v1563 = vunpack.c.0.s8 %v1562
  %v1564 = vlaneseq
  %v1565 = vshrl.u32 %v1564, 7
  %v1566 = vsub.s32 %v1563, %v1565
  %v1567 = vrot.slane %v1553, %v1566
  %v1568 = vcombine.low %v1560, %v1567
  %v1570 = vadd.f32 %v1341, %v1568
  %v1571 = vxor.u32 %v1570, 2147483648
  %v1572 = vmul.f32 %v1571, 1.442695
  %v1573 = vpow.pop %v1572
  %v1574 = vadd.f32 %v1573, 1.0
  %v1575 = vrcp.pop %v1574
  %v1576 = vmul.f32 1.0, %v1575
  %v1578 = vrot.slane %v1570, 2
  %v1580 = vxor.u32 %v1578, 2147483648
  %v1581 = vmul.f32 %v1580, 1.442695
  %v1582 = vpow.pop %v1581
  %v1583 = vadd.f32 %v1582, 1.0
  %v1584 = vrcp.pop %v1583
  %v1585 = vmul.f32 1.0, %v1584
  %v1586 = vrot.slane %v1570, 4
  %v1588 = vtanh.pop %v1586
  %v1589 = vrot.slane %v1570, 6
  %v1591 = vxor.u32 %v1589, 2147483648
  %v1592 = vmul.f32 %v1591, 1.442695
  %v1593 = vpow.pop %v1592
  %v1594 = vadd.f32 %v1593, 1.0
  %v1595 = vrcp.pop %v1594
  %v1596 = vmul.f32 1.0, %v1595
  %v1597 = vmul.f32 %v1585, %v1335
  %v1598 = vmul.f32 %v1576, %v1588
  %v1599 = vadd.f32 %v1597, %v1598
  %v1600 = vtanh.pop %v1599
  %v1601 = vmul.f32 %v1596, %v1600
  %s1602 = scalar_lea.vmem %s2, 10
  %1603 = vst [vmem:[%s1602] sm:$0x3] %v1601
  %s1604 = scalar_lea.vmem %s0, 48
  %v1605 = vld [vmem:[%s1604] sm:$0xff]
  %v1606 = vld [vmem:[%s1] sm:$0xff]
  %v1607 = vld [vmem:[%s1 + $0x8] sm:$0xff]
  %v1608 = vld [vmem:[%s1 + $0x10] sm:$0xff]
  %v1609 = vld [vmem:[%s1 + $0x18] sm:$0xff]
  %v1610 = vld [vmem:[%s1 + $0x20] sm:$0xff]
  %v1611 = vld [vmem:[%s1 + $0x28] sm:$0xff]
  %v1612 = vld [vmem:[%s1 + $0x30] sm:$0xff]
  %v1613 = vld [vmem:[%s1 + $0x38] sm:$0xff]
  %v1614 = vld [vmem:[%s1 + $0x40] sm:$0xff]
  %v1615 = vld [vmem:[%s1 + $0x48] sm:$0xff]
  %v1616 = vld [vmem:[%s1 + $0x50] sm:$0xff]
  %v1617 = vld [vmem:[%s1 + $0x58] sm:$0xff]
  %v1618 = vld [vmem:[%s1 + $0x60] sm:$0xff]
  %v1619 = vld [vmem:[%s1 + $0x68] sm:$0xff]
  %v1620 = vld [vmem:[%s1 + $0x70] sm:$0xff]
  %v1621 = vld [vmem:[%s1 + $0x78] sm:$0xff]
  %v1622 = vld [vmem:[%s1 + $0x80] sm:$0xff]
  %v1623 = vld [vmem:[%s1 + $0x88] sm:$0xff]
  %v1624 = vld [vmem:[%s1 + $0x90] sm:$0xff]
  %v1625 = vld [vmem:[%s1 + $0x98] sm:$0xff]
  %v1626 = vld [vmem:[%s1 + $0xa0] sm:$0xff]
  %v1627 = vld [vmem:[%s1 + $0xa8] sm:$0xff]
  %v1628 = vld [vmem:[%s1 + $0xb0] sm:$0xff]
  %v1629 = vld [vmem:[%s1 + $0xb8] sm:$0xff]
  %v1630 = vld [vmem:[%s1 + $0xc0] sm:$0xff]
  %v1631 = vld [vmem:[%s1 + $0xc8] sm:$0xff]
  %v1632 = vld [vmem:[%s1 + $0xd0] sm:$0xff]
  %v1633 = vld [vmem:[%s1 + $0xd8] sm:$0xff]
  %v1634 = vld [vmem:[%s1 + $0xe0] sm:$0xff]
  %v1635 = vld [vmem:[%s1 + $0xe8] sm:$0xff]
  %v1636 = vld [vmem:[%s1 + $0xf0] sm:$0xff]
  %v1637 = vld [vmem:[%s1 + $0xf8] sm:$0xff]
  %v1638 = vld [vmem:[%s1 + $0x100] sm:$0xff]
  %v1639 = vld [vmem:[%s1 + $0x108] sm:$0xff]
  %v1640 = vld [vmem:[%s1 + $0x110] sm:$0xff]
  %v1641 = vld [vmem:[%s1 + $0x118] sm:$0xff]
  %v1642 = vld [vmem:[%s1 + $0x120] sm:$0xff]
  %v1643 = vld [vmem:[%s1 + $0x128] sm:$0xff]
  %v1644 = vld [vmem:[%s1 + $0x130] sm:$0xff]
  %v1645 = vld [vmem:[%s1 + $0x138] sm:$0xff]
  %v1646 = vld [vmem:[%s1 + $0x140] sm:$0xff]
  %v1647 = vld [vmem:[%s1 + $0x148] sm:$0xff]
  %v1648 = vld [vmem:[%s1 + $0x150] sm:$0xff]
  %v1649 = vld [vmem:[%s1 + $0x158] sm:$0xff]
  %v1650 = vld [vmem:[%s1 + $0x160] sm:$0xff]
  %v1651 = vld [vmem:[%s1 + $0x168] sm:$0xff]
  %v1652 = vld [vmem:[%s1 + $0x170] sm:$0xff]
  %v1653 = vld [vmem:[%s1 + $0x178] sm:$0xff]
  %v1654 = vld [vmem:[%s1 + $0x180] sm:$0xff]
  %v1655 = vld [vmem:[%s1 + $0x188] sm:$0xff]
  %v1656 = vld [vmem:[%s1 + $0x190] sm:$0xff]
  %v1657 = vld [vmem:[%s1 + $0x198] sm:$0xff]
  %v1658 = vld [vmem:[%s1 + $0x1a0] sm:$0xff]
  %v1659 = vld [vmem:[%s1 + $0x1a8] sm:$0xff]
  %v1660 = vld [vmem:[%s1 + $0x1b0] sm:$0xff]
  %v1661 = vld [vmem:[%s1 + $0x1b8] sm:$0xff]
  %v1662 = vld [vmem:[%s1 + $0x1c0] sm:$0xff]
  %v1663 = vld [vmem:[%s1 + $0x1c8] sm:$0xff]
  %v1664 = vld [vmem:[%s1 + $0x1d0] sm:$0xff]
  %v1665 = vld [vmem:[%s1 + $0x1d8] sm:$0xff]
  %v1666 = vld [vmem:[%s1 + $0x1e0] sm:$0xff]
  %v1667 = vld [vmem:[%s1 + $0x1e8] sm:$0xff]
  %v1668 = vld [vmem:[%s1 + $0x1f0] sm:$0xff]
  %v1669 = vld [vmem:[%s1 + $0x1f8] sm:$0xff]
  %1670 = vmatprep.subr.mxu0 %v1607
  %1671 = vmatpush1.msra.mxu0 %v1606
  %1672 = vmatprep.subr.mxu0 %v1611
  %1673 = vmatpush1.msra.mxu0 %v1610
  %1674 = vmatprep.subr.mxu0 %v1615
  %1675 = vmatpush1.msra.mxu0 %v1614
  %1676 = vmatprep.subr.mxu0 %v1619
  %1677 = vmatpush1.msra.mxu0 %v1618
  %1678 = vmatprep.subr.mxu0 %v1623
  %1679 = vmatpush1.msra.mxu0 %v1622
  %1680 = vmatprep.subr.mxu0 %v1627
  %1681 = vmatpush1.msra.mxu0 %v1626
  %1682 = vmatprep.subr.mxu0 %v1631
  %1683 = vmatpush1.msra.mxu0 %v1630
  %1684 = vmatprep.subr.mxu0 %v1635
  %1685 = vmatpush1.msra.mxu0 %v1634
  %1686 = vmatprep.subr.mxu0 %v1639
  %1687 = vmatpush1.msra.mxu0 %v1638
  %1688 = vmatprep.subr.mxu0 %v1643
  %1689 = vmatpush1.msra.mxu0 %v1642
  %1690 = vmatprep.subr.mxu0 %v1647
  %1691 = vmatpush1.msra.mxu0 %v1646
  %1692 = vmatprep.subr.mxu0 %v1651
  %1693 = vmatpush1.msra.mxu0 %v1650
  %1694 = vmatprep.subr.mxu0 %v1655
  %1695 = vmatpush1.msra.mxu0 %v1654
  %1696 = vmatprep.subr.mxu0 %v1659
  %1697 = vmatpush1.msra.mxu0 %v1658
  %1698 = vmatprep.subr.mxu0 %v1663
  %1699 = vmatpush1.msra.mxu0 %v1662
  %1700 = vmatprep.subr.mxu0 %v1667
  %1701 = vmatpush1.msra.mxu0 %v1666
  %1702 = vmatprep.subr.mxu0 0.0
  %1703 = vmatpush1.msra.mxu0 0.0
  %1704 = vmatprep.subr.mxu0 0.0
  %1705 = vmatpush1.msra.mxu0 0.0
  %1706 = vmatprep.subr.mxu0 0.0
  %1707 = vmatpush1.msra.mxu0 0.0
  %1708 = vmatprep.subr.mxu0 0.0
  %1709 = vmatpush1.msra.mxu0 0.0
  %1710 = vmatprep.subr.mxu0 0.0
  %1711 = vmatpush1.msra.mxu0 0.0
  %1712 = vmatprep.subr.mxu0 0.0
  %1713 = vmatpush1.msra.mxu0 0.0
  %1714 = vmatprep.subr.mxu0 0.0
  %1715 = vmatpush1.msra.mxu0 0.0
  %1716 = vmatprep.subr.mxu0 0.0
  %1717 = vmatpush1.msra.mxu0 0.0
  %1718 = vmatprep.subr.mxu0 0.0
  %1719 = vmatpush1.msra.mxu0 0.0
  %1720 = vmatprep.subr.mxu0 0.0
  %1721 = vmatpush1.msra.mxu0 0.0
  %1722 = vmatprep.subr.mxu0 0.0
  %1723 = vmatpush1.msra.mxu0 0.0
  %1724 = vmatprep.subr.mxu0 0.0
  %1725 = vmatpush1.msra.mxu0 0.0
  %1726 = vmatprep.subr.mxu0 0.0
  %1727 = vmatpush1.msra.mxu0 0.0
  %1728 = vmatprep.subr.mxu0 0.0
  %1729 = vmatpush1.msra.mxu0 0.0
  %1730 = vmatprep.subr.mxu0 0.0
  %1731 = vmatpush1.msra.mxu0 0.0
  %1732 = vmatprep.subr.mxu0 0.0
  %1733 = vmatpush1.msra.mxu0 0.0
  %1734 = vmatprep.mubr.f32.mxu0 0.0
  %1735 = vmatmul.mubr.f32.gmra.mrb[0].mxu0 %v1601
  %v1736 = vpop.f32.mrb[0].mxu0
  %v1737 = vadd.f32 0.0, %v1736
  %v1738 = vpop.f32.mrb[0].mxu0
  %v1739 = vadd.f32 0.0, %v1738
  %1740 = vdwg.mxu0
  %1741 = vmatprep.subr.mxu0 %v1609
  %1742 = vmatpush1.msra.mxu0 %v1608
  %1743 = vmatprep.subr.mxu0 %v1613
  %1744 = vmatpush1.msra.mxu0 %v1612
  %1745 = vmatprep.subr.mxu0 %v1617
  %1746 = vmatpush1.msra.mxu0 %v1616
  %1747 = vmatprep.subr.mxu0 %v1621
  %1748 = vmatpush1.msra.mxu0 %v1620
  %1749 = vmatprep.subr.mxu0 %v1625
  %1750 = vmatpush1.msra.mxu0 %v1624
  %1751 = vmatprep.subr.mxu0 %v1629
  %1752 = vmatpush1.msra.mxu0 %v1628
  %1753 = vmatprep.subr.mxu0 %v1633
  %1754 = vmatpush1.msra.mxu0 %v1632
  %1755 = vmatprep.subr.mxu0 %v1637
  %1756 = vmatpush1.msra.mxu0 %v1636
  %1757 = vmatprep.subr.mxu0 %v1641
  %1758 = vmatpush1.msra.mxu0 %v1640
  %1759 = vmatprep.subr.mxu0 %v1645
  %1760 = vmatpush1.msra.mxu0 %v1644
  %1761 = vmatprep.subr.mxu0 %v1649
  %1762 = vmatpush1.msra.mxu0 %v1648
  %1763 = vmatprep.subr.mxu0 %v1653
  %1764 = vmatpush1.msra.mxu0 %v1652
  %1765 = vmatprep.subr.mxu0 %v1657
  %1766 = vmatpush1.msra.mxu0 %v1656
  %1767 = vmatprep.subr.mxu0 %v1661
  %1768 = vmatpush1.msra.mxu0 %v1660
  %1769 = vmatprep.subr.mxu0 %v1665
  %1770 = vmatpush1.msra.mxu0 %v1664
  %1771 = vmatprep.subr.mxu0 %v1669
  %1772 = vmatpush1.msra.mxu0 %v1668
  %1773 = vmatprep.subr.mxu0 0.0
  %1774 = vmatpush1.msra.mxu0 0.0
  %1775 = vmatprep.subr.mxu0 0.0
  %1776 = vmatpush1.msra.mxu0 0.0
  %1777 = vmatprep.subr.mxu0 0.0
  %1778 = vmatpush1.msra.mxu0 0.0
  %1779 = vmatprep.subr.mxu0 0.0
  %1780 = vmatpush1.msra.mxu0 0.0
  %1781 = vmatprep.subr.mxu0 0.0
  %1782 = vmatpush1.msra.mxu0 0.0
  %1783 = vmatprep.subr.mxu0 0.0
  %1784 = vmatpush1.msra.mxu0 0.0
  %1785 = vmatprep.subr.mxu0 0.0
  %1786 = vmatpush1.msra.mxu0 0.0
  %1787 = vmatprep.subr.mxu0 0.0
  %1788 = vmatpush1.msra.mxu0 0.0
  %1789 = vmatprep.subr.mxu0 0.0
  %1790 = vmatpush1.msra.mxu0 0.0
  %1791 = vmatprep.subr.mxu0 0.0
  %1792 = vmatpush1.msra.mxu0 0.0
  %1793 = vmatprep.subr.mxu0 0.0
  %1794 = vmatpush1.msra.mxu0 0.0
  %1795 = vmatprep.subr.mxu0 0.0
  %1796 = vmatpush1.msra.mxu0 0.0
  %1797 = vmatprep.subr.mxu0 0.0
  %1798 = vmatpush1.msra.mxu0 0.0
  %1799 = vmatprep.subr.mxu0 0.0
  %1800 = vmatpush1.msra.mxu0 0.0
  %1801 = vmatprep.subr.mxu0 0.0
  %1802 = vmatpush1.msra.mxu0 0.0
  %1803 = vmatprep.subr.mxu0 0.0
  %1804 = vmatpush1.msra.mxu0 0.0
  %1805 = vmatprep.mubr.f32.mxu0 0.0
  %1806 = vmatmul.mubr.f32.gmra.mrb[0].mxu0 %v1601
  %v1807 = vpop.f32.mrb[0].mxu0
  %v1808 = vadd.f32 0.0, %v1807
  %v1809 = vpop.f32.mrb[0].mxu0
  %v1810 = vadd.f32 0.0, %v1809
  %1811 = vdwg.mxu0
  %v1816 = vcombine.low %v1737, %v1739
  %v1817 = vcombine.low %v1808, %v1810
  %v1819 = vunpack.c.l.s4 1983009808
  %v1820 = vunpack.c.0.s8 %v1819
  %v1821 = vlaneseq
  %v1822 = vshrl.u32 %v1821, 7
  %v1823 = vsub.s32 %v1820, %v1822
  %v1824 = vrot.slane %v1816, %v1823
  %v1826 = vunpack.c.l.s4 1983009808
  %v1827 = vunpack.c.0.s8 %v1826
  %v1828 = vlaneseq
  %v1829 = vshrl.u32 %v1828, 7
  %v1830 = vsub.s32 %v1827, %v1829
  %v1831 = vrot.slane %v1817, %v1830
  %v1832 = vcombine.low %v1824, %v1831
  %v1834 = vadd.f32 %v1605, %v1832
  %v1835 = vxor.u32 %v1834, 2147483648
  %v1836 = vmul.f32 %v1835, 1.442695
  %v1837 = vpow.pop %v1836
  %v1838 = vadd.f32 %v1837, 1.0
  %v1839 = vrcp.pop %v1838
  %v1840 = vmul.f32 1.0, %v1839
  %v1842 = vrot.slane %v1834, 2
  %v1844 = vxor.u32 %v1842, 2147483648
  %v1845 = vmul.f32 %v1844, 1.442695
  %v1846 = vpow.pop %v1845
  %v1847 = vadd.f32 %v1846, 1.0
  %v1848 = vrcp.pop %v1847
  %v1849 = vmul.f32 1.0, %v1848
  %v1850 = vrot.slane %v1834, 4
  %v1852 = vtanh.pop %v1850
  %v1853 = vrot.slane %v1834, 6
  %v1855 = vxor.u32 %v1853, 2147483648
  %v1856 = vmul.f32 %v1855, 1.442695
  %v1857 = vpow.pop %v1856
  %v1858 = vadd.f32 %v1857, 1.0
  %v1859 = vrcp.pop %v1858
  %v1860 = vmul.f32 1.0, %v1859
  %v1861 = vmul.f32 %v1849, %v1599
  %v1862 = vmul.f32 %v1840, %v1852
  %v1863 = vadd.f32 %v1861, %v1862
  %v1864 = vtanh.pop %v1863
  %v1865 = vmul.f32 %v1860, %v1864
  %s1866 = scalar_lea.vmem %s2, 12
  %1867 = vst [vmem:[%s1866] sm:$0x3] %v1865
  %s1868 = scalar_lea.vmem %s0, 56
  %v1869 = vld [vmem:[%s1868] sm:$0xff]
  %v1870 = vld [vmem:[%s1] sm:$0xff]
  %v1871 = vld [vmem:[%s1 + $0x8] sm:$0xff]
  %v1872 = vld [vmem:[%s1 + $0x10] sm:$0xff]
  %v1873 = vld [vmem:[%s1 + $0x18] sm:$0xff]
  %v1874 = vld [vmem:[%s1 + $0x20] sm:$0xff]
  %v1875 = vld [vmem:[%s1 + $0x28] sm:$0xff]
  %v1876 = vld [vmem:[%s1 + $0x30] sm:$0xff]
  %v1877 = vld [vmem:[%s1 + $0x38] sm:$0xff]
  %v1878 = vld [vmem:[%s1 + $0x40] sm:$0xff]
  %v1879 = vld [vmem:[%s1 + $0x48] sm:$0xff]
  %v1880 = vld [vmem:[%s1 + $0x50] sm:$0xff]
  %v1881 = vld [vmem:[%s1 + $0x58] sm:$0xff]
  %v1882 = vld [vmem:[%s1 + $0x60] sm:$0xff]
  %v1883 = vld [vmem:[%s1 + $0x68] sm:$0xff]
  %v1884 = vld [vmem:[%s1 + $0x70] sm:$0xff]
  %v1885 = vld [vmem:[%s1 + $0x78] sm:$0xff]
  %v1886 = vld [vmem:[%s1 + $0x80] sm:$0xff]
  %v1887 = vld [vmem:[%s1 + $0x88] sm:$0xff]
  %v1888 = vld [vmem:[%s1 + $0x90] sm:$0xff]
  %v1889 = vld [vmem:[%s1 + $0x98] sm:$0xff]
  %v1890 = vld [vmem:[%s1 + $0xa0] sm:$0xff]
  %v1891 = vld [vmem:[%s1 + $0xa8] sm:$0xff]
  %v1892 = vld [vmem:[%s1 + $0xb0] sm:$0xff]
  %v1893 = vld [vmem:[%s1 + $0xb8] sm:$0xff]
  %v1894 = vld [vmem:[%s1 + $0xc0] sm:$0xff]
  %v1895 = vld [vmem:[%s1 + $0xc8] sm:$0xff]
  %v1896 = vld [vmem:[%s1 + $0xd0] sm:$0xff]
  %v1897 = vld [vmem:[%s1 + $0xd8] sm:$0xff]
  %v1898 = vld [vmem:[%s1 + $0xe0] sm:$0xff]
  %v1899 = vld [vmem:[%s1 + $0xe8] sm:$0xff]
  %v1900 = vld [vmem:[%s1 + $0xf0] sm:$0xff]
  %v1901 = vld [vmem:[%s1 + $0xf8] sm:$0xff]
  %v1902 = vld [vmem:[%s1 + $0x100] sm:$0xff]
  %v1903 = vld [vmem:[%s1 + $0x108] sm:$0xff]
  %v1904 = vld [vmem:[%s1 + $0x110] sm:$0xff]
  %v1905 = vld [vmem:[%s1 + $0x118] sm:$0xff]
  %v1906 = vld [vmem:[%s1 + $0x120] sm:$0xff]
  %v1907 = vld [vmem:[%s1 + $0x128] sm:$0xff]
  %v1908 = vld [vmem:[%s1 + $0x130] sm:$0xff]
  %v1909 = vld [vmem:[%s1 + $0x138] sm:$0xff]
  %v1910 = vld [vmem:[%s1 + $0x140] sm:$0xff]
  %v1911 = vld [vmem:[%s1 + $0x148] sm:$0xff]
  %v1912 = vld [vmem:[%s1 + $0x150] sm:$0xff]
  %v1913 = vld [vmem:[%s1 + $0x158] sm:$0xff]
  %v1914 = vld [vmem:[%s1 + $0x160] sm:$0xff]
  %v1915 = vld [vmem:[%s1 + $0x168] sm:$0xff]
  %v1916 = vld [vmem:[%s1 + $0x170] sm:$0xff]
  %v1917 = vld [vmem:[%s1 + $0x178] sm:$0xff]
  %v1918 = vld [vmem:[%s1 + $0x180] sm:$0xff]
  %v1919 = vld [vmem:[%s1 + $0x188] sm:$0xff]
  %v1920 = vld [vmem:[%s1 + $0x190] sm:$0xff]
  %v1921 = vld [vmem:[%s1 + $0x198] sm:$0xff]
  %v1922 = vld [vmem:[%s1 + $0x1a0] sm:$0xff]
  %v1923 = vld [vmem:[%s1 + $0x1a8] sm:$0xff]
  %v1924 = vld [vmem:[%s1 + $0x1b0] sm:$0xff]
  %v1925 = vld [vmem:[%s1 + $0x1b8] sm:$0xff]
  %v1926 = vld [vmem:[%s1 + $0x1c0] sm:$0xff]
  %v1927 = vld [vmem:[%s1 + $0x1c8] sm:$0xff]
  %v1928 = vld [vmem:[%s1 + $0x1d0] sm:$0xff]
  %v1929 = vld [vmem:[%s1 + $0x1d8] sm:$0xff]
  %v1930 = vld [vmem:[%s1 + $0x1e0] sm:$0xff]
  %v1931 = vld [vmem:[%s1 + $0x1e8] sm:$0xff]
  %v1932 = vld [vmem:[%s1 + $0x1f0] sm:$0xff]
  %v1933 = vld [vmem:[%s1 + $0x1f8] sm:$0xff]
  %1934 = vmatprep.subr.mxu0 %v1871
  %1935 = vmatpush1.msra.mxu0 %v1870
  %1936 = vmatprep.subr.mxu0 %v1875
  %1937 = vmatpush1.msra.mxu0 %v1874
  %1938 = vmatprep.subr.mxu0 %v1879
  %1939 = vmatpush1.msra.mxu0 %v1878
  %1940 = vmatprep.subr.mxu0 %v1883
  %1941 = vmatpush1.msra.mxu0 %v1882
  %1942 = vmatprep.subr.mxu0 %v1887
  %1943 = vmatpush1.msra.mxu0 %v1886
  %1944 = vmatprep.subr.mxu0 %v1891
  %1945 = vmatpush1.msra.mxu0 %v1890
  %1946 = vmatprep.subr.mxu0 %v1895
  %1947 = vmatpush1.msra.mxu0 %v1894
  %1948 = vmatprep.subr.mxu0 %v1899
  %1949 = vmatpush1.msra.mxu0 %v1898
  %1950 = vmatprep.subr.mxu0 %v1903
  %1951 = vmatpush1.msra.mxu0 %v1902
  %1952 = vmatprep.subr.mxu0 %v1907
  %1953 = vmatpush1.msra.mxu0 %v1906
  %1954 = vmatprep.subr.mxu0 %v1911
  %1955 = vmatpush1.msra.mxu0 %v1910
  %1956 = vmatprep.subr.mxu0 %v1915
  %1957 = vmatpush1.msra.mxu0 %v1914
  %1958 = vmatprep.subr.mxu0 %v1919
  %1959 = vmatpush1.msra.mxu0 %v1918
  %1960 = vmatprep.subr.mxu0 %v1923
  %1961 = vmatpush1.msra.mxu0 %v1922
  %1962 = vmatprep.subr.mxu0 %v1927
  %1963 = vmatpush1.msra.mxu0 %v1926
  %1964 = vmatprep.subr.mxu0 %v1931
  %1965 = vmatpush1.msra.mxu0 %v1930
  %1966 = vmatprep.subr.mxu0 0.0
  %1967 = vmatpush1.msra.mxu0 0.0
  %1968 = vmatprep.subr.mxu0 0.0
  %1969 = vmatpush1.msra.mxu0 0.0
  %1970 = vmatprep.subr.mxu0 0.0
  %1971 = vmatpush1.msra.mxu0 0.0
  %1972 = vmatprep.subr.mxu0 0.0
  %1973 = vmatpush1.msra.mxu0 0.0
  %1974 = vmatprep.subr.mxu0 0.0
  %1975 = vmatpush1.msra.mxu0 0.0
  %1976 = vmatprep.subr.mxu0 0.0
  %1977 = vmatpush1.msra.mxu0 0.0
  %1978 = vmatprep.subr.mxu0 0.0
  %1979 = vmatpush1.msra.mxu0 0.0
  %1980 = vmatprep.subr.mxu0 0.0
  %1981 = vmatpush1.msra.mxu0 0.0
  %1982 = vmatprep.subr.mxu0 0.0
  %1983 = vmatpush1.msra.mxu0 0.0
  %1984 = vmatprep.subr.mxu0 0.0
  %1985 = vmatpush1.msra.mxu0 0.0
  %1986 = vmatprep.subr.mxu0 0.0
  %1987 = vmatpush1.msra.mxu0 0.0
  %1988 = vmatprep.subr.mxu0 0.0
  %1989 = vmatpush1.msra.mxu0 0.0
  %1990 = vmatprep.subr.mxu0 0.0
  %1991 = vmatpush1.msra.mxu0 0.0
  %1992 = vmatprep.subr.mxu0 0.0
  %1993 = vmatpush1.msra.mxu0 0.0
  %1994 = vmatprep.subr.mxu0 0.0
  %1995 = vmatpush1.msra.mxu0 0.0
  %1996 = vmatprep.subr.mxu0 0.0
  %1997 = vmatpush1.msra.mxu0 0.0
  %1998 = vmatprep.mubr.f32.mxu0 0.0
  %1999 = vmatmul.mubr.f32.gmra.mrb[0].mxu0 %v1865
  %v2000 = vpop.f32.mrb[0].mxu0
  %v2001 = vadd.f32 0.0, %v2000
  %v2002 = vpop.f32.mrb[0].mxu0
  %v2003 = vadd.f32 0.0, %v2002
  %2004 = vdwg.mxu0
  %2005 = vmatprep.subr.mxu0 %v1873
  %2006 = vmatpush1.msra.mxu0 %v1872
  %2007 = vmatprep.subr.mxu0 %v1877
  %2008 = vmatpush1.msra.mxu0 %v1876
  %2009 = vmatprep.subr.mxu0 %v1881
  %2010 = vmatpush1.msra.mxu0 %v1880
  %2011 = vmatprep.subr.mxu0 %v1885
  %2012 = vmatpush1.msra.mxu0 %v1884
  %2013 = vmatprep.subr.mxu0 %v1889
  %2014 = vmatpush1.msra.mxu0 %v1888
  %2015 = vmatprep.subr.mxu0 %v1893
  %2016 = vmatpush1.msra.mxu0 %v1892
  %2017 = vmatprep.subr.mxu0 %v1897
  %2018 = vmatpush1.msra.mxu0 %v1896
  %2019 = vmatprep.subr.mxu0 %v1901
  %2020 = vmatpush1.msra.mxu0 %v1900
  %2021 = vmatprep.subr.mxu0 %v1905
  %2022 = vmatpush1.msra.mxu0 %v1904
  %2023 = vmatprep.subr.mxu0 %v1909
  %2024 = vmatpush1.msra.mxu0 %v1908
  %2025 = vmatprep.subr.mxu0 %v1913
  %2026 = vmatpush1.msra.mxu0 %v1912
  %2027 = vmatprep.subr.mxu0 %v1917
  %2028 = vmatpush1.msra.mxu0 %v1916
  %2029 = vmatprep.subr.mxu0 %v1921
  %2030 = vmatpush1.msra.mxu0 %v1920
  %2031 = vmatprep.subr.mxu0 %v1925
  %2032 = vmatpush1.msra.mxu0 %v1924
  %2033 = vmatprep.subr.mxu0 %v1929
  %2034 = vmatpush1.msra.mxu0 %v1928
  %2035 = vmatprep.subr.mxu0 %v1933
  %2036 = vmatpush1.msra.mxu0 %v1932
  %2037 = vmatprep.subr.mxu0 0.0
  %2038 = vmatpush1.msra.mxu0 0.0
  %2039 = vmatprep.subr.mxu0 0.0
  %2040 = vmatpush1.msra.mxu0 0.0
  %2041 = vmatprep.subr.mxu0 0.0
  %2042 = vmatpush1.msra.mxu0 0.0
  %2043 = vmatprep.subr.mxu0 0.0
  %2044 = vmatpush1.msra.mxu0 0.0
  %2045 = vmatprep.subr.mxu0 0.0
  %2046 = vmatpush1.msra.mxu0 0.0
  %2047 = vmatprep.subr.mxu0 0.0
  %2048 = vmatpush1.msra.mxu0 0.0
  %2049 = vmatprep.subr.mxu0 0.0
  %2050 = vmatpush1.msra.mxu0 0.0
  %2051 = vmatprep.subr.mxu0 0.0
  %2052 = vmatpush1.msra.mxu0 0.0
  %2053 = vmatprep.subr.mxu0 0.0
  %2054 = vmatpush1.msra.mxu0 0.0
  %2055 = vmatprep.subr.mxu0 0.0
  %2056 = vmatpush1.msra.mxu0 0.0
  %2057 = vmatprep.subr.mxu0 0.0
  %2058 = vmatpush1.msra.mxu0 0.0
  %2059 = vmatprep.subr.mxu0 0.0
  %2060 = vmatpush1.msra.mxu0 0.0
  %2061 = vmatprep.subr.mxu0 0.0
  %2062 = vmatpush1.msra.mxu0 0.0
  %2063 = vmatprep.subr.mxu0 0.0
  %2064 = vmatpush1.msra.mxu0 0.0
  %2065 = vmatprep.subr.mxu0 0.0
  %2066 = vmatpush1.msra.mxu0 0.0
  %2067 = vmatprep.subr.mxu0 0.0
  %2068 = vmatpush1.msra.mxu0 0.0
  %2069 = vmatprep.mubr.f32.mxu0 0.0
  %2070 = vmatmul.mubr.f32.gmra.mrb[0].mxu0 %v1865
  %v2071 = vpop.f32.mrb[0].mxu0
  %v2072 = vadd.f32 0.0, %v2071
  %v2073 = vpop.f32.mrb[0].mxu0
  %v2074 = vadd.f32 0.0, %v2073
  %2075 = vdwg.mxu0
  %v2080 = vcombine.low %v2001, %v2003
  %v2081 = vcombine.low %v2072, %v2074
  %v2083 = vunpack.c.l.s4 1983009808
  %v2084 = vunpack.c.0.s8 %v2083
  %v2085 = vlaneseq
  %v2086 = vshrl.u32 %v2085, 7
  %v2087 = vsub.s32 %v2084, %v2086
  %v2088 = vrot.slane %v2080, %v2087
  %v2090 = vunpack.c.l.s4 1983009808
  %v2091 = vunpack.c.0.s8 %v2090
  %v2092 = vlaneseq
  %v2093 = vshrl.u32 %v2092, 7
  %v2094 = vsub.s32 %v2091, %v2093
  %v2095 = vrot.slane %v2081, %v2094
  %v2096 = vcombine.low %v2088, %v2095
  %v2098 = vadd.f32 %v1869, %v2096
  %v2099 = vxor.u32 %v2098, 2147483648
  %v2100 = vmul.f32 %v2099, 1.442695
  %v2101 = vpow.pop %v2100
  %v2102 = vadd.f32 %v2101, 1.0
  %v2103 = vrcp.pop %v2102
  %v2104 = vmul.f32 1.0, %v2103
  %v2106 = vrot.slane %v2098, 2
  %v2108 = vxor.u32 %v2106, 2147483648
  %v2109 = vmul.f32 %v2108, 1.442695
  %v2110 = vpow.pop %v2109
  %v2111 = vadd.f32 %v2110, 1.0
  %v2112 = vrcp.pop %v2111
  %v2113 = vmul.f32 1.0, %v2112
  %v2114 = vrot.slane %v2098, 4
  %v2116 = vtanh.pop %v2114
  %v2117 = vrot.slane %v2098, 6
  %v2119 = vxor.u32 %v2117, 2147483648
  %v2120 = vmul.f32 %v2119, 1.442695
  %v2121 = vpow.pop %v2120
  %v2122 = vadd.f32 %v2121, 1.0
  %v2123 = vrcp.pop %v2122
  %v2124 = vmul.f32 1.0, %v2123
  %v2125 = vmul.f32 %v2113, %v1863
  %v2126 = vmul.f32 %v2104, %v2116
  %v2127 = vadd.f32 %v2125, %v2126
  %v2128 = vtanh.pop %v2127
  %v2129 = vmul.f32 %v2124, %v2128
  %s2130 = scalar_lea.vmem %s2, 14
  %2131 = vst [vmem:[%s2130] sm:$0x3] %v2129
  %2132 = vst [vmem:[#allocation2] sm:$0x3] %v2129
  %2133 = vst [vmem:[#allocation3] sm:$0x3] %v2127
  // Predicated region
  $region14: #{rnn_perception_action_forward.4} parent=0 // pred_check
    %p2134 = pneg %p14
  $region15: #{rnn_perception_action_forward.4} parent=0 // pred_check_branch
    %2136 = sbr.rel (%p2134) target = $region17
  $region16: #{rnn_perception_action_forward.4} parent=0 // pred_region
    %2137 = vst [vmem:[%s3] sm:$0x3] %v2129
    %2138 = vst [vmem:[%s4] sm:$0x3] %v2127
  $region17: #{rnn_perception_action_forward.4} parent=0 // pred_fallthru
    _
  // Predicated region
  $region18: #{rnn_perception_action_forward.4} parent=0 // pred_check
    _
  $region19: #{rnn_perception_action_forward.4} parent=0 // pred_check_branch
    %2140 = sbr.rel (0) target = $region21
  $region20: #{rnn_perception_action_forward.4} parent=0 // pred_region
    _
  $region21: #{rnn_perception_action_forward.4} parent=0 // pred_fallthru
    _
  // Predicated region
  $region22: #{rnn_perception_action_forward.4} parent=0 // pred_check
    _
  $region23: #{rnn_perception_action_forward.4} parent=0 // pred_check_branch
    %2142 = sbr.rel (0) target = $region25
  $region24: #{rnn_perception_action_forward.4} parent=0 // pred_region
    _
  $region25: #{rnn_perception_action_forward.4} parent=0 // pred_fallthru
    _
  // Predicated region
  $region26: #{rnn_perception_action_forward.4} parent=0 // pred_check
    _
  $region27: #{rnn_perception_action_forward.4} parent=0 // pred_check_branch
    %2144 = sbr.rel (0) target = $region29
  $region28: #{rnn_perception_action_forward.4} parent=0 // pred_region
    _
  $region29: #{rnn_perception_action_forward.4} parent=0 // pred_fallthru
    _
  // Predicated region
  $region30: #{rnn_perception_action_forward.4} parent=0 // pred_check
    _
  $region31: #{rnn_perception_action_forward.4} parent=0 // pred_check_branch
    %2146 = sbr.rel (0) target = $region33
  $region32: #{rnn_perception_action_forward.4} parent=0 // pred_region
    _
  $region33: #{rnn_perception_action_forward.4} parent=0 // pred_fallthru
    _
  // Predicated region
  $region34: #{rnn_perception_action_forward.4} parent=0 // pred_check
    _
  $region35: #{rnn_perception_action_forward.4} parent=0 // pred_check_branch
    %2148 = sbr.rel (0) target = $region37
  $region36: #{rnn_perception_action_forward.4} parent=0 // pred_region
    _
  $region37: #{rnn_perception_action_forward.4} parent=0 // pred_fallthru
    _
  // Predicated region
  $region38: #{rnn_perception_action_forward.4} parent=0 // pred_check
    _
  $region39: #{rnn_perception_action_forward.4} parent=0 // pred_check_branch
    %2150 = sbr.rel (0) target = $region41
  $region40: #{rnn_perception_action_forward.4} parent=0 // pred_region
    _
  $region41: #{rnn_perception_action_forward.4} parent=0 // pred_fallthru
    _

</llo_original>
